<compile_context>
chip_gen: v7x
topology: tpu7x:2x2x1
jax: 0.10.0
libtpu: 0.0.40
codegen_flags: <defaults>
</compile_context>

<pallas_src>
import jax
import jax.numpy as jnp
import numpy as np
from jax import lax
from jax.experimental import pallas as pl
from jax.experimental.pallas import tpu as pltpu

BN_EPS = 1e-5


def resblock_kernel(x_ref, w1_ref, s1_ref, b1_ref, w2_ref, s2_ref, b2_ref,
                    out_ref, xpad_ref, cols_ref):
    # x_ref   : (TN, H, W, Cp)      f32 input block (Cp = lane-dense channels)
    # w1_ref  : (9*Cp, Cp)          3x3 conv weights, im2col layout, matmul dtype
    # w2_ref  : (Cp, Cp)            1x1 conv weights, matmul dtype
    # s*/b*   : (1, Cp)             folded BN scale / bias (conv bias folded), f32
    # xpad_ref: (TN, H+2, W+2, Cp)  matmul-dtype scratch: ReLU'd x + zero halo
    # cols_ref: (TN, H, W, 9*Cp)    matmul-dtype scratch: im2col matrix
    TN, H, W, Cp = x_ref.shape
    K9 = cols_ref.shape[-1]                       # 9 * Cp
    mdt = w1_ref.dtype                            # matmul dtype (bf16 or f32)

    # ---- stage ReLU'd activations once, with an explicit zero halo ----------
    # Border stripes only (not the whole scratch): they are the conv's zero
    # padding. Unconditional (not pl.when(step==0)-gated) so megacore grid
    # partitioning stays correct on v7x.
    zrow = jnp.zeros((TN, 1, W + 2, Cp), mdt)
    zcol = jnp.zeros((TN, H + 2, 1, Cp), mdt)
    xpad_ref[:, 0:1, :, :] = zrow
    xpad_ref[:, H + 1:H + 2, :, :] = zrow
    xpad_ref[:, :, 0:1, :] = zcol
    xpad_ref[:, :, W + 1:W + 2, :] = zcol
    # Single ReLU pass (module: ReLU then 3x3 conv), cast to the matmul dtype.
    xpad_ref[:, 1:H + 1, 1:W + 1, :] = jnp.maximum(x_ref[...], 0.0).astype(mdt)

    # ---- build the im2col matrix: 9 full-size, lane-aligned, unmasked copies --
    for kh in range(3):
        for kw in range(3):
            j = kh * 3 + kw
            cols_ref[:, :, :, j * Cp:(j + 1) * Cp] = \
                xpad_ref[:, kh:kh + H, kw:kw + W, :]

    # ---- 3x3 conv == one MXU matmul with K = 9*Cp ----------------------------
    cols = cols_ref[...].reshape(TN * H * W, K9)          # already matmul dtype
    acc = jnp.dot(cols, w1_ref[...], preferred_element_type=jnp.float32)

    # BatchNorm1 (conv1 bias + affine folded into scale/bias), ReLU -- all f32.
    h = jnp.maximum(acc * s1_ref[...] + b1_ref[...], 0.0)

    # 1x1 conv + BatchNorm2 (folded).
    y = jnp.dot(h.astype(mdt), w2_ref[...], preferred_element_type=jnp.float32)
    y = y * s2_ref[...] + b2_ref[...]

    # Residual add; output stays lane-dense (last dim == Cp, multiple of 128).
    out_ref[...] = x_ref[...] + y.reshape(TN, H, W, Cp)


def _fold_bn(gamma, beta, mean, var, conv_bias, eps=BN_EPS):
    s = gamma / jnp.sqrt(var + eps)
    b = s * (conv_bias - mean) + beta
    return s, b


def _pad_last(a, cp):
    c = a.shape[-1]
    if c == cp:
        return a
    return jnp.pad(a, [(0, 0)] * (a.ndim - 1) + [(0, cp - c)])


def _vmem_capacity_bytes():
    try:
        return int(pltpu.get_tpu_info().vmem_capacity_bytes)
    except Exception:
        return 64 * 1024 * 1024          # conservative fallback (v7x-sized)


def resblock_pallas(x_nhwc, params, *, batch_tile=None,
                    matmul_dtype=jnp.bfloat16):
    """x_nhwc: (N, H, W, C) float32; returns (N, H, W, C) float32."""
    N, H, W, C = x_nhwc.shape
    # Lane-dense channel count (no-op for the real model where C == 128).
    Cp = max(128, ((C + 127) // 128) * 128)
    itm = int(np.dtype(matmul_dtype).itemsize)

    # ---- fold conv biases + eval-mode BN into per-channel scale/bias --------
    s1, b1 = _fold_bn(params["bn1_gamma"], params["bn1_beta"],
                      params["bn1_mean"], params["bn1_var"], params["b1"])
    s2, b2 = _fold_bn(params["bn2_gamma"], params["bn2_beta"],
                      params["bn2_mean"], params["bn2_var"], params["b2"])

    # ---- zero-pad channels to Cp (exact: padded lanes stay zero) ------------
    xp = _pad_last(x_nhwc, Cp)                                   # (N,H,W,Cp)
    w1 = jnp.pad(params["w1_hwio"],
                 ((0, 0), (0, 0), (0, Cp - C), (0, Cp - C)))     # (3,3,Cp,Cp)
    w1 = w1.reshape(9 * Cp, Cp).astype(matmul_dtype)             # im2col layout
    w2 = jnp.pad(params["w2_hwio"].reshape(C, C),
                 ((0, Cp - C), (0, Cp - C))).astype(matmul_dtype)
    s1 = _pad_last(s1, Cp).reshape(1, Cp).astype(jnp.float32)
    b1 = _pad_last(b1, Cp).reshape(1, Cp).astype(jnp.float32)
    s2 = _pad_last(s2, Cp).reshape(1, Cp).astype(jnp.float32)
    b2 = _pad_last(b2, Cp).reshape(1, Cp).astype(jnp.float32)

    # ---- generation-aware VMEM budget & batch tiling --------------------------
    vmem_cap = _vmem_capacity_bytes()
    # ~96 MiB on 128 MiB chips (v5e/v6e), ~48 MiB on 64 MiB chips (v7x).
    vmem_limit = min(int(0.75 * vmem_cap), 100 * 1024 * 1024)

    per_n = (2 * H * W * Cp * 4                 # input block, double-buffered
             + 2 * H * W * Cp * 4               # output block, double-buffered
             + (H + 2) * (W + 2) * Cp * itm     # xpad scratch
             + H * W * 9 * Cp * itm             # im2col scratch
             + 2 * H * W * Cp * 4)              # f32 matmul temporaries (acc, h)
    const_b = 2 * (9 * Cp * Cp + Cp * Cp) * itm + 8 * Cp * 4
    max_tile = max(1, (int(0.8 * vmem_limit) - const_b) // per_n)

    if batch_tile is None:
        # Keep >= 2 grid steps when N >= 2 so both v7x TensorCores get work
        # (costs only ~0.35us extra per step on single-core chips), subject to
        # the VMEM budget above.  TODO(synk): re-tune at production shapes
        # (C=128, real H,W,N), not this toy case.
        cap = min(max_tile, max(1, N // min(2, N)))
        batch_tile = max(d for d in range(1, N + 1) if N % d == 0 and d <= cap)
    assert N % batch_tile == 0, "batch_tile must divide N"
    grid = (N // batch_tile,)

    out_p = pl.pallas_call(
        resblock_kernel,
        out_shape=jax.ShapeDtypeStruct((N, H, W, Cp), jnp.float32),
        grid=grid,
        in_specs=[
            pl.BlockSpec((batch_tile, H, W, Cp), lambda n: (n, 0, 0, 0)),
            pl.BlockSpec((9 * Cp, Cp), lambda n: (0, 0)),
            pl.BlockSpec((1, Cp), lambda n: (0, 0)),
            pl.BlockSpec((1, Cp), lambda n: (0, 0)),
            pl.BlockSpec((Cp, Cp), lambda n: (0, 0)),
            pl.BlockSpec((1, Cp), lambda n: (0, 0)),
            pl.BlockSpec((1, Cp), lambda n: (0, 0)),
        ],
        out_specs=pl.BlockSpec((batch_tile, H, W, Cp), lambda n: (n, 0, 0, 0)),
        scratch_shapes=[
            pltpu.VMEM((batch_tile, H + 2, W + 2, Cp), matmul_dtype),   # xpad
            pltpu.VMEM((batch_tile, H, W, 9 * Cp), matmul_dtype),       # cols
        ],
        compiler_params=pltpu.CompilerParams(
            dimension_semantics=("parallel",),
            vmem_limit_bytes=vmem_limit),
    )(xp, w1, s1, b1, w2, s2, b2)

    return out_p[..., :C]


def resblock_ref(x_nhwc, params):
    """Pure-JAX reference (eval-mode BatchNorm), NHWC."""
    eps = BN_EPS
    dn = ("NHWC", "HWIO", "NHWC")
    h = jnp.maximum(x_nhwc, 0.0)
    h = lax.conv_general_dilated(h, params["w1_hwio"], (1, 1), "SAME",
                                 dimension_numbers=dn)
    h = h + params["b1"]
    h = (h - params["bn1_mean"]) / jnp.sqrt(params["bn1_var"] + eps) \
        * params["bn1_gamma"] + params["bn1_beta"]
    h = jnp.maximum(h, 0.0)
    h = lax.conv_general_dilated(h, params["w2_hwio"], (1, 1), "SAME",
                                 dimension_numbers=dn)
    h = h + params["b2"]
    h = (h - params["bn2_mean"]) / jnp.sqrt(params["bn2_var"] + eps) \
        * params["bn2_gamma"] + params["bn2_beta"]
    return x_nhwc + h


def make_params(key, dim):
    ks = jax.random.split(key, 8)
    # PyTorch Conv2d weights are OIHW; convert to HWIO for NHWC convs.
    w1_oihw = 0.1 * jax.random.normal(ks[0], (dim, dim, 3, 3), jnp.float32)
    w2_oihw = 0.1 * jax.random.normal(ks[1], (dim, dim, 1, 1), jnp.float32)
    return {
        "w1_hwio": jnp.transpose(w1_oihw, (2, 3, 1, 0)),
        "b1": 0.1 * jax.random.normal(ks[2], (dim,), jnp.float32),
        "w2_hwio": jnp.transpose(w2_oihw, (2, 3, 1, 0)),
        "b2": 0.1 * jax.random.normal(ks[3], (dim,), jnp.float32),
        "bn1_gamma": 1.0 + 0.1 * jax.random.normal(ks[4], (dim,), jnp.float32),
        "bn1_beta": 0.1 * jax.random.normal(ks[5], (dim,), jnp.float32),
        "bn1_mean": 0.1 * jax.random.normal(ks[6], (dim,), jnp.float32),
        "bn1_var": 0.5 + jnp.abs(0.5 * jax.random.normal(ks[7], (dim,), jnp.float32)),
        "bn2_gamma": jnp.linspace(0.9, 1.1, dim, dtype=jnp.float32),
        "bn2_beta": jnp.linspace(-0.05, 0.05, dim, dtype=jnp.float32),
        "bn2_mean": jnp.linspace(-0.1, 0.1, dim, dtype=jnp.float32),
        "bn2_var": jnp.linspace(0.8, 1.2, dim, dtype=jnp.float32),
    }


if __name__ == "__main__":
    # Small shapes consistent with the module: N=2, dim=4, 16x16 spatial.
    N, C, H, W = 2, 4, 16, 16
    key = jax.random.PRNGKey(0)
    kx, kp = jax.random.split(key)

    x_nchw = jax.random.normal(kx, (N, C, H, W), jnp.float32)  # PyTorch layout
    x_nhwc = jnp.transpose(x_nchw, (0, 2, 3, 1))               # kernel layout
    params = make_params(kp, C)

    ref = resblock_ref(x_nhwc, params)

    # f32 matmul path (opt-in exactness mode).
    out_f32 = jax.block_until_ready(
        resblock_pallas(x_nhwc, params, matmul_dtype=jnp.float32))
    assert out_f32.shape == (N, H, W, C)
    assert jnp.allclose(out_f32, ref, rtol=1e-4, atol=1e-4), \
        float(jnp.max(jnp.abs(out_f32 - ref)))

    # Default path: bf16 weights + im2col scratch, f32 accumulation
    # (bf16-native MXUs on v5e/v6e/v7x, half the weight/scratch bytes).
    out = jax.block_until_ready(resblock_pallas(x_nhwc, params))
    assert out.shape == (N, H, W, C)
    assert jnp.allclose(out, ref, rtol=2e-2, atol=2e-2), \
        float(jnp.max(jnp.abs(out - ref)))

    print("KERNEL_OK")
</pallas_src>

<mosaic_0001>
module attributes {stable_mosaic.version = 11 : i64} {
  func.func @resblock_kernel(%arg0: i32, %arg1: memref<1x16x16x128xf32, #tpu.memory_space<vmem>>, %arg2: memref<1152x128xf32, #tpu.memory_space<vmem>>, %arg3: memref<1x128xf32, #tpu.memory_space<vmem>>, %arg4: memref<1x128xf32, #tpu.memory_space<vmem>>, %arg5: memref<128x128xf32, #tpu.memory_space<vmem>>, %arg6: memref<1x128xf32, #tpu.memory_space<vmem>>, %arg7: memref<1x128xf32, #tpu.memory_space<vmem>>, %arg8: memref<1x16x16x128xf32, #tpu.memory_space<vmem>>, %arg9: memref<1x18x18x128xf32, #tpu.memory_space<vmem>>, %arg10: memref<1x16x16x1152xf32, #tpu.memory_space<vmem>>) attributes {dimension_semantics = [#tpu.dimension_semantics<parallel>], iteration_bounds = array<i64: 2>, scalar_prefetch = 0 : i64, scratch_operands = 2 : i64, tpu.core_type = #tpu.core_type<tc>, window_params = [{transform_indices = @transform_0, window_bounds = array<i64: 1, 16, 16, 128>}, {pipeline_mode = #tpu.pipeline_mode<synchronous>, transform_indices = @transform_1, window_bounds = array<i64: 1152, 128>}, {pipeline_mode = #tpu.pipeline_mode<synchronous>, transform_indices = @transform_2, window_bounds = array<i64: 1, 128>}, {pipeline_mode = #tpu.pipeline_mode<synchronous>, transform_indices = @transform_3, window_bounds = array<i64: 1, 128>}, {pipeline_mode = #tpu.pipeline_mode<synchronous>, transform_indices = @transform_4, window_bounds = array<i64: 128, 128>}, {pipeline_mode = #tpu.pipeline_mode<synchronous>, transform_indices = @transform_5, window_bounds = array<i64: 1, 128>}, {pipeline_mode = #tpu.pipeline_mode<synchronous>, transform_indices = @transform_6, window_bounds = array<i64: 1, 128>}, {transform_indices = @transform_7, window_bounds = array<i64: 1, 16, 16, 128>}]} {
    %cst = arith.constant 0.000000e+00 : f32
    %0 = vector.broadcast %cst : f32 to vector<1x1x18x128xf32>
    %cst_0 = arith.constant 0.000000e+00 : f32
    %1 = vector.broadcast %cst_0 : f32 to vector<1x18x1x128xf32>
    %c0 = arith.constant 0 : index
    %c0_1 = arith.constant 0 : index
    %c0_2 = arith.constant 0 : index
    %c0_3 = arith.constant 0 : index
    %2 = vector.load %arg9[%c0, %c0_1, %c0_2, %c0_3] : memref<1x18x18x128xf32, #tpu.memory_space<vmem>>, vector<1x1x18x128xf32>
    tpu.vector_store %arg9[%c0, %c0_1, %c0_2, %c0_3], %0 {strides = array<i32>} : memref<1x18x18x128xf32, #tpu.memory_space<vmem>>, vector<1x1x18x128xf32>,
    %c0_4 = arith.constant 0 : index
    %c17 = arith.constant 17 : index
    %c0_5 = arith.constant 0 : index
    %c0_6 = arith.constant 0 : index
    %3 = vector.load %arg9[%c0_4, %c17, %c0_5, %c0_6] : memref<1x18x18x128xf32, #tpu.memory_space<vmem>>, vector<1x1x18x128xf32>
    tpu.vector_store %arg9[%c0_4, %c17, %c0_5, %c0_6], %0 {strides = array<i32>} : memref<1x18x18x128xf32, #tpu.memory_space<vmem>>, vector<1x1x18x128xf32>,
    %c0_7 = arith.constant 0 : index
    %c0_8 = arith.constant 0 : index
    %c0_9 = arith.constant 0 : index
    %c0_10 = arith.constant 0 : index
    %4 = vector.load %arg9[%c0_7, %c0_8, %c0_9, %c0_10] : memref<1x18x18x128xf32, #tpu.memory_space<vmem>>, vector<1x18x1x128xf32>
    tpu.vector_store %arg9[%c0_7, %c0_8, %c0_9, %c0_10], %1 {strides = array<i32>} : memref<1x18x18x128xf32, #tpu.memory_space<vmem>>, vector<1x18x1x128xf32>,
    %c0_11 = arith.constant 0 : index
    %c0_12 = arith.constant 0 : index
    %c17_13 = arith.constant 17 : index
    %c0_14 = arith.constant 0 : index
    %5 = vector.load %arg9[%c0_11, %c0_12, %c17_13, %c0_14] : memref<1x18x18x128xf32, #tpu.memory_space<vmem>>, vector<1x18x1x128xf32>
    tpu.vector_store %arg9[%c0_11, %c0_12, %c17_13, %c0_14], %1 {strides = array<i32>} : memref<1x18x18x128xf32, #tpu.memory_space<vmem>>, vector<1x18x1x128xf32>,
    %c0_15 = arith.constant 0 : index
    %c0_16 = arith.constant 0 : index
    %c0_17 = arith.constant 0 : index
    %c0_18 = arith.constant 0 : index
    %6 = vector.load %arg1[%c0_15, %c0_16, %c0_17, %c0_18] : memref<1x16x16x128xf32, #tpu.memory_space<vmem>>, vector<1x16x16x128xf32>
    %cst_19 = arith.constant 0.000000e+00 : f32
    %7 = vector.broadcast %cst_19 : f32 to vector<1x16x16x128xf32>
    %8 = arith.maximumf %6, %7 : vector<1x16x16x128xf32>
    %c0_20 = arith.constant 0 : index
    %c1 = arith.constant 1 : index
    %c1_21 = arith.constant 1 : index
    %c0_22 = arith.constant 0 : index
    %9 = vector.load %arg9[%c0_20, %c1, %c1_21, %c0_22] : memref<1x18x18x128xf32, #tpu.memory_space<vmem>>, vector<1x16x16x128xf32>
    tpu.vector_store %arg9[%c0_20, %c1, %c1_21, %c0_22], %8 {strides = array<i32>} : memref<1x18x18x128xf32, #tpu.memory_space<vmem>>, vector<1x16x16x128xf32>,
    %c0_23 = arith.constant 0 : index
    %c0_24 = arith.constant 0 : index
    %c0_25 = arith.constant 0 : index
    %c0_26 = arith.constant 0 : index
    %10 = vector.load %arg9[%c0_23, %c0_24, %c0_25, %c0_26] : memref<1x18x18x128xf32, #tpu.memory_space<vmem>>, vector<1x16x16x128xf32>
    %c0_27 = arith.constant 0 : index
    %c0_28 = arith.constant 0 : index
    %c0_29 = arith.constant 0 : index
    %c0_30 = arith.constant 0 : index
    %11 = vector.load %arg10[%c0_27, %c0_28, %c0_29, %c0_30] : memref<1x16x16x1152xf32, #tpu.memory_space<vmem>>, vector<1x16x16x128xf32>
    tpu.vector_store %arg10[%c0_27, %c0_28, %c0_29, %c0_30], %10 {strides = array<i32>} : memref<1x16x16x1152xf32, #tpu.memory_space<vmem>>, vector<1x16x16x128xf32>,
    %c0_31 = arith.constant 0 : index
    %c0_32 = arith.constant 0 : index
    %c1_33 = arith.constant 1 : index
    %c0_34 = arith.constant 0 : index
    %12 = vector.load %arg9[%c0_31, %c0_32, %c1_33, %c0_34] : memref<1x18x18x128xf32, #tpu.memory_space<vmem>>, vector<1x16x16x128xf32>
    %c0_35 = arith.constant 0 : index
    %c0_36 = arith.constant 0 : index
    %c0_37 = arith.constant 0 : index
    %c128 = arith.constant 128 : index
    %13 = vector.load %arg10[%c0_35, %c0_36, %c0_37, %c128] : memref<1x16x16x1152xf32, #tpu.memory_space<vmem>>, vector<1x16x16x128xf32>
    tpu.vector_store %arg10[%c0_35, %c0_36, %c0_37, %c128], %12 {strides = array<i32>} : memref<1x16x16x1152xf32, #tpu.memory_space<vmem>>, vector<1x16x16x128xf32>,
    %c0_38 = arith.constant 0 : index
    %c0_39 = arith.constant 0 : index
    %c2 = arith.constant 2 : index
    %c0_40 = arith.constant 0 : index
    %14 = vector.load %arg9[%c0_38, %c0_39, %c2, %c0_40] : memref<1x18x18x128xf32, #tpu.memory_space<vmem>>, vector<1x16x16x128xf32>
    %c0_41 = arith.constant 0 : index
    %c0_42 = arith.constant 0 : index
    %c0_43 = arith.constant 0 : index
    %c256 = arith.constant 256 : index
    %15 = vector.load %arg10[%c0_41, %c0_42, %c0_43, %c256] : memref<1x16x16x1152xf32, #tpu.memory_space<vmem>>, vector<1x16x16x128xf32>
    tpu.vector_store %arg10[%c0_41, %c0_42, %c0_43, %c256], %14 {strides = array<i32>} : memref<1x16x16x1152xf32, #tpu.memory_space<vmem>>, vector<1x16x16x128xf32>,
    %c0_44 = arith.constant 0 : index
    %c1_45 = arith.constant 1 : index
    %c0_46 = arith.constant 0 : index
    %c0_47 = arith.constant 0 : index
    %16 = vector.load %arg9[%c0_44, %c1_45, %c0_46, %c0_47] : memref<1x18x18x128xf32, #tpu.memory_space<vmem>>, vector<1x16x16x128xf32>
    %c0_48 = arith.constant 0 : index
    %c0_49 = arith.constant 0 : index
    %c0_50 = arith.constant 0 : index
    %c384 = arith.constant 384 : index
    %17 = vector.load %arg10[%c0_48, %c0_49, %c0_50, %c384] : memref<1x16x16x1152xf32, #tpu.memory_space<vmem>>, vector<1x16x16x128xf32>
    tpu.vector_store %arg10[%c0_48, %c0_49, %c0_50, %c384], %16 {strides = array<i32>} : memref<1x16x16x1152xf32, #tpu.memory_space<vmem>>, vector<1x16x16x128xf32>,
    %c0_51 = arith.constant 0 : index
    %c1_52 = arith.constant 1 : index
    %c1_53 = arith.constant 1 : index
    %c0_54 = arith.constant 0 : index
    %18 = vector.load %arg9[%c0_51, %c1_52, %c1_53, %c0_54] : memref<1x18x18x128xf32, #tpu.memory_space<vmem>>, vector<1x16x16x128xf32>
    %c0_55 = arith.constant 0 : index
    %c0_56 = arith.constant 0 : index
    %c0_57 = arith.constant 0 : index
    %c512 = arith.constant 512 : index
    %19 = vector.load %arg10[%c0_55, %c0_56, %c0_57, %c512] : memref<1x16x16x1152xf32, #tpu.memory_space<vmem>>, vector<1x16x16x128xf32>
    tpu.vector_store %arg10[%c0_55, %c0_56, %c0_57, %c512], %18 {strides = array<i32>} : memref<1x16x16x1152xf32, #tpu.memory_space<vmem>>, vector<1x16x16x128xf32>,
    %c0_58 = arith.constant 0 : index
    %c1_59 = arith.constant 1 : index
    %c2_60 = arith.constant 2 : index
    %c0_61 = arith.constant 0 : index
    %20 = vector.load %arg9[%c0_58, %c1_59, %c2_60, %c0_61] : memref<1x18x18x128xf32, #tpu.memory_space<vmem>>, vector<1x16x16x128xf32>
    %c0_62 = arith.constant 0 : index
    %c0_63 = arith.constant 0 : index
    %c0_64 = arith.constant 0 : index
    %c640 = arith.constant 640 : index
    %21 = vector.load %arg10[%c0_62, %c0_63, %c0_64, %c640] : memref<1x16x16x1152xf32, #tpu.memory_space<vmem>>, vector<1x16x16x128xf32>
    tpu.vector_store %arg10[%c0_62, %c0_63, %c0_64, %c640], %20 {strides = array<i32>} : memref<1x16x16x1152xf32, #tpu.memory_space<vmem>>, vector<1x16x16x128xf32>,
    %c0_65 = arith.constant 0 : index
    %c2_66 = arith.constant 2 : index
    %c0_67 = arith.constant 0 : index
    %c0_68 = arith.constant 0 : index
    %22 = vector.load %arg9[%c0_65, %c2_66, %c0_67, %c0_68] : memref<1x18x18x128xf32, #tpu.memory_space<vmem>>, vector<1x16x16x128xf32>
    %c0_69 = arith.constant 0 : index
    %c0_70 = arith.constant 0 : index
    %c0_71 = arith.constant 0 : index
    %c768 = arith.constant 768 : index
    %23 = vector.load %arg10[%c0_69, %c0_70, %c0_71, %c768] : memref<1x16x16x1152xf32, #tpu.memory_space<vmem>>, vector<1x16x16x128xf32>
    tpu.vector_store %arg10[%c0_69, %c0_70, %c0_71, %c768], %22 {strides = array<i32>} : memref<1x16x16x1152xf32, #tpu.memory_space<vmem>>, vector<1x16x16x128xf32>,
    %c0_72 = arith.constant 0 : index
    %c2_73 = arith.constant 2 : index
    %c1_74 = arith.constant 1 : index
    %c0_75 = arith.constant 0 : index
    %24 = vector.load %arg9[%c0_72, %c2_73, %c1_74, %c0_75] : memref<1x18x18x128xf32, #tpu.memory_space<vmem>>, vector<1x16x16x128xf32>
    %c0_76 = arith.constant 0 : index
    %c0_77 = arith.constant 0 : index
    %c0_78 = arith.constant 0 : index
    %c896 = arith.constant 896 : index
    %25 = vector.load %arg10[%c0_76, %c0_77, %c0_78, %c896] : memref<1x16x16x1152xf32, #tpu.memory_space<vmem>>, vector<1x16x16x128xf32>
    tpu.vector_store %arg10[%c0_76, %c0_77, %c0_78, %c896], %24 {strides = array<i32>} : memref<1x16x16x1152xf32, #tpu.memory_space<vmem>>, vector<1x16x16x128xf32>,
    %c0_79 = arith.constant 0 : index
    %c2_80 = arith.constant 2 : index
    %c2_81 = arith.constant 2 : index
    %c0_82 = arith.constant 0 : index
    %26 = vector.load %arg9[%c0_79, %c2_80, %c2_81, %c0_82] : memref<1x18x18x128xf32, #tpu.memory_space<vmem>>, vector<1x16x16x128xf32>
    %c0_83 = arith.constant 0 : index
    %c0_84 = arith.constant 0 : index
    %c0_85 = arith.constant 0 : index
    %c1024 = arith.constant 1024 : index
    %27 = vector.load %arg10[%c0_83, %c0_84, %c0_85, %c1024] : memref<1x16x16x1152xf32, #tpu.memory_space<vmem>>, vector<1x16x16x128xf32>
    tpu.vector_store %arg10[%c0_83, %c0_84, %c0_85, %c1024], %26 {strides = array<i32>} : memref<1x16x16x1152xf32, #tpu.memory_space<vmem>>, vector<1x16x16x128xf32>,
    %c0_86 = arith.constant 0 : index
    %c0_87 = arith.constant 0 : index
    %c0_88 = arith.constant 0 : index
    %c0_89 = arith.constant 0 : index
    %28 = vector.load %arg10[%c0_86, %c0_87, %c0_88, %c0_89] : memref<1x16x16x1152xf32, #tpu.memory_space<vmem>>, vector<1x16x16x1152xf32>
    %29 = vector.shape_cast %28 : vector<1x16x16x1152xf32> to vector<256x1152xf32>
    %c0_90 = arith.constant 0 : index
    %c0_91 = arith.constant 0 : index
    %30 = vector.load %arg2[%c0_90, %c0_91] : memref<1152x128xf32, #tpu.memory_space<vmem>>, vector<1152x128xf32>
    %cst_92 = arith.constant dense<0.000000e+00> : vector<256x128xf32>
    %31 = tpu.matmul %29, %30, %cst_92 {dimension_numbers = #tpu.dot_dimension_numbers<[1], [0], [0], [1], [0, 0, 1, 1], [], []>} : vector<256x1152xf32>, vector<1152x128xf32>, vector<256x128xf32> -> vector<256x128xf32>
    %c0_93 = arith.constant 0 : index
    %c0_94 = arith.constant 0 : index
    %32 = vector.load %arg3[%c0_93, %c0_94] : memref<1x128xf32, #tpu.memory_space<vmem>>, vector<1x128xf32>
    %33 = vector.broadcast %32 : vector<1x128xf32> to vector<256x128xf32>
    %34 = arith.mulf %31, %33 : vector<256x128xf32>
    %c0_95 = arith.constant 0 : index
    %c0_96 = arith.constant 0 : index
    %35 = vector.load %arg4[%c0_95, %c0_96] : memref<1x128xf32, #tpu.memory_space<vmem>>, vector<1x128xf32>
    %36 = vector.broadcast %35 : vector<1x128xf32> to vector<256x128xf32>
    %37 = arith.addf %34, %36 : vector<256x128xf32>
    %cst_97 = arith.constant 0.000000e+00 : f32
    %38 = vector.broadcast %cst_97 : f32 to vector<256x128xf32>
    %39 = arith.maximumf %37, %38 : vector<256x128xf32>
    %c0_98 = arith.constant 0 : index
    %c0_99 = arith.constant 0 : index
    %40 = vector.load %arg5[%c0_98, %c0_99] : memref<128x128xf32, #tpu.memory_space<vmem>>, vector<128x128xf32>
    %cst_100 = arith.constant dense<0.000000e+00> : vector<256x128xf32>
    %41 = tpu.matmul %39, %40, %cst_100 {dimension_numbers = #tpu.dot_dimension_numbers<[1], [0], [0], [1], [0, 0, 1, 1], [], []>} : vector<256x128xf32>, vector<128x128xf32>, vector<256x128xf32> -> vector<256x128xf32>
    %c0_101 = arith.constant 0 : index
    %c0_102 = arith.constant 0 : index
    %42 = vector.load %arg6[%c0_101, %c0_102] : memref<1x128xf32, #tpu.memory_space<vmem>>, vector<1x128xf32>
    %43 = vector.broadcast %42 : vector<1x128xf32> to vector<256x128xf32>
    %44 = arith.mulf %41, %43 : vector<256x128xf32>
    %c0_103 = arith.constant 0 : index
    %c0_104 = arith.constant 0 : index
    %45 = vector.load %arg7[%c0_103, %c0_104] : memref<1x128xf32, #tpu.memory_space<vmem>>, vector<1x128xf32>
    %46 = vector.broadcast %45 : vector<1x128xf32> to vector<256x128xf32>
    %47 = arith.addf %44, %46 : vector<256x128xf32>
    %c0_105 = arith.constant 0 : index
    %c0_106 = arith.constant 0 : index
    %c0_107 = arith.constant 0 : index
    %c0_108 = arith.constant 0 : index
    %48 = vector.load %arg1[%c0_105, %c0_106, %c0_107, %c0_108] : memref<1x16x16x128xf32, #tpu.memory_space<vmem>>, vector<1x16x16x128xf32>
    %49 = vector.shape_cast %47 : vector<256x128xf32> to vector<1x16x16x128xf32>
    %50 = arith.addf %48, %49 : vector<1x16x16x128xf32>
    %c0_109 = arith.constant 0 : index
    %c0_110 = arith.constant 0 : index
    %c0_111 = arith.constant 0 : index
    %c0_112 = arith.constant 0 : index
    %51 = vector.load %arg8[%c0_109, %c0_110, %c0_111, %c0_112] : memref<1x16x16x128xf32, #tpu.memory_space<vmem>>, vector<1x16x16x128xf32>
    tpu.vector_store %arg8[%c0_109, %c0_110, %c0_111, %c0_112], %50 {strides = array<i32>} : memref<1x16x16x128xf32, #tpu.memory_space<vmem>>, vector<1x16x16x128xf32>,
    return
  }
  func.func @transform_0(%arg0: i32) -> (i32, i32, i32, i32) {
    %c0_i32 = arith.constant 0 : i32
    %c0_i32_0 = arith.constant 0 : i32
    %c0_i32_1 = arith.constant 0 : i32
    %c0_i32_2 = arith.constant 0 : i32
    return %arg0, %c0_i32, %c0_i32_0, %c0_i32_1 : i32, i32, i32, i32
  }
  func.func @transform_1(%arg0: i32) -> (i32, i32) {
    %c0_i32 = arith.constant 0 : i32
    %c0_i32_0 = arith.constant 0 : i32
    %c0_i32_1 = arith.constant 0 : i32
    return %c0_i32, %c0_i32_0 : i32, i32
  }
  func.func @transform_2(%arg0: i32) -> (i32, i32) {
    %c0_i32 = arith.constant 0 : i32
    %c0_i32_0 = arith.constant 0 : i32
    %c0_i32_1 = arith.constant 0 : i32
    return %c0_i32, %c0_i32_0 : i32, i32
  }
  func.func @transform_3(%arg0: i32) -> (i32, i32) {
    %c0_i32 = arith.constant 0 : i32
    %c0_i32_0 = arith.constant 0 : i32
    %c0_i32_1 = arith.constant 0 : i32
    return %c0_i32, %c0_i32_0 : i32, i32
  }
  func.func @transform_4(%arg0: i32) -> (i32, i32) {
    %c0_i32 = arith.constant 0 : i32
    %c0_i32_0 = arith.constant 0 : i32
    %c0_i32_1 = arith.constant 0 : i32
    return %c0_i32, %c0_i32_0 : i32, i32
  }
  func.func @transform_5(%arg0: i32) -> (i32, i32) {
    %c0_i32 = arith.constant 0 : i32
    %c0_i32_0 = arith.constant 0 : i32
    %c0_i32_1 = arith.constant 0 : i32
    return %c0_i32, %c0_i32_0 : i32, i32
  }
  func.func @transform_6(%arg0: i32) -> (i32, i32) {
    %c0_i32 = arith.constant 0 : i32
    %c0_i32_0 = arith.constant 0 : i32
    %c0_i32_1 = arith.constant 0 : i32
    return %c0_i32, %c0_i32_0 : i32, i32
  }
  func.func @transform_7(%arg0: i32) -> (i32, i32, i32, i32) {
    %c0_i32 = arith.constant 0 : i32
    %c0_i32_0 = arith.constant 0 : i32
    %c0_i32_1 = arith.constant 0 : i32
    %c0_i32_2 = arith.constant 0 : i32
    return %arg0, %c0_i32, %c0_i32_0, %c0_i32_1 : i32, i32, i32, i32
  }
}

</mosaic_0001>

<llo_original>
// kernel: tpu_custom_call.1
$region0: #{tpu_custom_call.1}
  #allocation0 [shape = 'u32[]', space=smem, size = 0x4, offset = 0x4, fixed_abs, tag = 'smem constant byte address 0x4 - core index']
  #allocation1 [shape = 'u32[144,128]{1,0:T(1,128)}', space=vmem, size = 0x12000, scoped, tag = 'internal scratch']
  #allocation2 [shape = 'f32[1,18,18,128]{3,2,1,0:T(8,128)}', space=vmem, size = 0x36000, scoped, tag = 'scratch operand']
  #allocation3 [shape = 'f32[1,16,16,1152]{3,2,1,0:T(8,128)}', space=vmem, size = 0x120000, scoped, tag = 'scratch operand']
  %s0 = inlined_call_operand.hbm [shape: f32[2,16,16,128], index: 0, kind: input, shape index: {}]
  %s1 = inlined_call_operand.hbm [shape: f32[1152,128], index: 1, kind: input, shape index: {}]
  %s2 = inlined_call_operand.vmem [shape: f32[1,128], index: 2, kind: input, shape index: {}]
  %s3 = inlined_call_operand.vmem [shape: f32[1,128], index: 3, kind: input, shape index: {}]
  %s4 = inlined_call_operand.hbm [shape: f32[128,128], index: 4, kind: input, shape index: {}]
  %s5 = inlined_call_operand.vmem [shape: f32[1,128], index: 5, kind: input, shape index: {}]
  %s6 = inlined_call_operand.vmem [shape: f32[1,128], index: 6, kind: input, shape index: {}]
  %s7 = inlined_call_operand.hbm [shape: f32[2,16,16,128], index: 7, kind: output, shape index: {}]
  %s8 = sld [smem:[#allocation0]]
  $region73: #{tpu_custom_call.1} parent=0
    _
  %s10 = ssub.s32 1, %s8
  %s11 = scalar_select 0, %s10, %s8
  $region1: #{tpu_custom_call.1} parent=0
    #allocation4 [shape = 'u8[262144]{0}', space=vmem, size = 0x40000, scoped, tag = 'input window, operand 0']
    #allocation5 [shape = 's32[2]{0}', space=sflag, size = 0x8, scoped, tag = 'scoped memory for tpu_custom_call.1']
    #allocation6 [shape = 's32[2]{0}', space=sflag, size = 0x8, scoped, tag = 'scoped memory for tpu_custom_call.1']
    #allocation7 [shape = 'u8[589824]{0}', space=vmem, size = 0x90000, scoped, tag = 'input window, operand 1, single buffered']
    #allocation8 [shape = 's32[1]{0}', space=sflag, size = 0x4, scoped, tag = 'scoped memory for tpu_custom_call.1']
    #allocation9 [shape = 'u8[65536]{0}', space=vmem, size = 0x10000, scoped, tag = 'input window, operand 4, single buffered']
    #allocation10 [shape = 'u8[262144]{0}', space=vmem, size = 0x40000, scoped, tag = 'output window, operand 0']
    %12 = vsyncpa [#allocation5], 0
    %s13 = scalar_lea.sflag [#allocation5], 1
    %14 = vsyncpa %s13, 0
    %15 = vsyncpa [#allocation8], 0
    %16 = vsyncpa [#allocation6], 0
    %s17 = scalar_lea.sflag [#allocation6], 1
    %18 = vsyncpa %s17, 0
    loop: start=0, step=1, limit=4
    $region2: #{tpu_custom_call.1} parent=1 // loop_pre_header
      _
    $region3: #{tpu_custom_call.1} parent=1 // loop_header
      %s20 = sphi 0, %s24
      %p21 = scmp.ge.s32.totalorder %s20, 4
      %s30 = sphi 0, %s32
      %s33 = sphi 0, %s30
      %s34 = sphi 0, %s33
      %s50 = sphi 0, %s34
      %s54 = sphi 0, %s54
      %s56 = sphi 0, %s54
      %s57 = sphi 0, %s56
      %s71 = sphi 0, %s57
      %s75 = sphi 0, %s75
      %s77 = sphi 0, %s75
      %s78 = sphi 0, %s77
      %s92 = sphi 0, %s78
      %s96 = sphi 0, %s96
      %s98 = sphi 0, %s96
      %s99 = sphi 0, %s98
      %s113 = sphi 0, %s99
      %s117 = sphi 0, %s117
      %s119 = sphi 0, %s117
      %s120 = sphi 0, %s119
      %s134 = sphi 0, %s120
      %s138 = sphi 0, %s138
      %s140 = sphi 0, %s138
      %s141 = sphi 0, %s140
      %s155 = sphi 0, %s141
      %s159 = sphi 0, %s159
      %s161 = sphi 0, %s159
      %s162 = sphi 0, %s161
      %s176 = sphi 0, %s162
      %s182 = sphi 0, %s184
      %s185 = sphi 0, %s182
      %s186 = sphi 0, %s185
      %s202 = sphi 0, %s186
    $region4: #{tpu_custom_call.1} parent=1 // loop_header_branch
      %23 = sbr.rel (%p21) target = $region8
    $region5: #{tpu_custom_call.1} parent=1 // loop_body
      %s25 = ssub.s32 %s20, 1
      %s26 = ssub.s32 %s20, 2
      %s27 = sadd.s32 %s20, 1
      %s28 = ssub.s32 %s20, %s27
      %p29 = scmp.eq.s32.totalorder %s28, 0
      %s31 = sadd.s32 %s30, 1
      %s32 = scalar_select %p29, %s30, %s31
      %p35 = pneg %p29
      %p36 = scmp.eq.s32.totalorder %s20, 1
      %p37 = por %p35, %p36
      %p38 = scmp.ne.s32.totalorder %s30, %s33
      %p39 = scmp.eq.s32.totalorder %s20, 0
      %p40 = por %p38, %p39
      %p41 = scmp.ne.s32.totalorder %s30, %s33
      %p42 = scmp.eq.s32.totalorder %s25, 1
      %p43 = por %p41, %p42
      %p44 = scmp.ne.s32.totalorder %s33, %s34
      %p45 = scmp.eq.s32.totalorder %s25, 0
      %p46 = por %p44, %p45
      %p47 = scmp.ne.s32.totalorder %s33, %s34
      %p48 = scmp.eq.s32.totalorder %s26, 1
      %p49 = por %p47, %p48
      %p51 = scmp.ne.s32.totalorder %s34, %s50
      %p52 = scmp.eq.s32.totalorder %s26, 0
      %p53 = por %p51, %p52
      %s55 = sadd.s32 %s54, 1
      %p58 = scmp.eq.s32.totalorder %s20, 1
      %p59 = scmp.ne.s32.totalorder %s54, %s56
      %p60 = scmp.eq.s32.totalorder %s20, 0
      %p61 = por %p59, %p60
      %p62 = scmp.ne.s32.totalorder %s54, %s56
      %p63 = scmp.eq.s32.totalorder %s25, 1
      %p64 = por %p62, %p63
      %p65 = scmp.ne.s32.totalorder %s56, %s57
      %p66 = scmp.eq.s32.totalorder %s25, 0
      %p67 = por %p65, %p66
      %p68 = scmp.ne.s32.totalorder %s56, %s57
      %p69 = scmp.eq.s32.totalorder %s26, 1
      %p70 = por %p68, %p69
      %p72 = scmp.ne.s32.totalorder %s57, %s71
      %p73 = scmp.eq.s32.totalorder %s26, 0
      %p74 = por %p72, %p73
      %s76 = sadd.s32 %s75, 1
      %p79 = scmp.eq.s32.totalorder %s20, 1
      %p80 = scmp.ne.s32.totalorder %s75, %s77
      %p81 = scmp.eq.s32.totalorder %s20, 0
      %p82 = por %p80, %p81
      %p83 = scmp.ne.s32.totalorder %s75, %s77
      %p84 = scmp.eq.s32.totalorder %s25, 1
      %p85 = por %p83, %p84
      %p86 = scmp.ne.s32.totalorder %s77, %s78
      %p87 = scmp.eq.s32.totalorder %s25, 0
      %p88 = por %p86, %p87
      %p89 = scmp.ne.s32.totalorder %s77, %s78
      %p90 = scmp.eq.s32.totalorder %s26, 1
      %p91 = por %p89, %p90
      %p93 = scmp.ne.s32.totalorder %s78, %s92
      %p94 = scmp.eq.s32.totalorder %s26, 0
      %p95 = por %p93, %p94
      %s97 = sadd.s32 %s96, 1
      %p100 = scmp.eq.s32.totalorder %s20, 1
      %p101 = scmp.ne.s32.totalorder %s96, %s98
      %p102 = scmp.eq.s32.totalorder %s20, 0
      %p103 = por %p101, %p102
      %p104 = scmp.ne.s32.totalorder %s96, %s98
      %p105 = scmp.eq.s32.totalorder %s25, 1
      %p106 = por %p104, %p105
      %p107 = scmp.ne.s32.totalorder %s98, %s99
      %p108 = scmp.eq.s32.totalorder %s25, 0
      %p109 = por %p107, %p108
      %p110 = scmp.ne.s32.totalorder %s98, %s99
      %p111 = scmp.eq.s32.totalorder %s26, 1
      %p112 = por %p110, %p111
      %p114 = scmp.ne.s32.totalorder %s99, %s113
      %p115 = scmp.eq.s32.totalorder %s26, 0
      %p116 = por %p114, %p115
      %s118 = sadd.s32 %s117, 1
      %p121 = scmp.eq.s32.totalorder %s20, 1
      %p122 = scmp.ne.s32.totalorder %s117, %s119
      %p123 = scmp.eq.s32.totalorder %s20, 0
      %p124 = por %p122, %p123
      %p125 = scmp.ne.s32.totalorder %s117, %s119
      %p126 = scmp.eq.s32.totalorder %s25, 1
      %p127 = por %p125, %p126
      %p128 = scmp.ne.s32.totalorder %s119, %s120
      %p129 = scmp.eq.s32.totalorder %s25, 0
      %p130 = por %p128, %p129
      %p131 = scmp.ne.s32.totalorder %s119, %s120
      %p132 = scmp.eq.s32.totalorder %s26, 1
      %p133 = por %p131, %p132
      %p135 = scmp.ne.s32.totalorder %s120, %s134
      %p136 = scmp.eq.s32.totalorder %s26, 0
      %p137 = por %p135, %p136
      %s139 = sadd.s32 %s138, 1
      %p142 = scmp.eq.s32.totalorder %s20, 1
      %p143 = scmp.ne.s32.totalorder %s138, %s140
      %p144 = scmp.eq.s32.totalorder %s20, 0
      %p145 = por %p143, %p144
      %p146 = scmp.ne.s32.totalorder %s138, %s140
      %p147 = scmp.eq.s32.totalorder %s25, 1
      %p148 = por %p146, %p147
      %p149 = scmp.ne.s32.totalorder %s140, %s141
      %p150 = scmp.eq.s32.totalorder %s25, 0
      %p151 = por %p149, %p150
      %p152 = scmp.ne.s32.totalorder %s140, %s141
      %p153 = scmp.eq.s32.totalorder %s26, 1
      %p154 = por %p152, %p153
      %p156 = scmp.ne.s32.totalorder %s141, %s155
      %p157 = scmp.eq.s32.totalorder %s26, 0
      %p158 = por %p156, %p157
      %s160 = sadd.s32 %s159, 1
      %p163 = scmp.eq.s32.totalorder %s20, 1
      %p164 = scmp.ne.s32.totalorder %s159, %s161
      %p165 = scmp.eq.s32.totalorder %s20, 0
      %p166 = por %p164, %p165
      %p167 = scmp.ne.s32.totalorder %s159, %s161
      %p168 = scmp.eq.s32.totalorder %s25, 1
      %p169 = por %p167, %p168
      %p170 = scmp.ne.s32.totalorder %s161, %s162
      %p171 = scmp.eq.s32.totalorder %s25, 0
      %p172 = por %p170, %p171
      %p173 = scmp.ne.s32.totalorder %s161, %s162
      %p174 = scmp.eq.s32.totalorder %s26, 1
      %p175 = por %p173, %p174
      %p177 = scmp.ne.s32.totalorder %s162, %s176
      %p178 = scmp.eq.s32.totalorder %s26, 0
      %p179 = por %p177, %p178
      %s180 = ssub.s32 %s20, %s27
      %p181 = scmp.eq.s32.totalorder %s180, 0
      %s183 = sadd.s32 %s182, 1
      %s184 = scalar_select %p181, %s182, %s183
      %p187 = pneg %p181
      %p188 = scmp.eq.s32.totalorder %s20, 1
      %p189 = por %p187, %p188
      %p190 = scmp.ne.s32.totalorder %s182, %s185
      %p191 = scmp.eq.s32.totalorder %s20, 0
      %p192 = por %p190, %p191
      %p193 = scmp.ne.s32.totalorder %s182, %s185
      %p194 = scmp.eq.s32.totalorder %s25, 1
      %p195 = por %p193, %p194
      %p196 = scmp.ne.s32.totalorder %s185, %s186
      %p197 = scmp.eq.s32.totalorder %s25, 0
      %p198 = por %p196, %p197
      %p199 = scmp.ne.s32.totalorder %s185, %s186
      %p200 = scmp.eq.s32.totalorder %s26, 1
      %p201 = por %p199, %p200
      %p203 = scmp.ne.s32.totalorder %s186, %s202
      %p204 = scmp.eq.s32.totalorder %s26, 0
      %p205 = por %p203, %p204
      %p206 = scmp.le.s32.totalorder 1, %s20
      %p207 = scmp.lt.s32.totalorder %s20, 3
      %p208 = pnand %p206, %p207
      %p209 = pneg %p208
      // Predicated region
      $region9: #{tpu_custom_call.1} parent=5 // pred_check
        _
      $region10: #{tpu_custom_call.1} parent=5 // pred_check_branch
        %211 = sbr.rel (%p208) target = $region12
      $region11: #{tpu_custom_call.1} parent=5 // pred_region
        %s212 = ssub.s32 %s20, 1
        // Predicated region
        $region13: #{tpu_custom_call.1} parent=11 // pred_check
          %p213 = pneg %p67
        $region14: #{tpu_custom_call.1} parent=11 // pred_check_branch
          %215 = sbr.rel (%p213) target = $region16
        $region15: #{tpu_custom_call.1} parent=11 // pred_region
          %s217 = ssub.s32 18432, 18432
          %218 = vsyncadd [#allocation8], %s217
          %s219 = sshll.u32 [#allocation7], 4
          %s220 = int_to_ptr.vmem [resolvable:$true] %s219
          %225 = dma.hbm_to_vmem [thread:$0]  %s1, 18432, %s220, [#allocation8], 128, 128, 8
        $region16: #{tpu_custom_call.1} parent=11 // pred_fallthru
          _
        // Predicated region
        $region17: #{tpu_custom_call.1} parent=11 // pred_check
          %p226 = pneg %p88
        $region18: #{tpu_custom_call.1} parent=11 // pred_check_branch
          %228 = sbr.rel (%p226) target = $region20
        $region19: #{tpu_custom_call.1} parent=11 // pred_region
          _
        $region20: #{tpu_custom_call.1} parent=11 // pred_fallthru
          _
        // Predicated region
        $region21: #{tpu_custom_call.1} parent=11 // pred_check
          %p229 = pneg %p109
        $region22: #{tpu_custom_call.1} parent=11 // pred_check_branch
          %231 = sbr.rel (%p229) target = $region24
        $region23: #{tpu_custom_call.1} parent=11 // pred_region
          _
        $region24: #{tpu_custom_call.1} parent=11 // pred_fallthru
          _
        // Predicated region
        $region25: #{tpu_custom_call.1} parent=11 // pred_check
          %p232 = pneg %p130
        $region26: #{tpu_custom_call.1} parent=11 // pred_check_branch
          %234 = sbr.rel (%p232) target = $region28
        $region27: #{tpu_custom_call.1} parent=11 // pred_region
          %s236 = ssub.s32 2048, 2048
          %237 = vsyncadd [#allocation8], %s236
          %s238 = sshll.u32 [#allocation9], 4
          %s239 = int_to_ptr.vmem [resolvable:$true] %s238
          %244 = dma.hbm_to_vmem [thread:$0]  %s4, 2048, %s239, [#allocation8], 128, 128, 8
        $region28: #{tpu_custom_call.1} parent=11 // pred_fallthru
          _
        // Predicated region
        $region29: #{tpu_custom_call.1} parent=11 // pred_check
          %p245 = pneg %p151
        $region30: #{tpu_custom_call.1} parent=11 // pred_check_branch
          %247 = sbr.rel (%p245) target = $region32
        $region31: #{tpu_custom_call.1} parent=11 // pred_region
          _
        $region32: #{tpu_custom_call.1} parent=11 // pred_fallthru
          _
        // Predicated region
        $region33: #{tpu_custom_call.1} parent=11 // pred_check
          %p248 = pneg %p172
        $region34: #{tpu_custom_call.1} parent=11 // pred_check_branch
          %250 = sbr.rel (%p248) target = $region36
        $region35: #{tpu_custom_call.1} parent=11 // pred_region
          _
        $region36: #{tpu_custom_call.1} parent=11 // pred_fallthru
          _
      $region12: #{tpu_custom_call.1} parent=5 // pred_fallthru
        _
      %p251 = scmp.lt.s32.totalorder %s20, 2
      // Predicated region
      $region37: #{tpu_custom_call.1} parent=5 // pred_check
        %p252 = pneg %p251
      $region38: #{tpu_custom_call.1} parent=5 // pred_check_branch
        %254 = sbr.rel (%p252) target = $region40
      $region39: #{tpu_custom_call.1} parent=5 // pred_region
        // Predicated region
        $region41: #{tpu_custom_call.1} parent=39 // pred_check
          %p255 = pneg %p40
        $region42: #{tpu_custom_call.1} parent=39 // pred_check_branch
          %257 = sbr.rel (%p255) target = $region44
        $region43: #{tpu_custom_call.1} parent=39 // pred_region
          %s258 = sand.u32 %s30, 1
          %s259 = scalar_lea.sflag [#allocation5], %s258
          %s260 = sand.u32 %s30, 1
          %s261 = smul.addr %s260, 256
          %s262 = scalar_lea.vmem [#allocation4], %s261
          %s264 = ssub.s32 4096, 4096
          %265 = vsyncadd %s259, %s264
          %s266 = smul.addr %s20, 32
          %s267 = smul.addr %s266, 128
          %s268 = scalar_lea.hbm %s0, %s267
          %s269 = sshll.u32 %s262, 4
          %s270 = int_to_ptr.vmem [resolvable:$true] %s269
          %275 = dma.hbm_to_vmem [thread:$0]  %s268, 4096, %s270, %s259, 128, 128, 8
        $region44: #{tpu_custom_call.1} parent=39 // pred_fallthru
          _
      $region40: #{tpu_custom_call.1} parent=5 // pred_fallthru
        _
      %p276 = scmp.le.s32.totalorder 1, %s20
      %p277 = scmp.lt.s32.totalorder %s20, 3
      %p278 = pnand %p276, %p277
      %p279 = pneg %p278
      // Predicated region
      $region45: #{tpu_custom_call.1} parent=5 // pred_check
        _
      $region46: #{tpu_custom_call.1} parent=5 // pred_check_branch
        %281 = sbr.rel (%p278) target = $region48
      $region47: #{tpu_custom_call.1} parent=5 // pred_region
        %s282 = ssub.s32 %s20, 1
        %s283 = sand.u32 %s33, 1
        %s284 = scalar_lea.sflag [#allocation5], %s283
        %s285 = sand.u32 %s33, 1
        %s286 = smul.addr %s285, 256
        %s287 = scalar_lea.vmem [#allocation4], %s286
        // Predicated region
        $region49: #{tpu_custom_call.1} parent=47 // pred_check
          %p288 = pneg %p46
        $region50: #{tpu_custom_call.1} parent=47 // pred_check_branch
          %290 = sbr.rel (%p288) target = $region52
        $region51: #{tpu_custom_call.1} parent=47 // pred_region
          %291 = dma.done %s284, 4096
        $region52: #{tpu_custom_call.1} parent=47 // pred_fallthru
          _
        // Predicated region
        $region53: #{tpu_custom_call.1} parent=47 // pred_check
          %p292 = pneg %p67
        $region54: #{tpu_custom_call.1} parent=47 // pred_check_branch
          %294 = sbr.rel (%p292) target = $region56
        $region55: #{tpu_custom_call.1} parent=47 // pred_region
          %295 = dma.done [#allocation8], 18432
        $region56: #{tpu_custom_call.1} parent=47 // pred_fallthru
          _
        // Predicated region
        $region57: #{tpu_custom_call.1} parent=47 // pred_check
          %p296 = pneg %p130
        $region58: #{tpu_custom_call.1} parent=47 // pred_check_branch
          %298 = sbr.rel (%p296) target = $region60
        $region59: #{tpu_custom_call.1} parent=47 // pred_region
          %299 = dma.done [#allocation8], 2048
        $region60: #{tpu_custom_call.1} parent=47 // pred_fallthru
          _
        %s300 = sand.u32 %s33, 1
        %s301 = scalar_lea.sflag [#allocation5], %s300
        %s302 = sand.u32 %s33, 1
        %s303 = smul.addr %s302, 256
        %s304 = scalar_lea.vmem [#allocation4], %s303
        %p305 = pneg %p46
        %p306 = pneg %p43
        %p307 = pneg %p67
        %p308 = pneg %p64
        %p309 = pneg %p88
        %p310 = pneg %p85
        %p311 = pneg %p109
        %p312 = pneg %p106
        %p313 = pneg %p130
        %p314 = pneg %p127
        %p315 = pneg %p151
        %p316 = pneg %p148
        %p317 = pneg %p172
        %p318 = pneg %p169
        %p319 = pneg %p198
        %p320 = pneg %p195
        %s321 = sand.u32 %s185, 1
        %s322 = scalar_lea.sflag [#allocation6], %s321
        %s323 = sand.u32 %s185, 1
        %s324 = smul.addr %s323, 256
        %s325 = scalar_lea.vmem [#allocation10], %s324
        %326 = vst [vmem:[#allocation2] sm:$0xff] 0.0
        %327 = vst [vmem:[#allocation2 + $0x8] sm:$0xff] 0.0
        %328 = vst [vmem:[#allocation2 + $0x10] sm:$0x3] 0.0
        %s329 = scalar_lea.vmem [#allocation2], 408
        %330 = vst [vmem:[%s329] sm:$0xff] 0.0
        %331 = vst [vmem:[%s329 + $0x8] sm:$0xff] 0.0
        %332 = vst [vmem:[%s329 + $0x10] sm:$0x3] 0.0
        %333 = vst [vmem:[#allocation2] sm:$0x1] 0.0
        %334 = vst [vmem:[#allocation2 + $0x18] sm:$0x1] 0.0
        %335 = vst [vmem:[#allocation2 + $0x30] sm:$0x1] 0.0
        %336 = vst [vmem:[#allocation2 + $0x48] sm:$0x1] 0.0
        %337 = vst [vmem:[#allocation2 + $0x60] sm:$0x1] 0.0
        %338 = vst [vmem:[#allocation2 + $0x78] sm:$0x1] 0.0
        %339 = vst [vmem:[#allocation2 + $0x90] sm:$0x1] 0.0
        %340 = vst [vmem:[#allocation2 + $0xa8] sm:$0x1] 0.0
        %341 = vst [vmem:[#allocation2 + $0xc0] sm:$0x1] 0.0
        %342 = vst [vmem:[#allocation2 + $0xd8] sm:$0x1] 0.0
        %343 = vst [vmem:[#allocation2 + $0xf0] sm:$0x1] 0.0
        %344 = vst [vmem:[#allocation2 + $0x108] sm:$0x1] 0.0
        %345 = vst [vmem:[#allocation2 + $0x120] sm:$0x1] 0.0
        %346 = vst [vmem:[#allocation2 + $0x138] sm:$0x1] 0.0
        %347 = vst [vmem:[#allocation2 + $0x150] sm:$0x1] 0.0
        %348 = vst [vmem:[#allocation2 + $0x168] sm:$0x1] 0.0
        %349 = vst [vmem:[#allocation2 + $0x180] sm:$0x1] 0.0
        %350 = vst [vmem:[#allocation2 + $0x198] sm:$0x1] 0.0
        %351 = vst [vmem:[#allocation2 + $0x11] sm:$0x1] 0.0
        %352 = vst [vmem:[#allocation2 + $0x29] sm:$0x1] 0.0
        %353 = vst [vmem:[#allocation2 + $0x41] sm:$0x1] 0.0
        %354 = vst [vmem:[#allocation2 + $0x59] sm:$0x1] 0.0
        %355 = vst [vmem:[#allocation2 + $0x71] sm:$0x1] 0.0
        %356 = vst [vmem:[#allocation2 + $0x89] sm:$0x1] 0.0
        %357 = vst [vmem:[#allocation2 + $0xa1] sm:$0x1] 0.0
        %358 = vst [vmem:[#allocation2 + $0xb9] sm:$0x1] 0.0
        %359 = vst [vmem:[#allocation2 + $0xd1] sm:$0x1] 0.0
        %360 = vst [vmem:[#allocation2 + $0xe9] sm:$0x1] 0.0
        %361 = vst [vmem:[#allocation2 + $0x101] sm:$0x1] 0.0
        %362 = vst [vmem:[#allocation2 + $0x119] sm:$0x1] 0.0
        %363 = vst [vmem:[#allocation2 + $0x131] sm:$0x1] 0.0
        %364 = vst [vmem:[#allocation2 + $0x149] sm:$0x1] 0.0
        %365 = vst [vmem:[#allocation2 + $0x161] sm:$0x1] 0.0
        %366 = vst [vmem:[#allocation2 + $0x179] sm:$0x1] 0.0
        %367 = vst [vmem:[#allocation2 + $0x191] sm:$0x1] 0.0
        %368 = vst [vmem:[#allocation2 + $0x1a9] sm:$0x1] 0.0
        %v369 = vld [vmem:[%s287] sm:$0xff]
        %v370 = vld [vmem:[%s287 + $0x8] sm:$0xff]
        %v371 = vld [vmem:[%s287 + $0x10] sm:$0xff]
        %v372 = vld [vmem:[%s287 + $0x18] sm:$0xff]
        %v373 = vld [vmem:[%s287 + $0x20] sm:$0xff]
        %v374 = vld [vmem:[%s287 + $0x28] sm:$0xff]
        %v375 = vld [vmem:[%s287 + $0x30] sm:$0xff]
        %v376 = vld [vmem:[%s287 + $0x38] sm:$0xff]
        %v377 = vld [vmem:[%s287 + $0x40] sm:$0xff]
        %v378 = vld [vmem:[%s287 + $0x48] sm:$0xff]
        %v379 = vld [vmem:[%s287 + $0x50] sm:$0xff]
        %v380 = vld [vmem:[%s287 + $0x58] sm:$0xff]
        %v381 = vld [vmem:[%s287 + $0x60] sm:$0xff]
        %v382 = vld [vmem:[%s287 + $0x68] sm:$0xff]
        %v383 = vld [vmem:[%s287 + $0x70] sm:$0xff]
        %v384 = vld [vmem:[%s287 + $0x78] sm:$0xff]
        %v385 = vld [vmem:[%s287 + $0x80] sm:$0xff]
        %v386 = vld [vmem:[%s287 + $0x88] sm:$0xff]
        %v387 = vld [vmem:[%s287 + $0x90] sm:$0xff]
        %v388 = vld [vmem:[%s287 + $0x98] sm:$0xff]
        %v389 = vld [vmem:[%s287 + $0xa0] sm:$0xff]
        %v390 = vld [vmem:[%s287 + $0xa8] sm:$0xff]
        %v391 = vld [vmem:[%s287 + $0xb0] sm:$0xff]
        %v392 = vld [vmem:[%s287 + $0xb8] sm:$0xff]
        %v393 = vld [vmem:[%s287 + $0xc0] sm:$0xff]
        %v394 = vld [vmem:[%s287 + $0xc8] sm:$0xff]
        %v395 = vld [vmem:[%s287 + $0xd0] sm:$0xff]
        %v396 = vld [vmem:[%s287 + $0xd8] sm:$0xff]
        %v397 = vld [vmem:[%s287 + $0xe0] sm:$0xff]
        %v398 = vld [vmem:[%s287 + $0xe8] sm:$0xff]
        %v399 = vld [vmem:[%s287 + $0xf0] sm:$0xff]
        %v400 = vld [vmem:[%s287 + $0xf8] sm:$0xff]
        %v401 = vmax.f32 %v369, 0.0
        %v402 = vmax.f32 %v370, 0.0
        %v403 = vmax.f32 %v371, 0.0
        %v404 = vmax.f32 %v372, 0.0
        %v405 = vmax.f32 %v373, 0.0
        %v406 = vmax.f32 %v374, 0.0
        %v407 = vmax.f32 %v375, 0.0
        %v408 = vmax.f32 %v376, 0.0
        %v409 = vmax.f32 %v377, 0.0
        %v410 = vmax.f32 %v378, 0.0
        %v411 = vmax.f32 %v379, 0.0
        %v412 = vmax.f32 %v380, 0.0
        %v413 = vmax.f32 %v381, 0.0
        %v414 = vmax.f32 %v382, 0.0
        %v415 = vmax.f32 %v383, 0.0
        %v416 = vmax.f32 %v384, 0.0
        %v417 = vmax.f32 %v385, 0.0
        %v418 = vmax.f32 %v386, 0.0
        %v419 = vmax.f32 %v387, 0.0
        %v420 = vmax.f32 %v388, 0.0
        %v421 = vmax.f32 %v389, 0.0
        %v422 = vmax.f32 %v390, 0.0
        %v423 = vmax.f32 %v391, 0.0
        %v424 = vmax.f32 %v392, 0.0
        %v425 = vmax.f32 %v393, 0.0
        %v426 = vmax.f32 %v394, 0.0
        %v427 = vmax.f32 %v395, 0.0
        %v428 = vmax.f32 %v396, 0.0
        %v429 = vmax.f32 %v397, 0.0
        %v430 = vmax.f32 %v398, 0.0
        %v431 = vmax.f32 %v399, 0.0
        %v432 = vmax.f32 %v400, 0.0
        %s433 = scalar_lea.vmem [#allocation2], 24
        %434 = vst [vmem:[%s433 + $0x1] sm:$0xff] %v401
        %435 = vst [vmem:[%s433 + $0x9] sm:$0xff] %v402
        %436 = vst [vmem:[%s433 + $0x19] sm:$0xff] %v403
        %437 = vst [vmem:[%s433 + $0x21] sm:$0xff] %v404
        %438 = vst [vmem:[%s433 + $0x31] sm:$0xff] %v405
        %439 = vst [vmem:[%s433 + $0x39] sm:$0xff] %v406
        %440 = vst [vmem:[%s433 + $0x49] sm:$0xff] %v407
        %441 = vst [vmem:[%s433 + $0x51] sm:$0xff] %v408
        %442 = vst [vmem:[%s433 + $0x61] sm:$0xff] %v409
        %443 = vst [vmem:[%s433 + $0x69] sm:$0xff] %v410
        %444 = vst [vmem:[%s433 + $0x79] sm:$0xff] %v411
        %445 = vst [vmem:[%s433 + $0x81] sm:$0xff] %v412
        %446 = vst [vmem:[%s433 + $0x91] sm:$0xff] %v413
        %447 = vst [vmem:[%s433 + $0x99] sm:$0xff] %v414
        %448 = vst [vmem:[%s433 + $0xa9] sm:$0xff] %v415
        %449 = vst [vmem:[%s433 + $0xb1] sm:$0xff] %v416
        %450 = vst [vmem:[%s433 + $0xc1] sm:$0xff] %v417
        %451 = vst [vmem:[%s433 + $0xc9] sm:$0xff] %v418
        %452 = vst [vmem:[%s433 + $0xd9] sm:$0xff] %v419
        %453 = vst [vmem:[%s433 + $0xe1] sm:$0xff] %v420
        %454 = vst [vmem:[%s433 + $0xf1] sm:$0xff] %v421
        %455 = vst [vmem:[%s433 + $0xf9] sm:$0xff] %v422
        %456 = vst [vmem:[%s433 + $0x109] sm:$0xff] %v423
        %457 = vst [vmem:[%s433 + $0x111] sm:$0xff] %v424
        %458 = vst [vmem:[%s433 + $0x121] sm:$0xff] %v425
        %459 = vst [vmem:[%s433 + $0x129] sm:$0xff] %v426
        %460 = vst [vmem:[%s433 + $0x139] sm:$0xff] %v427
        %461 = vst [vmem:[%s433 + $0x141] sm:$0xff] %v428
        %462 = vst [vmem:[%s433 + $0x151] sm:$0xff] %v429
        %463 = vst [vmem:[%s433 + $0x159] sm:$0xff] %v430
        %464 = vst [vmem:[%s433 + $0x169] sm:$0xff] %v431
        %465 = vst [vmem:[%s433 + $0x171] sm:$0xff] %v432
        %v466 = vld [vmem:[#allocation2] sm:$0xff]
        %v467 = vld [vmem:[#allocation2 + $0x8] sm:$0xff]
        %v468 = vld [vmem:[#allocation2 + $0x18] sm:$0xff]
        %v469 = vld [vmem:[#allocation2 + $0x20] sm:$0xff]
        %v470 = vld [vmem:[#allocation2 + $0x30] sm:$0xff]
        %v471 = vld [vmem:[#allocation2 + $0x38] sm:$0xff]
        %v472 = vld [vmem:[#allocation2 + $0x48] sm:$0xff]
        %v473 = vld [vmem:[#allocation2 + $0x50] sm:$0xff]
        %v474 = vld [vmem:[#allocation2 + $0x60] sm:$0xff]
        %v475 = vld [vmem:[#allocation2 + $0x68] sm:$0xff]
        %v476 = vld [vmem:[#allocation2 + $0x78] sm:$0xff]
        %v477 = vld [vmem:[#allocation2 + $0x80] sm:$0xff]
        %v478 = vld [vmem:[#allocation2 + $0x90] sm:$0xff]
        %v479 = vld [vmem:[#allocation2 + $0x98] sm:$0xff]
        %v480 = vld [vmem:[#allocation2 + $0xa8] sm:$0xff]
        %v481 = vld [vmem:[#allocation2 + $0xb0] sm:$0xff]
        %v482 = vld [vmem:[#allocation2 + $0xc0] sm:$0xff]
        %v483 = vld [vmem:[#allocation2 + $0xc8] sm:$0xff]
        %v484 = vld [vmem:[#allocation2 + $0xd8] sm:$0xff]
        %v485 = vld [vmem:[#allocation2 + $0xe0] sm:$0xff]
        %v486 = vld [vmem:[#allocation2 + $0xf0] sm:$0xff]
        %v487 = vld [vmem:[#allocation2 + $0xf8] sm:$0xff]
        %v488 = vld [vmem:[#allocation2 + $0x108] sm:$0xff]
        %v489 = vld [vmem:[#allocation2 + $0x110] sm:$0xff]
        %v490 = vld [vmem:[#allocation2 + $0x120] sm:$0xff]
        %v491 = vld [vmem:[#allocation2 + $0x128] sm:$0xff]
        %v492 = vld [vmem:[#allocation2 + $0x138] sm:$0xff]
        %v493 = vld [vmem:[#allocation2 + $0x140] sm:$0xff]
        %v494 = vld [vmem:[#allocation2 + $0x150] sm:$0xff]
        %v495 = vld [vmem:[#allocation2 + $0x158] sm:$0xff]
        %v496 = vld [vmem:[#allocation2 + $0x168] sm:$0xff]
        %v497 = vld [vmem:[#allocation2 + $0x170] sm:$0xff]
        %498 = vst [vmem:[#allocation3] sm:$0xff] %v466
        %499 = vst [vmem:[#allocation3 + $0x48] sm:$0xff] %v467
        %500 = vst [vmem:[#allocation3 + $0x90] sm:$0xff] %v468
        %501 = vst [vmem:[#allocation3 + $0xd8] sm:$0xff] %v469
        %502 = vst [vmem:[#allocation3 + $0x120] sm:$0xff] %v470
        %503 = vst [vmem:[#allocation3 + $0x168] sm:$0xff] %v471
        %504 = vst [vmem:[#allocation3 + $0x1b0] sm:$0xff] %v472
        %505 = vst [vmem:[#allocation3 + $0x1f8] sm:$0xff] %v473
        %506 = vst [vmem:[#allocation3 + $0x240] sm:$0xff] %v474
        %507 = vst [vmem:[#allocation3 + $0x288] sm:$0xff] %v475
        %508 = vst [vmem:[#allocation3 + $0x2d0] sm:$0xff] %v476
        %509 = vst [vmem:[#allocation3 + $0x318] sm:$0xff] %v477
        %510 = vst [vmem:[#allocation3 + $0x360] sm:$0xff] %v478
        %511 = vst [vmem:[#allocation3 + $0x3a8] sm:$0xff] %v479
        %512 = vst [vmem:[#allocation3 + $0x3f0] sm:$0xff] %v480
        %513 = vst [vmem:[#allocation3 + $0x438] sm:$0xff] %v481
        %514 = vst [vmem:[#allocation3 + $0x480] sm:$0xff] %v482
        %515 = vst [vmem:[#allocation3 + $0x4c8] sm:$0xff] %v483
        %516 = vst [vmem:[#allocation3 + $0x510] sm:$0xff] %v484
        %517 = vst [vmem:[#allocation3 + $0x558] sm:$0xff] %v485
        %518 = vst [vmem:[#allocation3 + $0x5a0] sm:$0xff] %v486
        %519 = vst [vmem:[#allocation3 + $0x5e8] sm:$0xff] %v487
        %520 = vst [vmem:[#allocation3 + $0x630] sm:$0xff] %v488
        %521 = vst [vmem:[#allocation3 + $0x678] sm:$0xff] %v489
        %522 = vst [vmem:[#allocation3 + $0x6c0] sm:$0xff] %v490
        %523 = vst [vmem:[#allocation3 + $0x708] sm:$0xff] %v491
        %524 = vst [vmem:[#allocation3 + $0x750] sm:$0xff] %v492
        %525 = vst [vmem:[#allocation3 + $0x798] sm:$0xff] %v493
        %526 = vst [vmem:[#allocation3 + $0x7e0] sm:$0xff] %v494
        %527 = vst [vmem:[#allocation3 + $0x828] sm:$0xff] %v495
        %528 = vst [vmem:[#allocation3 + $0x870] sm:$0xff] %v496
        %529 = vst [vmem:[#allocation3 + $0x8b8] sm:$0xff] %v497
        %v530 = vld [vmem:[#allocation2 + $0x1] sm:$0xff]
        %v531 = vld [vmem:[#allocation2 + $0x9] sm:$0xff]
        %v532 = vld [vmem:[#allocation2 + $0x19] sm:$0xff]
        %v533 = vld [vmem:[#allocation2 + $0x21] sm:$0xff]
        %v534 = vld [vmem:[#allocation2 + $0x31] sm:$0xff]
        %v535 = vld [vmem:[#allocation2 + $0x39] sm:$0xff]
        %v536 = vld [vmem:[#allocation2 + $0x49] sm:$0xff]
        %v537 = vld [vmem:[#allocation2 + $0x51] sm:$0xff]
        %v538 = vld [vmem:[#allocation2 + $0x61] sm:$0xff]
        %v539 = vld [vmem:[#allocation2 + $0x69] sm:$0xff]
        %v540 = vld [vmem:[#allocation2 + $0x79] sm:$0xff]
        %v541 = vld [vmem:[#allocation2 + $0x81] sm:$0xff]
        %v542 = vld [vmem:[#allocation2 + $0x91] sm:$0xff]
        %v543 = vld [vmem:[#allocation2 + $0x99] sm:$0xff]
        %v544 = vld [vmem:[#allocation2 + $0xa9] sm:$0xff]
        %v545 = vld [vmem:[#allocation2 + $0xb1] sm:$0xff]
        %v546 = vld [vmem:[#allocation2 + $0xc1] sm:$0xff]
        %v547 = vld [vmem:[#allocation2 + $0xc9] sm:$0xff]
        %v548 = vld [vmem:[#allocation2 + $0xd9] sm:$0xff]
        %v549 = vld [vmem:[#allocation2 + $0xe1] sm:$0xff]
        %v550 = vld [vmem:[#allocation2 + $0xf1] sm:$0xff]
        %v551 = vld [vmem:[#allocation2 + $0xf9] sm:$0xff]
        %v552 = vld [vmem:[#allocation2 + $0x109] sm:$0xff]
        %v553 = vld [vmem:[#allocation2 + $0x111] sm:$0xff]
        %v554 = vld [vmem:[#allocation2 + $0x121] sm:$0xff]
        %v555 = vld [vmem:[#allocation2 + $0x129] sm:$0xff]
        %v556 = vld [vmem:[#allocation2 + $0x139] sm:$0xff]
        %v557 = vld [vmem:[#allocation2 + $0x141] sm:$0xff]
        %v558 = vld [vmem:[#allocation2 + $0x151] sm:$0xff]
        %v559 = vld [vmem:[#allocation2 + $0x159] sm:$0xff]
        %v560 = vld [vmem:[#allocation2 + $0x169] sm:$0xff]
        %v561 = vld [vmem:[#allocation2 + $0x171] sm:$0xff]
        %562 = vst [vmem:[#allocation3 + $0x8] sm:$0xff] %v530
        %563 = vst [vmem:[#allocation3 + $0x50] sm:$0xff] %v531
        %564 = vst [vmem:[#allocation3 + $0x98] sm:$0xff] %v532
        %565 = vst [vmem:[#allocation3 + $0xe0] sm:$0xff] %v533
        %566 = vst [vmem:[#allocation3 + $0x128] sm:$0xff] %v534
        %567 = vst [vmem:[#allocation3 + $0x170] sm:$0xff] %v535
        %568 = vst [vmem:[#allocation3 + $0x1b8] sm:$0xff] %v536
        %569 = vst [vmem:[#allocation3 + $0x200] sm:$0xff] %v537
        %570 = vst [vmem:[#allocation3 + $0x248] sm:$0xff] %v538
        %571 = vst [vmem:[#allocation3 + $0x290] sm:$0xff] %v539
        %572 = vst [vmem:[#allocation3 + $0x2d8] sm:$0xff] %v540
        %573 = vst [vmem:[#allocation3 + $0x320] sm:$0xff] %v541
        %574 = vst [vmem:[#allocation3 + $0x368] sm:$0xff] %v542
        %575 = vst [vmem:[#allocation3 + $0x3b0] sm:$0xff] %v543
        %576 = vst [vmem:[#allocation3 + $0x3f8] sm:$0xff] %v544
        %577 = vst [vmem:[#allocation3 + $0x440] sm:$0xff] %v545
        %578 = vst [vmem:[#allocation3 + $0x488] sm:$0xff] %v546
        %579 = vst [vmem:[#allocation3 + $0x4d0] sm:$0xff] %v547
        %580 = vst [vmem:[#allocation3 + $0x518] sm:$0xff] %v548
        %581 = vst [vmem:[#allocation3 + $0x560] sm:$0xff] %v549
        %582 = vst [vmem:[#allocation3 + $0x5a8] sm:$0xff] %v550
        %583 = vst [vmem:[#allocation3 + $0x5f0] sm:$0xff] %v551
        %584 = vst [vmem:[#allocation3 + $0x638] sm:$0xff] %v552
        %585 = vst [vmem:[#allocation3 + $0x680] sm:$0xff] %v553
        %586 = vst [vmem:[#allocation3 + $0x6c8] sm:$0xff] %v554
        %587 = vst [vmem:[#allocation3 + $0x710] sm:$0xff] %v555
        %588 = vst [vmem:[#allocation3 + $0x758] sm:$0xff] %v556
        %589 = vst [vmem:[#allocation3 + $0x7a0] sm:$0xff] %v557
        %590 = vst [vmem:[#allocation3 + $0x7e8] sm:$0xff] %v558
        %591 = vst [vmem:[#allocation3 + $0x830] sm:$0xff] %v559
        %592 = vst [vmem:[#allocation3 + $0x878] sm:$0xff] %v560
        %593 = vst [vmem:[#allocation3 + $0x8c0] sm:$0xff] %v561
        %v594 = vld [vmem:[#allocation2 + $0x2] sm:$0xff]
        %v595 = vld [vmem:[#allocation2 + $0xa] sm:$0xff]
        %v596 = vld [vmem:[#allocation2 + $0x1a] sm:$0xff]
        %v597 = vld [vmem:[#allocation2 + $0x22] sm:$0xff]
        %v598 = vld [vmem:[#allocation2 + $0x32] sm:$0xff]
        %v599 = vld [vmem:[#allocation2 + $0x3a] sm:$0xff]
        %v600 = vld [vmem:[#allocation2 + $0x4a] sm:$0xff]
        %v601 = vld [vmem:[#allocation2 + $0x52] sm:$0xff]
        %v602 = vld [vmem:[#allocation2 + $0x62] sm:$0xff]
        %v603 = vld [vmem:[#allocation2 + $0x6a] sm:$0xff]
        %v604 = vld [vmem:[#allocation2 + $0x7a] sm:$0xff]
        %v605 = vld [vmem:[#allocation2 + $0x82] sm:$0xff]
        %v606 = vld [vmem:[#allocation2 + $0x92] sm:$0xff]
        %v607 = vld [vmem:[#allocation2 + $0x9a] sm:$0xff]
        %v608 = vld [vmem:[#allocation2 + $0xaa] sm:$0xff]
        %v609 = vld [vmem:[#allocation2 + $0xb2] sm:$0xff]
        %v610 = vld [vmem:[#allocation2 + $0xc2] sm:$0xff]
        %v611 = vld [vmem:[#allocation2 + $0xca] sm:$0xff]
        %v612 = vld [vmem:[#allocation2 + $0xda] sm:$0xff]
        %v613 = vld [vmem:[#allocation2 + $0xe2] sm:$0xff]
        %v614 = vld [vmem:[#allocation2 + $0xf2] sm:$0xff]
        %v615 = vld [vmem:[#allocation2 + $0xfa] sm:$0xff]
        %v616 = vld [vmem:[#allocation2 + $0x10a] sm:$0xff]
        %v617 = vld [vmem:[#allocation2 + $0x112] sm:$0xff]
        %v618 = vld [vmem:[#allocation2 + $0x122] sm:$0xff]
        %v619 = vld [vmem:[#allocation2 + $0x12a] sm:$0xff]
        %v620 = vld [vmem:[#allocation2 + $0x13a] sm:$0xff]
        %v621 = vld [vmem:[#allocation2 + $0x142] sm:$0xff]
        %v622 = vld [vmem:[#allocation2 + $0x152] sm:$0xff]
        %v623 = vld [vmem:[#allocation2 + $0x15a] sm:$0xff]
        %v624 = vld [vmem:[#allocation2 + $0x16a] sm:$0xff]
        %v625 = vld [vmem:[#allocation2 + $0x172] sm:$0xff]
        %626 = vst [vmem:[#allocation3 + $0x10] sm:$0xff] %v594
        %627 = vst [vmem:[#allocation3 + $0x58] sm:$0xff] %v595
        %628 = vst [vmem:[#allocation3 + $0xa0] sm:$0xff] %v596
        %629 = vst [vmem:[#allocation3 + $0xe8] sm:$0xff] %v597
        %630 = vst [vmem:[#allocation3 + $0x130] sm:$0xff] %v598
        %631 = vst [vmem:[#allocation3 + $0x178] sm:$0xff] %v599
        %632 = vst [vmem:[#allocation3 + $0x1c0] sm:$0xff] %v600
        %633 = vst [vmem:[#allocation3 + $0x208] sm:$0xff] %v601
        %634 = vst [vmem:[#allocation3 + $0x250] sm:$0xff] %v602
        %635 = vst [vmem:[#allocation3 + $0x298] sm:$0xff] %v603
        %636 = vst [vmem:[#allocation3 + $0x2e0] sm:$0xff] %v604
        %637 = vst [vmem:[#allocation3 + $0x328] sm:$0xff] %v605
        %638 = vst [vmem:[#allocation3 + $0x370] sm:$0xff] %v606
        %639 = vst [vmem:[#allocation3 + $0x3b8] sm:$0xff] %v607
        %640 = vst [vmem:[#allocation3 + $0x400] sm:$0xff] %v608
        %641 = vst [vmem:[#allocation3 + $0x448] sm:$0xff] %v609
        %642 = vst [vmem:[#allocation3 + $0x490] sm:$0xff] %v610
        %643 = vst [vmem:[#allocation3 + $0x4d8] sm:$0xff] %v611
        %644 = vst [vmem:[#allocation3 + $0x520] sm:$0xff] %v612
        %645 = vst [vmem:[#allocation3 + $0x568] sm:$0xff] %v613
        %646 = vst [vmem:[#allocation3 + $0x5b0] sm:$0xff] %v614
        %647 = vst [vmem:[#allocation3 + $0x5f8] sm:$0xff] %v615
        %648 = vst [vmem:[#allocation3 + $0x640] sm:$0xff] %v616
        %649 = vst [vmem:[#allocation3 + $0x688] sm:$0xff] %v617
        %650 = vst [vmem:[#allocation3 + $0x6d0] sm:$0xff] %v618
        %651 = vst [vmem:[#allocation3 + $0x718] sm:$0xff] %v619
        %652 = vst [vmem:[#allocation3 + $0x760] sm:$0xff] %v620
        %653 = vst [vmem:[#allocation3 + $0x7a8] sm:$0xff] %v621
        %654 = vst [vmem:[#allocation3 + $0x7f0] sm:$0xff] %v622
        %655 = vst [vmem:[#allocation3 + $0x838] sm:$0xff] %v623
        %656 = vst [vmem:[#allocation3 + $0x880] sm:$0xff] %v624
        %657 = vst [vmem:[#allocation3 + $0x8c8] sm:$0xff] %v625
        %v658 = vld [vmem:[%s433] sm:$0xff]
        %v659 = vld [vmem:[%s433 + $0x8] sm:$0xff]
        %v660 = vld [vmem:[%s433 + $0x18] sm:$0xff]
        %v661 = vld [vmem:[%s433 + $0x20] sm:$0xff]
        %v662 = vld [vmem:[%s433 + $0x30] sm:$0xff]
        %v663 = vld [vmem:[%s433 + $0x38] sm:$0xff]
        %v664 = vld [vmem:[%s433 + $0x48] sm:$0xff]
        %v665 = vld [vmem:[%s433 + $0x50] sm:$0xff]
        %v666 = vld [vmem:[%s433 + $0x60] sm:$0xff]
        %v667 = vld [vmem:[%s433 + $0x68] sm:$0xff]
        %v668 = vld [vmem:[%s433 + $0x78] sm:$0xff]
        %v669 = vld [vmem:[%s433 + $0x80] sm:$0xff]
        %v670 = vld [vmem:[%s433 + $0x90] sm:$0xff]
        %v671 = vld [vmem:[%s433 + $0x98] sm:$0xff]
        %v672 = vld [vmem:[%s433 + $0xa8] sm:$0xff]
        %v673 = vld [vmem:[%s433 + $0xb0] sm:$0xff]
        %v674 = vld [vmem:[%s433 + $0xc0] sm:$0xff]
        %v675 = vld [vmem:[%s433 + $0xc8] sm:$0xff]
        %v676 = vld [vmem:[%s433 + $0xd8] sm:$0xff]
        %v677 = vld [vmem:[%s433 + $0xe0] sm:$0xff]
        %v678 = vld [vmem:[%s433 + $0xf0] sm:$0xff]
        %v679 = vld [vmem:[%s433 + $0xf8] sm:$0xff]
        %v680 = vld [vmem:[%s433 + $0x108] sm:$0xff]
        %v681 = vld [vmem:[%s433 + $0x110] sm:$0xff]
        %v682 = vld [vmem:[%s433 + $0x120] sm:$0xff]
        %v683 = vld [vmem:[%s433 + $0x128] sm:$0xff]
        %v684 = vld [vmem:[%s433 + $0x138] sm:$0xff]
        %v685 = vld [vmem:[%s433 + $0x140] sm:$0xff]
        %v686 = vld [vmem:[%s433 + $0x150] sm:$0xff]
        %v687 = vld [vmem:[%s433 + $0x158] sm:$0xff]
        %v688 = vld [vmem:[%s433 + $0x168] sm:$0xff]
        %v689 = vld [vmem:[%s433 + $0x170] sm:$0xff]
        %690 = vst [vmem:[#allocation3 + $0x18] sm:$0xff] %v658
        %691 = vst [vmem:[#allocation3 + $0x60] sm:$0xff] %v659
        %692 = vst [vmem:[#allocation3 + $0xa8] sm:$0xff] %v660
        %693 = vst [vmem:[#allocation3 + $0xf0] sm:$0xff] %v661
        %694 = vst [vmem:[#allocation3 + $0x138] sm:$0xff] %v662
        %695 = vst [vmem:[#allocation3 + $0x180] sm:$0xff] %v663
        %696 = vst [vmem:[#allocation3 + $0x1c8] sm:$0xff] %v664
        %697 = vst [vmem:[#allocation3 + $0x210] sm:$0xff] %v665
        %698 = vst [vmem:[#allocation3 + $0x258] sm:$0xff] %v666
        %699 = vst [vmem:[#allocation3 + $0x2a0] sm:$0xff] %v667
        %700 = vst [vmem:[#allocation3 + $0x2e8] sm:$0xff] %v668
        %701 = vst [vmem:[#allocation3 + $0x330] sm:$0xff] %v669
        %702 = vst [vmem:[#allocation3 + $0x378] sm:$0xff] %v670
        %703 = vst [vmem:[#allocation3 + $0x3c0] sm:$0xff] %v671
        %704 = vst [vmem:[#allocation3 + $0x408] sm:$0xff] %v672
        %705 = vst [vmem:[#allocation3 + $0x450] sm:$0xff] %v673
        %706 = vst [vmem:[#allocation3 + $0x498] sm:$0xff] %v674
        %707 = vst [vmem:[#allocation3 + $0x4e0] sm:$0xff] %v675
        %708 = vst [vmem:[#allocation3 + $0x528] sm:$0xff] %v676
        %709 = vst [vmem:[#allocation3 + $0x570] sm:$0xff] %v677
        %710 = vst [vmem:[#allocation3 + $0x5b8] sm:$0xff] %v678
        %711 = vst [vmem:[#allocation3 + $0x600] sm:$0xff] %v679
        %712 = vst [vmem:[#allocation3 + $0x648] sm:$0xff] %v680
        %713 = vst [vmem:[#allocation3 + $0x690] sm:$0xff] %v681
        %714 = vst [vmem:[#allocation3 + $0x6d8] sm:$0xff] %v682
        %715 = vst [vmem:[#allocation3 + $0x720] sm:$0xff] %v683
        %716 = vst [vmem:[#allocation3 + $0x768] sm:$0xff] %v684
        %717 = vst [vmem:[#allocation3 + $0x7b0] sm:$0xff] %v685
        %718 = vst [vmem:[#allocation3 + $0x7f8] sm:$0xff] %v686
        %719 = vst [vmem:[#allocation3 + $0x840] sm:$0xff] %v687
        %720 = vst [vmem:[#allocation3 + $0x888] sm:$0xff] %v688
        %721 = vst [vmem:[#allocation3 + $0x8d0] sm:$0xff] %v689
        %v722 = vld [vmem:[%s433 + $0x1] sm:$0xff]
        %v723 = vld [vmem:[%s433 + $0x9] sm:$0xff]
        %v724 = vld [vmem:[%s433 + $0x19] sm:$0xff]
        %v725 = vld [vmem:[%s433 + $0x21] sm:$0xff]
        %v726 = vld [vmem:[%s433 + $0x31] sm:$0xff]
        %v727 = vld [vmem:[%s433 + $0x39] sm:$0xff]
        %v728 = vld [vmem:[%s433 + $0x49] sm:$0xff]
        %v729 = vld [vmem:[%s433 + $0x51] sm:$0xff]
        %v730 = vld [vmem:[%s433 + $0x61] sm:$0xff]
        %v731 = vld [vmem:[%s433 + $0x69] sm:$0xff]
        %v732 = vld [vmem:[%s433 + $0x79] sm:$0xff]
        %v733 = vld [vmem:[%s433 + $0x81] sm:$0xff]
        %v734 = vld [vmem:[%s433 + $0x91] sm:$0xff]
        %v735 = vld [vmem:[%s433 + $0x99] sm:$0xff]
        %v736 = vld [vmem:[%s433 + $0xa9] sm:$0xff]
        %v737 = vld [vmem:[%s433 + $0xb1] sm:$0xff]
        %v738 = vld [vmem:[%s433 + $0xc1] sm:$0xff]
        %v739 = vld [vmem:[%s433 + $0xc9] sm:$0xff]
        %v740 = vld [vmem:[%s433 + $0xd9] sm:$0xff]
        %v741 = vld [vmem:[%s433 + $0xe1] sm:$0xff]
        %v742 = vld [vmem:[%s433 + $0xf1] sm:$0xff]
        %v743 = vld [vmem:[%s433 + $0xf9] sm:$0xff]
        %v744 = vld [vmem:[%s433 + $0x109] sm:$0xff]
        %v745 = vld [vmem:[%s433 + $0x111] sm:$0xff]
        %v746 = vld [vmem:[%s433 + $0x121] sm:$0xff]
        %v747 = vld [vmem:[%s433 + $0x129] sm:$0xff]
        %v748 = vld [vmem:[%s433 + $0x139] sm:$0xff]
        %v749 = vld [vmem:[%s433 + $0x141] sm:$0xff]
        %v750 = vld [vmem:[%s433 + $0x151] sm:$0xff]
        %v751 = vld [vmem:[%s433 + $0x159] sm:$0xff]
        %v752 = vld [vmem:[%s433 + $0x169] sm:$0xff]
        %v753 = vld [vmem:[%s433 + $0x171] sm:$0xff]
        %754 = vst [vmem:[#allocation3 + $0x20] sm:$0xff] %v722
        %755 = vst [vmem:[#allocation3 + $0x68] sm:$0xff] %v723
        %756 = vst [vmem:[#allocation3 + $0xb0] sm:$0xff] %v724
        %757 = vst [vmem:[#allocation3 + $0xf8] sm:$0xff] %v725
        %758 = vst [vmem:[#allocation3 + $0x140] sm:$0xff] %v726
        %759 = vst [vmem:[#allocation3 + $0x188] sm:$0xff] %v727
        %760 = vst [vmem:[#allocation3 + $0x1d0] sm:$0xff] %v728
        %761 = vst [vmem:[#allocation3 + $0x218] sm:$0xff] %v729
        %762 = vst [vmem:[#allocation3 + $0x260] sm:$0xff] %v730
        %763 = vst [vmem:[#allocation3 + $0x2a8] sm:$0xff] %v731
        %764 = vst [vmem:[#allocation3 + $0x2f0] sm:$0xff] %v732
        %765 = vst [vmem:[#allocation3 + $0x338] sm:$0xff] %v733
        %766 = vst [vmem:[#allocation3 + $0x380] sm:$0xff] %v734
        %767 = vst [vmem:[#allocation3 + $0x3c8] sm:$0xff] %v735
        %768 = vst [vmem:[#allocation3 + $0x410] sm:$0xff] %v736
        %769 = vst [vmem:[#allocation3 + $0x458] sm:$0xff] %v737
        %770 = vst [vmem:[#allocation3 + $0x4a0] sm:$0xff] %v738
        %771 = vst [vmem:[#allocation3 + $0x4e8] sm:$0xff] %v739
        %772 = vst [vmem:[#allocation3 + $0x530] sm:$0xff] %v740
        %773 = vst [vmem:[#allocation3 + $0x578] sm:$0xff] %v741
        %774 = vst [vmem:[#allocation3 + $0x5c0] sm:$0xff] %v742
        %775 = vst [vmem:[#allocation3 + $0x608] sm:$0xff] %v743
        %776 = vst [vmem:[#allocation3 + $0x650] sm:$0xff] %v744
        %777 = vst [vmem:[#allocation3 + $0x698] sm:$0xff] %v745
        %778 = vst [vmem:[#allocation3 + $0x6e0] sm:$0xff] %v746
        %779 = vst [vmem:[#allocation3 + $0x728] sm:$0xff] %v747
        %780 = vst [vmem:[#allocation3 + $0x770] sm:$0xff] %v748
        %781 = vst [vmem:[#allocation3 + $0x7b8] sm:$0xff] %v749
        %782 = vst [vmem:[#allocation3 + $0x800] sm:$0xff] %v750
        %783 = vst [vmem:[#allocation3 + $0x848] sm:$0xff] %v751
        %784 = vst [vmem:[#allocation3 + $0x890] sm:$0xff] %v752
        %785 = vst [vmem:[#allocation3 + $0x8d8] sm:$0xff] %v753
        %v786 = vld [vmem:[%s433 + $0x2] sm:$0xff]
        %v787 = vld [vmem:[%s433 + $0xa] sm:$0xff]
        %v788 = vld [vmem:[%s433 + $0x1a] sm:$0xff]
        %v789 = vld [vmem:[%s433 + $0x22] sm:$0xff]
        %v790 = vld [vmem:[%s433 + $0x32] sm:$0xff]
        %v791 = vld [vmem:[%s433 + $0x3a] sm:$0xff]
        %v792 = vld [vmem:[%s433 + $0x4a] sm:$0xff]
        %v793 = vld [vmem:[%s433 + $0x52] sm:$0xff]
        %v794 = vld [vmem:[%s433 + $0x62] sm:$0xff]
        %v795 = vld [vmem:[%s433 + $0x6a] sm:$0xff]
        %v796 = vld [vmem:[%s433 + $0x7a] sm:$0xff]
        %v797 = vld [vmem:[%s433 + $0x82] sm:$0xff]
        %v798 = vld [vmem:[%s433 + $0x92] sm:$0xff]
        %v799 = vld [vmem:[%s433 + $0x9a] sm:$0xff]
        %v800 = vld [vmem:[%s433 + $0xaa] sm:$0xff]
        %v801 = vld [vmem:[%s433 + $0xb2] sm:$0xff]
        %v802 = vld [vmem:[%s433 + $0xc2] sm:$0xff]
        %v803 = vld [vmem:[%s433 + $0xca] sm:$0xff]
        %v804 = vld [vmem:[%s433 + $0xda] sm:$0xff]
        %v805 = vld [vmem:[%s433 + $0xe2] sm:$0xff]
        %v806 = vld [vmem:[%s433 + $0xf2] sm:$0xff]
        %v807 = vld [vmem:[%s433 + $0xfa] sm:$0xff]
        %v808 = vld [vmem:[%s433 + $0x10a] sm:$0xff]
        %v809 = vld [vmem:[%s433 + $0x112] sm:$0xff]
        %v810 = vld [vmem:[%s433 + $0x122] sm:$0xff]
        %v811 = vld [vmem:[%s433 + $0x12a] sm:$0xff]
        %v812 = vld [vmem:[%s433 + $0x13a] sm:$0xff]
        %v813 = vld [vmem:[%s433 + $0x142] sm:$0xff]
        %v814 = vld [vmem:[%s433 + $0x152] sm:$0xff]
        %v815 = vld [vmem:[%s433 + $0x15a] sm:$0xff]
        %v816 = vld [vmem:[%s433 + $0x16a] sm:$0xff]
        %v817 = vld [vmem:[%s433 + $0x172] sm:$0xff]
        %818 = vst [vmem:[#allocation3 + $0x28] sm:$0xff] %v786
        %819 = vst [vmem:[#allocation3 + $0x70] sm:$0xff] %v787
        %820 = vst [vmem:[#allocation3 + $0xb8] sm:$0xff] %v788
        %821 = vst [vmem:[#allocation3 + $0x100] sm:$0xff] %v789
        %822 = vst [vmem:[#allocation3 + $0x148] sm:$0xff] %v790
        %823 = vst [vmem:[#allocation3 + $0x190] sm:$0xff] %v791
        %824 = vst [vmem:[#allocation3 + $0x1d8] sm:$0xff] %v792
        %825 = vst [vmem:[#allocation3 + $0x220] sm:$0xff] %v793
        %826 = vst [vmem:[#allocation3 + $0x268] sm:$0xff] %v794
        %827 = vst [vmem:[#allocation3 + $0x2b0] sm:$0xff] %v795
        %828 = vst [vmem:[#allocation3 + $0x2f8] sm:$0xff] %v796
        %829 = vst [vmem:[#allocation3 + $0x340] sm:$0xff] %v797
        %830 = vst [vmem:[#allocation3 + $0x388] sm:$0xff] %v798
        %831 = vst [vmem:[#allocation3 + $0x3d0] sm:$0xff] %v799
        %832 = vst [vmem:[#allocation3 + $0x418] sm:$0xff] %v800
        %833 = vst [vmem:[#allocation3 + $0x460] sm:$0xff] %v801
        %834 = vst [vmem:[#allocation3 + $0x4a8] sm:$0xff] %v802
        %835 = vst [vmem:[#allocation3 + $0x4f0] sm:$0xff] %v803
        %836 = vst [vmem:[#allocation3 + $0x538] sm:$0xff] %v804
        %837 = vst [vmem:[#allocation3 + $0x580] sm:$0xff] %v805
        %838 = vst [vmem:[#allocation3 + $0x5c8] sm:$0xff] %v806
        %839 = vst [vmem:[#allocation3 + $0x610] sm:$0xff] %v807
        %840 = vst [vmem:[#allocation3 + $0x658] sm:$0xff] %v808
        %841 = vst [vmem:[#allocation3 + $0x6a0] sm:$0xff] %v809
        %842 = vst [vmem:[#allocation3 + $0x6e8] sm:$0xff] %v810
        %843 = vst [vmem:[#allocation3 + $0x730] sm:$0xff] %v811
        %844 = vst [vmem:[#allocation3 + $0x778] sm:$0xff] %v812
        %845 = vst [vmem:[#allocation3 + $0x7c0] sm:$0xff] %v813
        %846 = vst [vmem:[#allocation3 + $0x808] sm:$0xff] %v814
        %847 = vst [vmem:[#allocation3 + $0x850] sm:$0xff] %v815
        %848 = vst [vmem:[#allocation3 + $0x898] sm:$0xff] %v816
        %849 = vst [vmem:[#allocation3 + $0x8e0] sm:$0xff] %v817
        %s850 = scalar_lea.vmem [#allocation2], 48
        %v851 = vld [vmem:[%s850] sm:$0xff]
        %v852 = vld [vmem:[%s850 + $0x8] sm:$0xff]
        %v853 = vld [vmem:[%s850 + $0x18] sm:$0xff]
        %v854 = vld [vmem:[%s850 + $0x20] sm:$0xff]
        %v855 = vld [vmem:[%s850 + $0x30] sm:$0xff]
        %v856 = vld [vmem:[%s850 + $0x38] sm:$0xff]
        %v857 = vld [vmem:[%s850 + $0x48] sm:$0xff]
        %v858 = vld [vmem:[%s850 + $0x50] sm:$0xff]
        %v859 = vld [vmem:[%s850 + $0x60] sm:$0xff]
        %v860 = vld [vmem:[%s850 + $0x68] sm:$0xff]
        %v861 = vld [vmem:[%s850 + $0x78] sm:$0xff]
        %v862 = vld [vmem:[%s850 + $0x80] sm:$0xff]
        %v863 = vld [vmem:[%s850 + $0x90] sm:$0xff]
        %v864 = vld [vmem:[%s850 + $0x98] sm:$0xff]
        %v865 = vld [vmem:[%s850 + $0xa8] sm:$0xff]
        %v866 = vld [vmem:[%s850 + $0xb0] sm:$0xff]
        %v867 = vld [vmem:[%s850 + $0xc0] sm:$0xff]
        %v868 = vld [vmem:[%s850 + $0xc8] sm:$0xff]
        %v869 = vld [vmem:[%s850 + $0xd8] sm:$0xff]
        %v870 = vld [vmem:[%s850 + $0xe0] sm:$0xff]
        %v871 = vld [vmem:[%s850 + $0xf0] sm:$0xff]
        %v872 = vld [vmem:[%s850 + $0xf8] sm:$0xff]
        %v873 = vld [vmem:[%s850 + $0x108] sm:$0xff]
        %v874 = vld [vmem:[%s850 + $0x110] sm:$0xff]
        %v875 = vld [vmem:[%s850 + $0x120] sm:$0xff]
        %v876 = vld [vmem:[%s850 + $0x128] sm:$0xff]
        %v877 = vld [vmem:[%s850 + $0x138] sm:$0xff]
        %v878 = vld [vmem:[%s850 + $0x140] sm:$0xff]
        %v879 = vld [vmem:[%s850 + $0x150] sm:$0xff]
        %v880 = vld [vmem:[%s850 + $0x158] sm:$0xff]
        %v881 = vld [vmem:[%s850 + $0x168] sm:$0xff]
        %v882 = vld [vmem:[%s850 + $0x170] sm:$0xff]
        %883 = vst [vmem:[#allocation3 + $0x30] sm:$0xff] %v851
        %884 = vst [vmem:[#allocation3 + $0x78] sm:$0xff] %v852
        %885 = vst [vmem:[#allocation3 + $0xc0] sm:$0xff] %v853
        %886 = vst [vmem:[#allocation3 + $0x108] sm:$0xff] %v854
        %887 = vst [vmem:[#allocation3 + $0x150] sm:$0xff] %v855
        %888 = vst [vmem:[#allocation3 + $0x198] sm:$0xff] %v856
        %889 = vst [vmem:[#allocation3 + $0x1e0] sm:$0xff] %v857
        %890 = vst [vmem:[#allocation3 + $0x228] sm:$0xff] %v858
        %891 = vst [vmem:[#allocation3 + $0x270] sm:$0xff] %v859
        %892 = vst [vmem:[#allocation3 + $0x2b8] sm:$0xff] %v860
        %893 = vst [vmem:[#allocation3 + $0x300] sm:$0xff] %v861
        %894 = vst [vmem:[#allocation3 + $0x348] sm:$0xff] %v862
        %895 = vst [vmem:[#allocation3 + $0x390] sm:$0xff] %v863
        %896 = vst [vmem:[#allocation3 + $0x3d8] sm:$0xff] %v864
        %897 = vst [vmem:[#allocation3 + $0x420] sm:$0xff] %v865
        %898 = vst [vmem:[#allocation3 + $0x468] sm:$0xff] %v866
        %899 = vst [vmem:[#allocation3 + $0x4b0] sm:$0xff] %v867
        %900 = vst [vmem:[#allocation3 + $0x4f8] sm:$0xff] %v868
        %901 = vst [vmem:[#allocation3 + $0x540] sm:$0xff] %v869
        %902 = vst [vmem:[#allocation3 + $0x588] sm:$0xff] %v870
        %903 = vst [vmem:[#allocation3 + $0x5d0] sm:$0xff] %v871
        %904 = vst [vmem:[#allocation3 + $0x618] sm:$0xff] %v872
        %905 = vst [vmem:[#allocation3 + $0x660] sm:$0xff] %v873
        %906 = vst [vmem:[#allocation3 + $0x6a8] sm:$0xff] %v874
        %907 = vst [vmem:[#allocation3 + $0x6f0] sm:$0xff] %v875
        %908 = vst [vmem:[#allocation3 + $0x738] sm:$0xff] %v876
        %909 = vst [vmem:[#allocation3 + $0x780] sm:$0xff] %v877
        %910 = vst [vmem:[#allocation3 + $0x7c8] sm:$0xff] %v878
        %911 = vst [vmem:[#allocation3 + $0x810] sm:$0xff] %v879
        %912 = vst [vmem:[#allocation3 + $0x858] sm:$0xff] %v880
        %913 = vst [vmem:[#allocation3 + $0x8a0] sm:$0xff] %v881
        %914 = vst [vmem:[#allocation3 + $0x8e8] sm:$0xff] %v882
        %v915 = vld [vmem:[%s850 + $0x1] sm:$0xff]
        %v916 = vld [vmem:[%s850 + $0x9] sm:$0xff]
        %v917 = vld [vmem:[%s850 + $0x19] sm:$0xff]
        %v918 = vld [vmem:[%s850 + $0x21] sm:$0xff]
        %v919 = vld [vmem:[%s850 + $0x31] sm:$0xff]
        %v920 = vld [vmem:[%s850 + $0x39] sm:$0xff]
        %v921 = vld [vmem:[%s850 + $0x49] sm:$0xff]
        %v922 = vld [vmem:[%s850 + $0x51] sm:$0xff]
        %v923 = vld [vmem:[%s850 + $0x61] sm:$0xff]
        %v924 = vld [vmem:[%s850 + $0x69] sm:$0xff]
        %v925 = vld [vmem:[%s850 + $0x79] sm:$0xff]
        %v926 = vld [vmem:[%s850 + $0x81] sm:$0xff]
        %v927 = vld [vmem:[%s850 + $0x91] sm:$0xff]
        %v928 = vld [vmem:[%s850 + $0x99] sm:$0xff]
        %v929 = vld [vmem:[%s850 + $0xa9] sm:$0xff]
        %v930 = vld [vmem:[%s850 + $0xb1] sm:$0xff]
        %v931 = vld [vmem:[%s850 + $0xc1] sm:$0xff]
        %v932 = vld [vmem:[%s850 + $0xc9] sm:$0xff]
        %v933 = vld [vmem:[%s850 + $0xd9] sm:$0xff]
        %v934 = vld [vmem:[%s850 + $0xe1] sm:$0xff]
        %v935 = vld [vmem:[%s850 + $0xf1] sm:$0xff]
        %v936 = vld [vmem:[%s850 + $0xf9] sm:$0xff]
        %v937 = vld [vmem:[%s850 + $0x109] sm:$0xff]
        %v938 = vld [vmem:[%s850 + $0x111] sm:$0xff]
        %v939 = vld [vmem:[%s850 + $0x121] sm:$0xff]
        %v940 = vld [vmem:[%s850 + $0x129] sm:$0xff]
        %v941 = vld [vmem:[%s850 + $0x139] sm:$0xff]
        %v942 = vld [vmem:[%s850 + $0x141] sm:$0xff]
        %v943 = vld [vmem:[%s850 + $0x151] sm:$0xff]
        %v944 = vld [vmem:[%s850 + $0x159] sm:$0xff]
        %v945 = vld [vmem:[%s850 + $0x169] sm:$0xff]
        %v946 = vld [vmem:[%s850 + $0x171] sm:$0xff]
        %947 = vst [vmem:[#allocation3 + $0x38] sm:$0xff] %v915
        %948 = vst [vmem:[#allocation3 + $0x80] sm:$0xff] %v916
        %949 = vst [vmem:[#allocation3 + $0xc8] sm:$0xff] %v917
        %950 = vst [vmem:[#allocation3 + $0x110] sm:$0xff] %v918
        %951 = vst [vmem:[#allocation3 + $0x158] sm:$0xff] %v919
        %952 = vst [vmem:[#allocation3 + $0x1a0] sm:$0xff] %v920
        %953 = vst [vmem:[#allocation3 + $0x1e8] sm:$0xff] %v921
        %954 = vst [vmem:[#allocation3 + $0x230] sm:$0xff] %v922
        %955 = vst [vmem:[#allocation3 + $0x278] sm:$0xff] %v923
        %956 = vst [vmem:[#allocation3 + $0x2c0] sm:$0xff] %v924
        %957 = vst [vmem:[#allocation3 + $0x308] sm:$0xff] %v925
        %958 = vst [vmem:[#allocation3 + $0x350] sm:$0xff] %v926
        %959 = vst [vmem:[#allocation3 + $0x398] sm:$0xff] %v927
        %960 = vst [vmem:[#allocation3 + $0x3e0] sm:$0xff] %v928
        %961 = vst [vmem:[#allocation3 + $0x428] sm:$0xff] %v929
        %962 = vst [vmem:[#allocation3 + $0x470] sm:$0xff] %v930
        %963 = vst [vmem:[#allocation3 + $0x4b8] sm:$0xff] %v931
        %964 = vst [vmem:[#allocation3 + $0x500] sm:$0xff] %v932
        %965 = vst [vmem:[#allocation3 + $0x548] sm:$0xff] %v933
        %966 = vst [vmem:[#allocation3 + $0x590] sm:$0xff] %v934
        %967 = vst [vmem:[#allocation3 + $0x5d8] sm:$0xff] %v935
        %968 = vst [vmem:[#allocation3 + $0x620] sm:$0xff] %v936
        %969 = vst [vmem:[#allocation3 + $0x668] sm:$0xff] %v937
        %970 = vst [vmem:[#allocation3 + $0x6b0] sm:$0xff] %v938
        %971 = vst [vmem:[#allocation3 + $0x6f8] sm:$0xff] %v939
        %972 = vst [vmem:[#allocation3 + $0x740] sm:$0xff] %v940
        %973 = vst [vmem:[#allocation3 + $0x788] sm:$0xff] %v941
        %974 = vst [vmem:[#allocation3 + $0x7d0] sm:$0xff] %v942
        %975 = vst [vmem:[#allocation3 + $0x818] sm:$0xff] %v943
        %976 = vst [vmem:[#allocation3 + $0x860] sm:$0xff] %v944
        %977 = vst [vmem:[#allocation3 + $0x8a8] sm:$0xff] %v945
        %978 = vst [vmem:[#allocation3 + $0x8f0] sm:$0xff] %v946
        %v979 = vld [vmem:[%s850 + $0x2] sm:$0xff]
        %v980 = vld [vmem:[%s850 + $0xa] sm:$0xff]
        %v981 = vld [vmem:[%s850 + $0x1a] sm:$0xff]
        %v982 = vld [vmem:[%s850 + $0x22] sm:$0xff]
        %v983 = vld [vmem:[%s850 + $0x32] sm:$0xff]
        %v984 = vld [vmem:[%s850 + $0x3a] sm:$0xff]
        %v985 = vld [vmem:[%s850 + $0x4a] sm:$0xff]
        %v986 = vld [vmem:[%s850 + $0x52] sm:$0xff]
        %v987 = vld [vmem:[%s850 + $0x62] sm:$0xff]
        %v988 = vld [vmem:[%s850 + $0x6a] sm:$0xff]
        %v989 = vld [vmem:[%s850 + $0x7a] sm:$0xff]
        %v990 = vld [vmem:[%s850 + $0x82] sm:$0xff]
        %v991 = vld [vmem:[%s850 + $0x92] sm:$0xff]
        %v992 = vld [vmem:[%s850 + $0x9a] sm:$0xff]
        %v993 = vld [vmem:[%s850 + $0xaa] sm:$0xff]
        %v994 = vld [vmem:[%s850 + $0xb2] sm:$0xff]
        %v995 = vld [vmem:[%s850 + $0xc2] sm:$0xff]
        %v996 = vld [vmem:[%s850 + $0xca] sm:$0xff]
        %v997 = vld [vmem:[%s850 + $0xda] sm:$0xff]
        %v998 = vld [vmem:[%s850 + $0xe2] sm:$0xff]
        %v999 = vld [vmem:[%s850 + $0xf2] sm:$0xff]
        %v1000 = vld [vmem:[%s850 + $0xfa] sm:$0xff]
        %v1001 = vld [vmem:[%s850 + $0x10a] sm:$0xff]
        %v1002 = vld [vmem:[%s850 + $0x112] sm:$0xff]
        %v1003 = vld [vmem:[%s850 + $0x122] sm:$0xff]
        %v1004 = vld [vmem:[%s850 + $0x12a] sm:$0xff]
        %v1005 = vld [vmem:[%s850 + $0x13a] sm:$0xff]
        %v1006 = vld [vmem:[%s850 + $0x142] sm:$0xff]
        %v1007 = vld [vmem:[%s850 + $0x152] sm:$0xff]
        %v1008 = vld [vmem:[%s850 + $0x15a] sm:$0xff]
        %v1009 = vld [vmem:[%s850 + $0x16a] sm:$0xff]
        %v1010 = vld [vmem:[%s850 + $0x172] sm:$0xff]
        %1011 = vst [vmem:[#allocation3 + $0x40] sm:$0xff] %v979
        %1012 = vst [vmem:[#allocation3 + $0x88] sm:$0xff] %v980
        %1013 = vst [vmem:[#allocation3 + $0xd0] sm:$0xff] %v981
        %1014 = vst [vmem:[#allocation3 + $0x118] sm:$0xff] %v982
        %1015 = vst [vmem:[#allocation3 + $0x160] sm:$0xff] %v983
        %1016 = vst [vmem:[#allocation3 + $0x1a8] sm:$0xff] %v984
        %1017 = vst [vmem:[#allocation3 + $0x1f0] sm:$0xff] %v985
        %1018 = vst [vmem:[#allocation3 + $0x238] sm:$0xff] %v986
        %1019 = vst [vmem:[#allocation3 + $0x280] sm:$0xff] %v987
        %1020 = vst [vmem:[#allocation3 + $0x2c8] sm:$0xff] %v988
        %1021 = vst [vmem:[#allocation3 + $0x310] sm:$0xff] %v989
        %1022 = vst [vmem:[#allocation3 + $0x358] sm:$0xff] %v990
        %1023 = vst [vmem:[#allocation3 + $0x3a0] sm:$0xff] %v991
        %1024 = vst [vmem:[#allocation3 + $0x3e8] sm:$0xff] %v992
        %1025 = vst [vmem:[#allocation3 + $0x430] sm:$0xff] %v993
        %1026 = vst [vmem:[#allocation3 + $0x478] sm:$0xff] %v994
        %1027 = vst [vmem:[#allocation3 + $0x4c0] sm:$0xff] %v995
        %1028 = vst [vmem:[#allocation3 + $0x508] sm:$0xff] %v996
        %1029 = vst [vmem:[#allocation3 + $0x550] sm:$0xff] %v997
        %1030 = vst [vmem:[#allocation3 + $0x598] sm:$0xff] %v998
        %1031 = vst [vmem:[#allocation3 + $0x5e0] sm:$0xff] %v999
        %1032 = vst [vmem:[#allocation3 + $0x628] sm:$0xff] %v1000
        %1033 = vst [vmem:[#allocation3 + $0x670] sm:$0xff] %v1001
        %1034 = vst [vmem:[#allocation3 + $0x6b8] sm:$0xff] %v1002
        %1035 = vst [vmem:[#allocation3 + $0x700] sm:$0xff] %v1003
        %1036 = vst [vmem:[#allocation3 + $0x748] sm:$0xff] %v1004
        %1037 = vst [vmem:[#allocation3 + $0x790] sm:$0xff] %v1005
        %1038 = vst [vmem:[#allocation3 + $0x7d8] sm:$0xff] %v1006
        %1039 = vst [vmem:[#allocation3 + $0x820] sm:$0xff] %v1007
        %1040 = vst [vmem:[#allocation3 + $0x868] sm:$0xff] %v1008
        %1041 = vst [vmem:[#allocation3 + $0x8b0] sm:$0xff] %v1009
        %1042 = vst [vmem:[#allocation3 + $0x8f8] sm:$0xff] %v1010
        %v1043 = vld [vmem:[#allocation3] sm:$0xff]
        %v1044 = vld [vmem:[#allocation3 + $0x8] sm:$0xff]
        %v1045 = vld [vmem:[#allocation3 + $0x10] sm:$0xff]
        %v1046 = vld [vmem:[#allocation3 + $0x18] sm:$0xff]
        %v1047 = vld [vmem:[#allocation3 + $0x20] sm:$0xff]
        %v1048 = vld [vmem:[#allocation3 + $0x28] sm:$0xff]
        %v1049 = vld [vmem:[#allocation3 + $0x30] sm:$0xff]
        %v1050 = vld [vmem:[#allocation3 + $0x38] sm:$0xff]
        %v1051 = vld [vmem:[#allocation3 + $0x40] sm:$0xff]
        %v1052 = vld [vmem:[#allocation3 + $0x48] sm:$0xff]
        %v1053 = vld [vmem:[#allocation3 + $0x50] sm:$0xff]
        %v1054 = vld [vmem:[#allocation3 + $0x58] sm:$0xff]
        %v1055 = vld [vmem:[#allocation3 + $0x60] sm:$0xff]
        %v1056 = vld [vmem:[#allocation3 + $0x68] sm:$0xff]
        %v1057 = vld [vmem:[#allocation3 + $0x70] sm:$0xff]
        %v1058 = vld [vmem:[#allocation3 + $0x78] sm:$0xff]
        %v1059 = vld [vmem:[#allocation3 + $0x80] sm:$0xff]
        %v1060 = vld [vmem:[#allocation3 + $0x88] sm:$0xff]
        %v1061 = vld [vmem:[#allocation3 + $0x90] sm:$0xff]
        %v1062 = vld [vmem:[#allocation3 + $0x98] sm:$0xff]
        %v1063 = vld [vmem:[#allocation3 + $0xa0] sm:$0xff]
        %v1064 = vld [vmem:[#allocation3 + $0xa8] sm:$0xff]
        %v1065 = vld [vmem:[#allocation3 + $0xb0] sm:$0xff]
        %v1066 = vld [vmem:[#allocation3 + $0xb8] sm:$0xff]
        %v1067 = vld [vmem:[#allocation3 + $0xc0] sm:$0xff]
        %v1068 = vld [vmem:[#allocation3 + $0xc8] sm:$0xff]
        %v1069 = vld [vmem:[#allocation3 + $0xd0] sm:$0xff]
        %v1070 = vld [vmem:[#allocation3 + $0xd8] sm:$0xff]
        %v1071 = vld [vmem:[#allocation3 + $0xe0] sm:$0xff]
        %v1072 = vld [vmem:[#allocation3 + $0xe8] sm:$0xff]
        %v1073 = vld [vmem:[#allocation3 + $0xf0] sm:$0xff]
        %v1074 = vld [vmem:[#allocation3 + $0xf8] sm:$0xff]
        %v1075 = vld [vmem:[#allocation3 + $0x100] sm:$0xff]
        %v1076 = vld [vmem:[#allocation3 + $0x108] sm:$0xff]
        %v1077 = vld [vmem:[#allocation3 + $0x110] sm:$0xff]
        %v1078 = vld [vmem:[#allocation3 + $0x118] sm:$0xff]
        %v1079 = vld [vmem:[#allocation3 + $0x120] sm:$0xff]
        %v1080 = vld [vmem:[#allocation3 + $0x128] sm:$0xff]
        %v1081 = vld [vmem:[#allocation3 + $0x130] sm:$0xff]
        %v1082 = vld [vmem:[#allocation3 + $0x138] sm:$0xff]
        %v1083 = vld [vmem:[#allocation3 + $0x140] sm:$0xff]
        %v1084 = vld [vmem:[#allocation3 + $0x148] sm:$0xff]
        %v1085 = vld [vmem:[#allocation3 + $0x150] sm:$0xff]
        %v1086 = vld [vmem:[#allocation3 + $0x158] sm:$0xff]
        %v1087 = vld [vmem:[#allocation3 + $0x160] sm:$0xff]
        %v1088 = vld [vmem:[#allocation3 + $0x168] sm:$0xff]
        %v1089 = vld [vmem:[#allocation3 + $0x170] sm:$0xff]
        %v1090 = vld [vmem:[#allocation3 + $0x178] sm:$0xff]
        %v1091 = vld [vmem:[#allocation3 + $0x180] sm:$0xff]
        %v1092 = vld [vmem:[#allocation3 + $0x188] sm:$0xff]
        %v1093 = vld [vmem:[#allocation3 + $0x190] sm:$0xff]
        %v1094 = vld [vmem:[#allocation3 + $0x198] sm:$0xff]
        %v1095 = vld [vmem:[#allocation3 + $0x1a0] sm:$0xff]
        %v1096 = vld [vmem:[#allocation3 + $0x1a8] sm:$0xff]
        %v1097 = vld [vmem:[#allocation3 + $0x1b0] sm:$0xff]
        %v1098 = vld [vmem:[#allocation3 + $0x1b8] sm:$0xff]
        %v1099 = vld [vmem:[#allocation3 + $0x1c0] sm:$0xff]
        %v1100 = vld [vmem:[#allocation3 + $0x1c8] sm:$0xff]
        %v1101 = vld [vmem:[#allocation3 + $0x1d0] sm:$0xff]
        %v1102 = vld [vmem:[#allocation3 + $0x1d8] sm:$0xff]
        %v1103 = vld [vmem:[#allocation3 + $0x1e0] sm:$0xff]
        %v1104 = vld [vmem:[#allocation3 + $0x1e8] sm:$0xff]
        %v1105 = vld [vmem:[#allocation3 + $0x1f0] sm:$0xff]
        %v1106 = vld [vmem:[#allocation3 + $0x1f8] sm:$0xff]
        %v1107 = vld [vmem:[#allocation3 + $0x200] sm:$0xff]
        %v1108 = vld [vmem:[#allocation3 + $0x208] sm:$0xff]
        %v1109 = vld [vmem:[#allocation3 + $0x210] sm:$0xff]
        %v1110 = vld [vmem:[#allocation3 + $0x218] sm:$0xff]
        %v1111 = vld [vmem:[#allocation3 + $0x220] sm:$0xff]
        %v1112 = vld [vmem:[#allocation3 + $0x228] sm:$0xff]
        %v1113 = vld [vmem:[#allocation3 + $0x230] sm:$0xff]
        %v1114 = vld [vmem:[#allocation3 + $0x238] sm:$0xff]
        %v1115 = vld [vmem:[#allocation3 + $0x240] sm:$0xff]
        %v1116 = vld [vmem:[#allocation3 + $0x248] sm:$0xff]
        %v1117 = vld [vmem:[#allocation3 + $0x250] sm:$0xff]
        %v1118 = vld [vmem:[#allocation3 + $0x258] sm:$0xff]
        %v1119 = vld [vmem:[#allocation3 + $0x260] sm:$0xff]
        %v1120 = vld [vmem:[#allocation3 + $0x268] sm:$0xff]
        %v1121 = vld [vmem:[#allocation3 + $0x270] sm:$0xff]
        %v1122 = vld [vmem:[#allocation3 + $0x278] sm:$0xff]
        %v1123 = vld [vmem:[#allocation3 + $0x280] sm:$0xff]
        %v1124 = vld [vmem:[#allocation3 + $0x288] sm:$0xff]
        %v1125 = vld [vmem:[#allocation3 + $0x290] sm:$0xff]
        %v1126 = vld [vmem:[#allocation3 + $0x298] sm:$0xff]
        %v1127 = vld [vmem:[#allocation3 + $0x2a0] sm:$0xff]
        %v1128 = vld [vmem:[#allocation3 + $0x2a8] sm:$0xff]
        %v1129 = vld [vmem:[#allocation3 + $0x2b0] sm:$0xff]
        %v1130 = vld [vmem:[#allocation3 + $0x2b8] sm:$0xff]
        %v1131 = vld [vmem:[#allocation3 + $0x2c0] sm:$0xff]
        %v1132 = vld [vmem:[#allocation3 + $0x2c8] sm:$0xff]
        %v1133 = vld [vmem:[#allocation3 + $0x2d0] sm:$0xff]
        %v1134 = vld [vmem:[#allocation3 + $0x2d8] sm:$0xff]
        %v1135 = vld [vmem:[#allocation3 + $0x2e0] sm:$0xff]
        %v1136 = vld [vmem:[#allocation3 + $0x2e8] sm:$0xff]
        %v1137 = vld [vmem:[#allocation3 + $0x2f0] sm:$0xff]
        %v1138 = vld [vmem:[#allocation3 + $0x2f8] sm:$0xff]
        %v1139 = vld [vmem:[#allocation3 + $0x300] sm:$0xff]
        %v1140 = vld [vmem:[#allocation3 + $0x308] sm:$0xff]
        %v1141 = vld [vmem:[#allocation3 + $0x310] sm:$0xff]
        %v1142 = vld [vmem:[#allocation3 + $0x318] sm:$0xff]
        %v1143 = vld [vmem:[#allocation3 + $0x320] sm:$0xff]
        %v1144 = vld [vmem:[#allocation3 + $0x328] sm:$0xff]
        %v1145 = vld [vmem:[#allocation3 + $0x330] sm:$0xff]
        %v1146 = vld [vmem:[#allocation3 + $0x338] sm:$0xff]
        %v1147 = vld [vmem:[#allocation3 + $0x340] sm:$0xff]
        %v1148 = vld [vmem:[#allocation3 + $0x348] sm:$0xff]
        %v1149 = vld [vmem:[#allocation3 + $0x350] sm:$0xff]
        %v1150 = vld [vmem:[#allocation3 + $0x358] sm:$0xff]
        %v1151 = vld [vmem:[#allocation3 + $0x360] sm:$0xff]
        %v1152 = vld [vmem:[#allocation3 + $0x368] sm:$0xff]
        %v1153 = vld [vmem:[#allocation3 + $0x370] sm:$0xff]
        %v1154 = vld [vmem:[#allocation3 + $0x378] sm:$0xff]
        %v1155 = vld [vmem:[#allocation3 + $0x380] sm:$0xff]
        %v1156 = vld [vmem:[#allocation3 + $0x388] sm:$0xff]
        %v1157 = vld [vmem:[#allocation3 + $0x390] sm:$0xff]
        %v1158 = vld [vmem:[#allocation3 + $0x398] sm:$0xff]
        %v1159 = vld [vmem:[#allocation3 + $0x3a0] sm:$0xff]
        %v1160 = vld [vmem:[#allocation3 + $0x3a8] sm:$0xff]
        %v1161 = vld [vmem:[#allocation3 + $0x3b0] sm:$0xff]
        %v1162 = vld [vmem:[#allocation3 + $0x3b8] sm:$0xff]
        %v1163 = vld [vmem:[#allocation3 + $0x3c0] sm:$0xff]
        %v1164 = vld [vmem:[#allocation3 + $0x3c8] sm:$0xff]
        %v1165 = vld [vmem:[#allocation3 + $0x3d0] sm:$0xff]
        %v1166 = vld [vmem:[#allocation3 + $0x3d8] sm:$0xff]
        %v1167 = vld [vmem:[#allocation3 + $0x3e0] sm:$0xff]
        %v1168 = vld [vmem:[#allocation3 + $0x3e8] sm:$0xff]
        %v1169 = vld [vmem:[#allocation3 + $0x3f0] sm:$0xff]
        %v1170 = vld [vmem:[#allocation3 + $0x3f8] sm:$0xff]
        %v1171 = vld [vmem:[#allocation3 + $0x400] sm:$0xff]
        %v1172 = vld [vmem:[#allocation3 + $0x408] sm:$0xff]
        %v1173 = vld [vmem:[#allocation3 + $0x410] sm:$0xff]
        %v1174 = vld [vmem:[#allocation3 + $0x418] sm:$0xff]
        %v1175 = vld [vmem:[#allocation3 + $0x420] sm:$0xff]
        %v1176 = vld [vmem:[#allocation3 + $0x428] sm:$0xff]
        %v1177 = vld [vmem:[#allocation3 + $0x430] sm:$0xff]
        %v1178 = vld [vmem:[#allocation3 + $0x438] sm:$0xff]
        %v1179 = vld [vmem:[#allocation3 + $0x440] sm:$0xff]
        %v1180 = vld [vmem:[#allocation3 + $0x448] sm:$0xff]
        %v1181 = vld [vmem:[#allocation3 + $0x450] sm:$0xff]
        %v1182 = vld [vmem:[#allocation3 + $0x458] sm:$0xff]
        %v1183 = vld [vmem:[#allocation3 + $0x460] sm:$0xff]
        %v1184 = vld [vmem:[#allocation3 + $0x468] sm:$0xff]
        %v1185 = vld [vmem:[#allocation3 + $0x470] sm:$0xff]
        %v1186 = vld [vmem:[#allocation3 + $0x478] sm:$0xff]
        %v1187 = vld [vmem:[#allocation3 + $0x480] sm:$0xff]
        %v1188 = vld [vmem:[#allocation3 + $0x488] sm:$0xff]
        %v1189 = vld [vmem:[#allocation3 + $0x490] sm:$0xff]
        %v1190 = vld [vmem:[#allocation3 + $0x498] sm:$0xff]
        %v1191 = vld [vmem:[#allocation3 + $0x4a0] sm:$0xff]
        %v1192 = vld [vmem:[#allocation3 + $0x4a8] sm:$0xff]
        %v1193 = vld [vmem:[#allocation3 + $0x4b0] sm:$0xff]
        %v1194 = vld [vmem:[#allocation3 + $0x4b8] sm:$0xff]
        %v1195 = vld [vmem:[#allocation3 + $0x4c0] sm:$0xff]
        %v1196 = vld [vmem:[#allocation3 + $0x4c8] sm:$0xff]
        %v1197 = vld [vmem:[#allocation3 + $0x4d0] sm:$0xff]
        %v1198 = vld [vmem:[#allocation3 + $0x4d8] sm:$0xff]
        %v1199 = vld [vmem:[#allocation3 + $0x4e0] sm:$0xff]
        %v1200 = vld [vmem:[#allocation3 + $0x4e8] sm:$0xff]
        %v1201 = vld [vmem:[#allocation3 + $0x4f0] sm:$0xff]
        %v1202 = vld [vmem:[#allocation3 + $0x4f8] sm:$0xff]
        %v1203 = vld [vmem:[#allocation3 + $0x500] sm:$0xff]
        %v1204 = vld [vmem:[#allocation3 + $0x508] sm:$0xff]
        %v1205 = vld [vmem:[#allocation3 + $0x510] sm:$0xff]
        %v1206 = vld [vmem:[#allocation3 + $0x518] sm:$0xff]
        %v1207 = vld [vmem:[#allocation3 + $0x520] sm:$0xff]
        %v1208 = vld [vmem:[#allocation3 + $0x528] sm:$0xff]
        %v1209 = vld [vmem:[#allocation3 + $0x530] sm:$0xff]
        %v1210 = vld [vmem:[#allocation3 + $0x538] sm:$0xff]
        %v1211 = vld [vmem:[#allocation3 + $0x540] sm:$0xff]
        %v1212 = vld [vmem:[#allocation3 + $0x548] sm:$0xff]
        %v1213 = vld [vmem:[#allocation3 + $0x550] sm:$0xff]
        %v1214 = vld [vmem:[#allocation3 + $0x558] sm:$0xff]
        %v1215 = vld [vmem:[#allocation3 + $0x560] sm:$0xff]
        %v1216 = vld [vmem:[#allocation3 + $0x568] sm:$0xff]
        %v1217 = vld [vmem:[#allocation3 + $0x570] sm:$0xff]
        %v1218 = vld [vmem:[#allocation3 + $0x578] sm:$0xff]
        %v1219 = vld [vmem:[#allocation3 + $0x580] sm:$0xff]
        %v1220 = vld [vmem:[#allocation3 + $0x588] sm:$0xff]
        %v1221 = vld [vmem:[#allocation3 + $0x590] sm:$0xff]
        %v1222 = vld [vmem:[#allocation3 + $0x598] sm:$0xff]
        %v1223 = vld [vmem:[#allocation3 + $0x5a0] sm:$0xff]
        %v1224 = vld [vmem:[#allocation3 + $0x5a8] sm:$0xff]
        %v1225 = vld [vmem:[#allocation3 + $0x5b0] sm:$0xff]
        %v1226 = vld [vmem:[#allocation3 + $0x5b8] sm:$0xff]
        %v1227 = vld [vmem:[#allocation3 + $0x5c0] sm:$0xff]
        %v1228 = vld [vmem:[#allocation3 + $0x5c8] sm:$0xff]
        %v1229 = vld [vmem:[#allocation3 + $0x5d0] sm:$0xff]
        %v1230 = vld [vmem:[#allocation3 + $0x5d8] sm:$0xff]
        %v1231 = vld [vmem:[#allocation3 + $0x5e0] sm:$0xff]
        %v1232 = vld [vmem:[#allocation3 + $0x5e8] sm:$0xff]
        %v1233 = vld [vmem:[#allocation3 + $0x5f0] sm:$0xff]
        %v1234 = vld [vmem:[#allocation3 + $0x5f8] sm:$0xff]
        %v1235 = vld [vmem:[#allocation3 + $0x600] sm:$0xff]
        %v1236 = vld [vmem:[#allocation3 + $0x608] sm:$0xff]
        %v1237 = vld [vmem:[#allocation3 + $0x610] sm:$0xff]
        %v1238 = vld [vmem:[#allocation3 + $0x618] sm:$0xff]
        %v1239 = vld [vmem:[#allocation3 + $0x620] sm:$0xff]
        %v1240 = vld [vmem:[#allocation3 + $0x628] sm:$0xff]
        %v1241 = vld [vmem:[#allocation3 + $0x630] sm:$0xff]
        %v1242 = vld [vmem:[#allocation3 + $0x638] sm:$0xff]
        %v1243 = vld [vmem:[#allocation3 + $0x640] sm:$0xff]
        %v1244 = vld [vmem:[#allocation3 + $0x648] sm:$0xff]
        %v1245 = vld [vmem:[#allocation3 + $0x650] sm:$0xff]
        %v1246 = vld [vmem:[#allocation3 + $0x658] sm:$0xff]
        %v1247 = vld [vmem:[#allocation3 + $0x660] sm:$0xff]
        %v1248 = vld [vmem:[#allocation3 + $0x668] sm:$0xff]
        %v1249 = vld [vmem:[#allocation3 + $0x670] sm:$0xff]
        %v1250 = vld [vmem:[#allocation3 + $0x678] sm:$0xff]
        %v1251 = vld [vmem:[#allocation3 + $0x680] sm:$0xff]
        %v1252 = vld [vmem:[#allocation3 + $0x688] sm:$0xff]
        %v1253 = vld [vmem:[#allocation3 + $0x690] sm:$0xff]
        %v1254 = vld [vmem:[#allocation3 + $0x698] sm:$0xff]
        %v1255 = vld [vmem:[#allocation3 + $0x6a0] sm:$0xff]
        %v1256 = vld [vmem:[#allocation3 + $0x6a8] sm:$0xff]
        %v1257 = vld [vmem:[#allocation3 + $0x6b0] sm:$0xff]
        %v1258 = vld [vmem:[#allocation3 + $0x6b8] sm:$0xff]
        %v1259 = vld [vmem:[#allocation3 + $0x6c0] sm:$0xff]
        %v1260 = vld [vmem:[#allocation3 + $0x6c8] sm:$0xff]
        %v1261 = vld [vmem:[#allocation3 + $0x6d0] sm:$0xff]
        %v1262 = vld [vmem:[#allocation3 + $0x6d8] sm:$0xff]
        %v1263 = vld [vmem:[#allocation3 + $0x6e0] sm:$0xff]
        %v1264 = vld [vmem:[#allocation3 + $0x6e8] sm:$0xff]
        %v1265 = vld [vmem:[#allocation3 + $0x6f0] sm:$0xff]
        %v1266 = vld [vmem:[#allocation3 + $0x6f8] sm:$0xff]
        %v1267 = vld [vmem:[#allocation3 + $0x700] sm:$0xff]
        %v1268 = vld [vmem:[#allocation3 + $0x708] sm:$0xff]
        %v1269 = vld [vmem:[#allocation3 + $0x710] sm:$0xff]
        %v1270 = vld [vmem:[#allocation3 + $0x718] sm:$0xff]
        %v1271 = vld [vmem:[#allocation3 + $0x720] sm:$0xff]
        %v1272 = vld [vmem:[#allocation3 + $0x728] sm:$0xff]
        %v1273 = vld [vmem:[#allocation3 + $0x730] sm:$0xff]
        %v1274 = vld [vmem:[#allocation3 + $0x738] sm:$0xff]
        %v1275 = vld [vmem:[#allocation3 + $0x740] sm:$0xff]
        %v1276 = vld [vmem:[#allocation3 + $0x748] sm:$0xff]
        %v1277 = vld [vmem:[#allocation3 + $0x750] sm:$0xff]
        %v1278 = vld [vmem:[#allocation3 + $0x758] sm:$0xff]
        %v1279 = vld [vmem:[#allocation3 + $0x760] sm:$0xff]
        %v1280 = vld [vmem:[#allocation3 + $0x768] sm:$0xff]
        %v1281 = vld [vmem:[#allocation3 + $0x770] sm:$0xff]
        %v1282 = vld [vmem:[#allocation3 + $0x778] sm:$0xff]
        %v1283 = vld [vmem:[#allocation3 + $0x780] sm:$0xff]
        %v1284 = vld [vmem:[#allocation3 + $0x788] sm:$0xff]
        %v1285 = vld [vmem:[#allocation3 + $0x790] sm:$0xff]
        %v1286 = vld [vmem:[#allocation3 + $0x798] sm:$0xff]
        %v1287 = vld [vmem:[#allocation3 + $0x7a0] sm:$0xff]
        %v1288 = vld [vmem:[#allocation3 + $0x7a8] sm:$0xff]
        %v1289 = vld [vmem:[#allocation3 + $0x7b0] sm:$0xff]
        %v1290 = vld [vmem:[#allocation3 + $0x7b8] sm:$0xff]
        %v1291 = vld [vmem:[#allocation3 + $0x7c0] sm:$0xff]
        %v1292 = vld [vmem:[#allocation3 + $0x7c8] sm:$0xff]
        %v1293 = vld [vmem:[#allocation3 + $0x7d0] sm:$0xff]
        %v1294 = vld [vmem:[#allocation3 + $0x7d8] sm:$0xff]
        %v1295 = vld [vmem:[#allocation3 + $0x7e0] sm:$0xff]
        %v1296 = vld [vmem:[#allocation3 + $0x7e8] sm:$0xff]
        %v1297 = vld [vmem:[#allocation3 + $0x7f0] sm:$0xff]
        %v1298 = vld [vmem:[#allocation3 + $0x7f8] sm:$0xff]
        %v1299 = vld [vmem:[#allocation3 + $0x800] sm:$0xff]
        %v1300 = vld [vmem:[#allocation3 + $0x808] sm:$0xff]
        %v1301 = vld [vmem:[#allocation3 + $0x810] sm:$0xff]
        %v1302 = vld [vmem:[#allocation3 + $0x818] sm:$0xff]
        %v1303 = vld [vmem:[#allocation3 + $0x820] sm:$0xff]
        %v1304 = vld [vmem:[#allocation3 + $0x828] sm:$0xff]
        %v1305 = vld [vmem:[#allocation3 + $0x830] sm:$0xff]
        %v1306 = vld [vmem:[#allocation3 + $0x838] sm:$0xff]
        %v1307 = vld [vmem:[#allocation3 + $0x840] sm:$0xff]
        %v1308 = vld [vmem:[#allocation3 + $0x848] sm:$0xff]
        %v1309 = vld [vmem:[#allocation3 + $0x850] sm:$0xff]
        %v1310 = vld [vmem:[#allocation3 + $0x858] sm:$0xff]
        %v1311 = vld [vmem:[#allocation3 + $0x860] sm:$0xff]
        %v1312 = vld [vmem:[#allocation3 + $0x868] sm:$0xff]
        %v1313 = vld [vmem:[#allocation3 + $0x870] sm:$0xff]
        %v1314 = vld [vmem:[#allocation3 + $0x878] sm:$0xff]
        %v1315 = vld [vmem:[#allocation3 + $0x880] sm:$0xff]
        %v1316 = vld [vmem:[#allocation3 + $0x888] sm:$0xff]
        %v1317 = vld [vmem:[#allocation3 + $0x890] sm:$0xff]
        %v1318 = vld [vmem:[#allocation3 + $0x898] sm:$0xff]
        %v1319 = vld [vmem:[#allocation3 + $0x8a0] sm:$0xff]
        %v1320 = vld [vmem:[#allocation3 + $0x8a8] sm:$0xff]
        %v1321 = vld [vmem:[#allocation3 + $0x8b0] sm:$0xff]
        %v1322 = vld [vmem:[#allocation3 + $0x8b8] sm:$0xff]
        %v1323 = vld [vmem:[#allocation3 + $0x8c0] sm:$0xff]
        %v1324 = vld [vmem:[#allocation3 + $0x8c8] sm:$0xff]
        %v1325 = vld [vmem:[#allocation3 + $0x8d0] sm:$0xff]
        %v1326 = vld [vmem:[#allocation3 + $0x8d8] sm:$0xff]
        %v1327 = vld [vmem:[#allocation3 + $0x8e0] sm:$0xff]
        %v1328 = vld [vmem:[#allocation3 + $0x8e8] sm:$0xff]
        %v1329 = vld [vmem:[#allocation3 + $0x8f0] sm:$0xff]
        %v1330 = vld [vmem:[#allocation3 + $0x8f8] sm:$0xff]
        %v1331 = vld [vmem:[#allocation7] sm:$0xff]
        %v1332 = vld [vmem:[#allocation7 + $0x8] sm:$0xff]
        %v1333 = vld [vmem:[#allocation7 + $0x10] sm:$0xff]
        %v1334 = vld [vmem:[#allocation7 + $0x18] sm:$0xff]
        %v1335 = vld [vmem:[#allocation7 + $0x20] sm:$0xff]
        %v1336 = vld [vmem:[#allocation7 + $0x28] sm:$0xff]
        %v1337 = vld [vmem:[#allocation7 + $0x30] sm:$0xff]
        %v1338 = vld [vmem:[#allocation7 + $0x38] sm:$0xff]
        %v1339 = vld [vmem:[#allocation7 + $0x40] sm:$0xff]
        %v1340 = vld [vmem:[#allocation7 + $0x48] sm:$0xff]
        %v1341 = vld [vmem:[#allocation7 + $0x50] sm:$0xff]
        %v1342 = vld [vmem:[#allocation7 + $0x58] sm:$0xff]
        %v1343 = vld [vmem:[#allocation7 + $0x60] sm:$0xff]
        %v1344 = vld [vmem:[#allocation7 + $0x68] sm:$0xff]
        %v1345 = vld [vmem:[#allocation7 + $0x70] sm:$0xff]
        %v1346 = vld [vmem:[#allocation7 + $0x78] sm:$0xff]
        %v1347 = vld [vmem:[#allocation7 + $0x80] sm:$0xff]
        %v1348 = vld [vmem:[#allocation7 + $0x88] sm:$0xff]
        %v1349 = vld [vmem:[#allocation7 + $0x90] sm:$0xff]
        %v1350 = vld [vmem:[#allocation7 + $0x98] sm:$0xff]
        %v1351 = vld [vmem:[#allocation7 + $0xa0] sm:$0xff]
        %v1352 = vld [vmem:[#allocation7 + $0xa8] sm:$0xff]
        %v1353 = vld [vmem:[#allocation7 + $0xb0] sm:$0xff]
        %v1354 = vld [vmem:[#allocation7 + $0xb8] sm:$0xff]
        %v1355 = vld [vmem:[#allocation7 + $0xc0] sm:$0xff]
        %v1356 = vld [vmem:[#allocation7 + $0xc8] sm:$0xff]
        %v1357 = vld [vmem:[#allocation7 + $0xd0] sm:$0xff]
        %v1358 = vld [vmem:[#allocation7 + $0xd8] sm:$0xff]
        %v1359 = vld [vmem:[#allocation7 + $0xe0] sm:$0xff]
        %v1360 = vld [vmem:[#allocation7 + $0xe8] sm:$0xff]
        %v1361 = vld [vmem:[#allocation7 + $0xf0] sm:$0xff]
        %v1362 = vld [vmem:[#allocation7 + $0xf8] sm:$0xff]
        %v1363 = vld [vmem:[#allocation7 + $0x100] sm:$0xff]
        %v1364 = vld [vmem:[#allocation7 + $0x108] sm:$0xff]
        %v1365 = vld [vmem:[#allocation7 + $0x110] sm:$0xff]
        %v1366 = vld [vmem:[#allocation7 + $0x118] sm:$0xff]
        %v1367 = vld [vmem:[#allocation7 + $0x120] sm:$0xff]
        %v1368 = vld [vmem:[#allocation7 + $0x128] sm:$0xff]
        %v1369 = vld [vmem:[#allocation7 + $0x130] sm:$0xff]
        %v1370 = vld [vmem:[#allocation7 + $0x138] sm:$0xff]
        %v1371 = vld [vmem:[#allocation7 + $0x140] sm:$0xff]
        %v1372 = vld [vmem:[#allocation7 + $0x148] sm:$0xff]
        %v1373 = vld [vmem:[#allocation7 + $0x150] sm:$0xff]
        %v1374 = vld [vmem:[#allocation7 + $0x158] sm:$0xff]
        %v1375 = vld [vmem:[#allocation7 + $0x160] sm:$0xff]
        %v1376 = vld [vmem:[#allocation7 + $0x168] sm:$0xff]
        %v1377 = vld [vmem:[#allocation7 + $0x170] sm:$0xff]
        %v1378 = vld [vmem:[#allocation7 + $0x178] sm:$0xff]
        %v1379 = vld [vmem:[#allocation7 + $0x180] sm:$0xff]
        %v1380 = vld [vmem:[#allocation7 + $0x188] sm:$0xff]
        %v1381 = vld [vmem:[#allocation7 + $0x190] sm:$0xff]
        %v1382 = vld [vmem:[#allocation7 + $0x198] sm:$0xff]
        %v1383 = vld [vmem:[#allocation7 + $0x1a0] sm:$0xff]
        %v1384 = vld [vmem:[#allocation7 + $0x1a8] sm:$0xff]
        %v1385 = vld [vmem:[#allocation7 + $0x1b0] sm:$0xff]
        %v1386 = vld [vmem:[#allocation7 + $0x1b8] sm:$0xff]
        %v1387 = vld [vmem:[#allocation7 + $0x1c0] sm:$0xff]
        %v1388 = vld [vmem:[#allocation7 + $0x1c8] sm:$0xff]
        %v1389 = vld [vmem:[#allocation7 + $0x1d0] sm:$0xff]
        %v1390 = vld [vmem:[#allocation7 + $0x1d8] sm:$0xff]
        %v1391 = vld [vmem:[#allocation7 + $0x1e0] sm:$0xff]
        %v1392 = vld [vmem:[#allocation7 + $0x1e8] sm:$0xff]
        %v1393 = vld [vmem:[#allocation7 + $0x1f0] sm:$0xff]
        %v1394 = vld [vmem:[#allocation7 + $0x1f8] sm:$0xff]
        %v1395 = vld [vmem:[#allocation7 + $0x200] sm:$0xff]
        %v1396 = vld [vmem:[#allocation7 + $0x208] sm:$0xff]
        %v1397 = vld [vmem:[#allocation7 + $0x210] sm:$0xff]
        %v1398 = vld [vmem:[#allocation7 + $0x218] sm:$0xff]
        %v1399 = vld [vmem:[#allocation7 + $0x220] sm:$0xff]
        %v1400 = vld [vmem:[#allocation7 + $0x228] sm:$0xff]
        %v1401 = vld [vmem:[#allocation7 + $0x230] sm:$0xff]
        %v1402 = vld [vmem:[#allocation7 + $0x238] sm:$0xff]
        %v1403 = vld [vmem:[#allocation7 + $0x240] sm:$0xff]
        %v1404 = vld [vmem:[#allocation7 + $0x248] sm:$0xff]
        %v1405 = vld [vmem:[#allocation7 + $0x250] sm:$0xff]
        %v1406 = vld [vmem:[#allocation7 + $0x258] sm:$0xff]
        %v1407 = vld [vmem:[#allocation7 + $0x260] sm:$0xff]
        %v1408 = vld [vmem:[#allocation7 + $0x268] sm:$0xff]
        %v1409 = vld [vmem:[#allocation7 + $0x270] sm:$0xff]
        %v1410 = vld [vmem:[#allocation7 + $0x278] sm:$0xff]
        %v1411 = vld [vmem:[#allocation7 + $0x280] sm:$0xff]
        %v1412 = vld [vmem:[#allocation7 + $0x288] sm:$0xff]
        %v1413 = vld [vmem:[#allocation7 + $0x290] sm:$0xff]
        %v1414 = vld [vmem:[#allocation7 + $0x298] sm:$0xff]
        %v1415 = vld [vmem:[#allocation7 + $0x2a0] sm:$0xff]
        %v1416 = vld [vmem:[#allocation7 + $0x2a8] sm:$0xff]
        %v1417 = vld [vmem:[#allocation7 + $0x2b0] sm:$0xff]
        %v1418 = vld [vmem:[#allocation7 + $0x2b8] sm:$0xff]
        %v1419 = vld [vmem:[#allocation7 + $0x2c0] sm:$0xff]
        %v1420 = vld [vmem:[#allocation7 + $0x2c8] sm:$0xff]
        %v1421 = vld [vmem:[#allocation7 + $0x2d0] sm:$0xff]
        %v1422 = vld [vmem:[#allocation7 + $0x2d8] sm:$0xff]
        %v1423 = vld [vmem:[#allocation7 + $0x2e0] sm:$0xff]
        %v1424 = vld [vmem:[#allocation7 + $0x2e8] sm:$0xff]
        %v1425 = vld [vmem:[#allocation7 + $0x2f0] sm:$0xff]
        %v1426 = vld [vmem:[#allocation7 + $0x2f8] sm:$0xff]
        %v1427 = vld [vmem:[#allocation7 + $0x300] sm:$0xff]
        %v1428 = vld [vmem:[#allocation7 + $0x308] sm:$0xff]
        %v1429 = vld [vmem:[#allocation7 + $0x310] sm:$0xff]
        %v1430 = vld [vmem:[#allocation7 + $0x318] sm:$0xff]
        %v1431 = vld [vmem:[#allocation7 + $0x320] sm:$0xff]
        %v1432 = vld [vmem:[#allocation7 + $0x328] sm:$0xff]
        %v1433 = vld [vmem:[#allocation7 + $0x330] sm:$0xff]
        %v1434 = vld [vmem:[#allocation7 + $0x338] sm:$0xff]
        %v1435 = vld [vmem:[#allocation7 + $0x340] sm:$0xff]
        %v1436 = vld [vmem:[#allocation7 + $0x348] sm:$0xff]
        %v1437 = vld [vmem:[#allocation7 + $0x350] sm:$0xff]
        %v1438 = vld [vmem:[#allocation7 + $0x358] sm:$0xff]
        %v1439 = vld [vmem:[#allocation7 + $0x360] sm:$0xff]
        %v1440 = vld [vmem:[#allocation7 + $0x368] sm:$0xff]
        %v1441 = vld [vmem:[#allocation7 + $0x370] sm:$0xff]
        %v1442 = vld [vmem:[#allocation7 + $0x378] sm:$0xff]
        %v1443 = vld [vmem:[#allocation7 + $0x380] sm:$0xff]
        %v1444 = vld [vmem:[#allocation7 + $0x388] sm:$0xff]
        %v1445 = vld [vmem:[#allocation7 + $0x390] sm:$0xff]
        %v1446 = vld [vmem:[#allocation7 + $0x398] sm:$0xff]
        %v1447 = vld [vmem:[#allocation7 + $0x3a0] sm:$0xff]
        %v1448 = vld [vmem:[#allocation7 + $0x3a8] sm:$0xff]
        %v1449 = vld [vmem:[#allocation7 + $0x3b0] sm:$0xff]
        %v1450 = vld [vmem:[#allocation7 + $0x3b8] sm:$0xff]
        %v1451 = vld [vmem:[#allocation7 + $0x3c0] sm:$0xff]
        %v1452 = vld [vmem:[#allocation7 + $0x3c8] sm:$0xff]
        %v1453 = vld [vmem:[#allocation7 + $0x3d0] sm:$0xff]
        %v1454 = vld [vmem:[#allocation7 + $0x3d8] sm:$0xff]
        %v1455 = vld [vmem:[#allocation7 + $0x3e0] sm:$0xff]
        %v1456 = vld [vmem:[#allocation7 + $0x3e8] sm:$0xff]
        %v1457 = vld [vmem:[#allocation7 + $0x3f0] sm:$0xff]
        %v1458 = vld [vmem:[#allocation7 + $0x3f8] sm:$0xff]
        %v1459 = vld [vmem:[#allocation7 + $0x400] sm:$0xff]
        %v1460 = vld [vmem:[#allocation7 + $0x408] sm:$0xff]
        %v1461 = vld [vmem:[#allocation7 + $0x410] sm:$0xff]
        %v1462 = vld [vmem:[#allocation7 + $0x418] sm:$0xff]
        %v1463 = vld [vmem:[#allocation7 + $0x420] sm:$0xff]
        %v1464 = vld [vmem:[#allocation7 + $0x428] sm:$0xff]
        %v1465 = vld [vmem:[#allocation7 + $0x430] sm:$0xff]
        %v1466 = vld [vmem:[#allocation7 + $0x438] sm:$0xff]
        %v1467 = vld [vmem:[#allocation7 + $0x440] sm:$0xff]
        %v1468 = vld [vmem:[#allocation7 + $0x448] sm:$0xff]
        %v1469 = vld [vmem:[#allocation7 + $0x450] sm:$0xff]
        %v1470 = vld [vmem:[#allocation7 + $0x458] sm:$0xff]
        %v1471 = vld [vmem:[#allocation7 + $0x460] sm:$0xff]
        %v1472 = vld [vmem:[#allocation7 + $0x468] sm:$0xff]
        %v1473 = vld [vmem:[#allocation7 + $0x470] sm:$0xff]
        %v1474 = vld [vmem:[#allocation7 + $0x478] sm:$0xff]
        %1475 = vmatprep.subr.mxu0 0.0
        %1476 = vmatpush1.msra.mxu0 %v1331
        %1477 = vmatprep.subr.mxu0 0.0
        %1478 = vmatpush1.msra.mxu0 %v1332
        %1479 = vmatprep.subr.mxu0 0.0
        %1480 = vmatpush1.msra.mxu0 %v1333
        %1481 = vmatprep.subr.mxu0 0.0
        %1482 = vmatpush1.msra.mxu0 %v1334
        %1483 = vmatprep.subr.mxu0 0.0
        %1484 = vmatpush1.msra.mxu0 %v1335
        %1485 = vmatprep.subr.mxu0 0.0
        %1486 = vmatpush1.msra.mxu0 %v1336
        %1487 = vmatprep.subr.mxu0 0.0
        %1488 = vmatpush1.msra.mxu0 %v1337
        %1489 = vmatprep.subr.mxu0 0.0
        %1490 = vmatpush1.msra.mxu0 %v1338
        %1491 = vmatprep.subr.mxu0 0.0
        %1492 = vmatpush1.msra.mxu0 %v1339
        %1493 = vmatprep.subr.mxu0 0.0
        %1494 = vmatpush1.msra.mxu0 %v1340
        %1495 = vmatprep.subr.mxu0 0.0
        %1496 = vmatpush1.msra.mxu0 %v1341
        %1497 = vmatprep.subr.mxu0 0.0
        %1498 = vmatpush1.msra.mxu0 %v1342
        %1499 = vmatprep.subr.mxu0 0.0
        %1500 = vmatpush1.msra.mxu0 %v1343
        %1501 = vmatprep.subr.mxu0 0.0
        %1502 = vmatpush1.msra.mxu0 %v1344
        %1503 = vmatprep.subr.mxu0 0.0
        %1504 = vmatpush1.msra.mxu0 %v1345
        %1505 = vmatprep.subr.mxu0 0.0
        %1506 = vmatpush1.msra.mxu0 %v1346
        %1507 = vmatprep.subr.mxu0 0.0
        %1508 = vmatpush1.msra.mxu0 %v1347
        %1509 = vmatprep.subr.mxu0 0.0
        %1510 = vmatpush1.msra.mxu0 %v1348
        %1511 = vmatprep.subr.mxu0 0.0
        %1512 = vmatpush1.msra.mxu0 %v1349
        %1513 = vmatprep.subr.mxu0 0.0
        %1514 = vmatpush1.msra.mxu0 %v1350
        %1515 = vmatprep.subr.mxu0 0.0
        %1516 = vmatpush1.msra.mxu0 %v1351
        %1517 = vmatprep.subr.mxu0 0.0
        %1518 = vmatpush1.msra.mxu0 %v1352
        %1519 = vmatprep.subr.mxu0 0.0
        %1520 = vmatpush1.msra.mxu0 %v1353
        %1521 = vmatprep.subr.mxu0 0.0
        %1522 = vmatpush1.msra.mxu0 %v1354
        %1523 = vmatprep.subr.mxu0 0.0
        %1524 = vmatpush1.msra.mxu0 %v1355
        %1525 = vmatprep.subr.mxu0 0.0
        %1526 = vmatpush1.msra.mxu0 %v1356
        %1527 = vmatprep.subr.mxu0 0.0
        %1528 = vmatpush1.msra.mxu0 %v1357
        %1529 = vmatprep.subr.mxu0 0.0
        %1530 = vmatpush1.msra.mxu0 %v1358
        %1531 = vmatprep.subr.mxu0 0.0
        %1532 = vmatpush1.msra.mxu0 %v1359
        %1533 = vmatprep.subr.mxu0 0.0
        %1534 = vmatpush1.msra.mxu0 %v1360
        %1535 = vmatprep.subr.mxu0 0.0
        %1536 = vmatpush1.msra.mxu0 %v1361
        %1537 = vmatprep.subr.mxu0 0.0
        %1538 = vmatpush1.msra.mxu0 %v1362
        %1539 = vmatprep.mubr.f32.mxu0 %v1044
        %1540 = vmatmul.mubr.f32.gmra.mrb[0].mxu0 %v1043
        %v1541 = vpop.f32.mrb[0].mxu0
        %v1542 = vadd.f32 0.0, %v1541
        %v1543 = vpop.f32.mrb[0].mxu0
        %1544 = vmatprep.mubr.f32.mxu0 %v1053
        %1545 = vmatmul.mubr.f32.gmra.mrb[0].mxu0 %v1052
        %v1546 = vpop.f32.mrb[0].mxu0
        %v1547 = vadd.f32 0.0, %v1546
        %v1548 = vpop.f32.mrb[0].mxu0
        %1549 = vmatprep.mubr.f32.mxu0 %v1062
        %1550 = vmatmul.mubr.f32.gmra.mrb[0].mxu0 %v1061
        %v1551 = vpop.f32.mrb[0].mxu0
        %v1552 = vadd.f32 0.0, %v1551
        %v1553 = vpop.f32.mrb[0].mxu0
        %1554 = vmatprep.mubr.f32.mxu0 %v1071
        %1555 = vmatmul.mubr.f32.gmra.mrb[0].mxu0 %v1070
        %v1556 = vpop.f32.mrb[0].mxu0
        %v1557 = vadd.f32 0.0, %v1556
        %v1558 = vpop.f32.mrb[0].mxu0
        %1559 = vmatprep.mubr.f32.mxu0 %v1080
        %1560 = vmatmul.mubr.f32.gmra.mrb[0].mxu0 %v1079
        %v1561 = vpop.f32.mrb[0].mxu0
        %v1562 = vadd.f32 0.0, %v1561
        %v1563 = vpop.f32.mrb[0].mxu0
        %1564 = vmatprep.mubr.f32.mxu0 %v1089
        %1565 = vmatmul.mubr.f32.gmra.mrb[0].mxu0 %v1088
        %v1566 = vpop.f32.mrb[0].mxu0
        %v1567 = vadd.f32 0.0, %v1566
        %v1568 = vpop.f32.mrb[0].mxu0
        %1569 = vmatprep.mubr.f32.mxu0 %v1098
        %1570 = vmatmul.mubr.f32.gmra.mrb[0].mxu0 %v1097
        %v1571 = vpop.f32.mrb[0].mxu0
        %v1572 = vadd.f32 0.0, %v1571
        %v1573 = vpop.f32.mrb[0].mxu0
        %1574 = vmatprep.mubr.f32.mxu0 %v1107
        %1575 = vmatmul.mubr.f32.gmra.mrb[0].mxu0 %v1106
        %v1576 = vpop.f32.mrb[0].mxu0
        %v1577 = vadd.f32 0.0, %v1576
        %v1578 = vpop.f32.mrb[0].mxu0
        %1579 = vmatprep.mubr.f32.mxu0 %v1116
        %1580 = vmatmul.mubr.f32.gmra.mrb[0].mxu0 %v1115
        %v1581 = vpop.f32.mrb[0].mxu0
        %v1582 = vadd.f32 0.0, %v1581
        %v1583 = vpop.f32.mrb[0].mxu0
        %1584 = vmatprep.mubr.f32.mxu0 %v1125
        %1585 = vmatmul.mubr.f32.gmra.mrb[0].mxu0 %v1124
        %v1586 = vpop.f32.mrb[0].mxu0
        %v1587 = vadd.f32 0.0, %v1586
        %v1588 = vpop.f32.mrb[0].mxu0
        %1589 = vmatprep.mubr.f32.mxu0 %v1134
        %1590 = vmatmul.mubr.f32.gmra.mrb[0].mxu0 %v1133
        %v1591 = vpop.f32.mrb[0].mxu0
        %v1592 = vadd.f32 0.0, %v1591
        %v1593 = vpop.f32.mrb[0].mxu0
        %1594 = vmatprep.mubr.f32.mxu0 %v1143
        %1595 = vmatmul.mubr.f32.gmra.mrb[0].mxu0 %v1142
        %v1596 = vpop.f32.mrb[0].mxu0
        %v1597 = vadd.f32 0.0, %v1596
        %v1598 = vpop.f32.mrb[0].mxu0
        %1599 = vmatprep.mubr.f32.mxu0 %v1152
        %1600 = vmatmul.mubr.f32.gmra.mrb[0].mxu0 %v1151
        %v1601 = vpop.f32.mrb[0].mxu0
        %v1602 = vadd.f32 0.0, %v1601
        %v1603 = vpop.f32.mrb[0].mxu0
        %1604 = vmatprep.mubr.f32.mxu0 %v1161
        %1605 = vmatmul.mubr.f32.gmra.mrb[0].mxu0 %v1160
        %v1606 = vpop.f32.mrb[0].mxu0
        %v1607 = vadd.f32 0.0, %v1606
        %v1608 = vpop.f32.mrb[0].mxu0
        %1609 = vmatprep.mubr.f32.mxu0 %v1170
        %1610 = vmatmul.mubr.f32.gmra.mrb[0].mxu0 %v1169
        %v1611 = vpop.f32.mrb[0].mxu0
        %v1612 = vadd.f32 0.0, %v1611
        %v1613 = vpop.f32.mrb[0].mxu0
        %1614 = vmatprep.mubr.f32.mxu0 %v1179
        %1615 = vmatmul.mubr.f32.gmra.mrb[0].mxu0 %v1178
        %v1616 = vpop.f32.mrb[0].mxu0
        %v1617 = vadd.f32 0.0, %v1616
        %v1618 = vpop.f32.mrb[0].mxu0
        %1619 = vmatprep.mubr.f32.mxu0 %v1188
        %1620 = vmatmul.mubr.f32.gmra.mrb[0].mxu0 %v1187
        %v1621 = vpop.f32.mrb[0].mxu0
        %v1622 = vadd.f32 0.0, %v1621
        %v1623 = vpop.f32.mrb[0].mxu0
        %1624 = vmatprep.mubr.f32.mxu0 %v1197
        %1625 = vmatmul.mubr.f32.gmra.mrb[0].mxu0 %v1196
        %v1626 = vpop.f32.mrb[0].mxu0
        %v1627 = vadd.f32 0.0, %v1626
        %v1628 = vpop.f32.mrb[0].mxu0
        %1629 = vmatprep.mubr.f32.mxu0 %v1206
        %1630 = vmatmul.mubr.f32.gmra.mrb[0].mxu0 %v1205
        %v1631 = vpop.f32.mrb[0].mxu0
        %v1632 = vadd.f32 0.0, %v1631
        %v1633 = vpop.f32.mrb[0].mxu0
        %1634 = vmatprep.mubr.f32.mxu0 %v1215
        %1635 = vmatmul.mubr.f32.gmra.mrb[0].mxu0 %v1214
        %v1636 = vpop.f32.mrb[0].mxu0
        %v1637 = vadd.f32 0.0, %v1636
        %v1638 = vpop.f32.mrb[0].mxu0
        %1639 = vmatprep.mubr.f32.mxu0 %v1224
        %1640 = vmatmul.mubr.f32.gmra.mrb[0].mxu0 %v1223
        %v1641 = vpop.f32.mrb[0].mxu0
        %v1642 = vadd.f32 0.0, %v1641
        %v1643 = vpop.f32.mrb[0].mxu0
        %1644 = vmatprep.mubr.f32.mxu0 %v1233
        %1645 = vmatmul.mubr.f32.gmra.mrb[0].mxu0 %v1232
        %v1646 = vpop.f32.mrb[0].mxu0
        %v1647 = vadd.f32 0.0, %v1646
        %v1648 = vpop.f32.mrb[0].mxu0
        %1649 = vmatprep.mubr.f32.mxu0 %v1242
        %1650 = vmatmul.mubr.f32.gmra.mrb[0].mxu0 %v1241
        %v1651 = vpop.f32.mrb[0].mxu0
        %v1652 = vadd.f32 0.0, %v1651
        %v1653 = vpop.f32.mrb[0].mxu0
        %1654 = vmatprep.mubr.f32.mxu0 %v1251
        %1655 = vmatmul.mubr.f32.gmra.mrb[0].mxu0 %v1250
        %v1656 = vpop.f32.mrb[0].mxu0
        %v1657 = vadd.f32 0.0, %v1656
        %v1658 = vpop.f32.mrb[0].mxu0
        %1659 = vmatprep.mubr.f32.mxu0 %v1260
        %1660 = vmatmul.mubr.f32.gmra.mrb[0].mxu0 %v1259
        %v1661 = vpop.f32.mrb[0].mxu0
        %v1662 = vadd.f32 0.0, %v1661
        %v1663 = vpop.f32.mrb[0].mxu0
        %1664 = vmatprep.mubr.f32.mxu0 %v1269
        %1665 = vmatmul.mubr.f32.gmra.mrb[0].mxu0 %v1268
        %v1666 = vpop.f32.mrb[0].mxu0
        %v1667 = vadd.f32 0.0, %v1666
        %v1668 = vpop.f32.mrb[0].mxu0
        %1669 = vmatprep.mubr.f32.mxu0 %v1278
        %1670 = vmatmul.mubr.f32.gmra.mrb[0].mxu0 %v1277
        %v1671 = vpop.f32.mrb[0].mxu0
        %v1672 = vadd.f32 0.0, %v1671
        %v1673 = vpop.f32.mrb[0].mxu0
        %1674 = vmatprep.mubr.f32.mxu0 %v1287
        %1675 = vmatmul.mubr.f32.gmra.mrb[0].mxu0 %v1286
        %v1676 = vpop.f32.mrb[0].mxu0
        %v1677 = vadd.f32 0.0, %v1676
        %v1678 = vpop.f32.mrb[0].mxu0
        %1679 = vmatprep.mubr.f32.mxu0 %v1296
        %1680 = vmatmul.mubr.f32.gmra.mrb[0].mxu0 %v1295
        %v1681 = vpop.f32.mrb[0].mxu0
        %v1682 = vadd.f32 0.0, %v1681
        %v1683 = vpop.f32.mrb[0].mxu0
        %1684 = vmatprep.mubr.f32.mxu0 %v1305
        %1685 = vmatmul.mubr.f32.gmra.mrb[0].mxu0 %v1304
        %v1686 = vpop.f32.mrb[0].mxu0
        %v1687 = vadd.f32 0.0, %v1686
        %v1688 = vpop.f32.mrb[0].mxu0
        %1689 = vmatprep.mubr.f32.mxu0 %v1314
        %1690 = vmatmul.mubr.f32.gmra.mrb[0].mxu0 %v1313
        %v1691 = vpop.f32.mrb[0].mxu0
        %v1692 = vadd.f32 0.0, %v1691
        %v1693 = vpop.f32.mrb[0].mxu0
        %1694 = vmatprep.mubr.f32.mxu0 %v1323
        %1695 = vmatmul.mubr.f32.gmra.mrb[0].mxu0 %v1322
        %v1696 = vpop.f32.mrb[0].mxu0
        %v1697 = vadd.f32 0.0, %v1696
        %v1698 = vpop.f32.mrb[0].mxu0
        %1699 = vdwg.mxu0
        %1700 = vmatprep.subr.mxu0 0.0
        %1701 = vmatpush1.msra.mxu0 %v1363
        %1702 = vmatprep.subr.mxu0 0.0
        %1703 = vmatpush1.msra.mxu0 %v1364
        %1704 = vmatprep.subr.mxu0 0.0
        %1705 = vmatpush1.msra.mxu0 %v1365
        %1706 = vmatprep.subr.mxu0 0.0
        %1707 = vmatpush1.msra.mxu0 %v1366
        %1708 = vmatprep.subr.mxu0 0.0
        %1709 = vmatpush1.msra.mxu0 %v1367
        %1710 = vmatprep.subr.mxu0 0.0
        %1711 = vmatpush1.msra.mxu0 %v1368
        %1712 = vmatprep.subr.mxu0 0.0
        %1713 = vmatpush1.msra.mxu0 %v1369
        %1714 = vmatprep.subr.mxu0 0.0
        %1715 = vmatpush1.msra.mxu0 %v1370
        %1716 = vmatprep.subr.mxu0 0.0
        %1717 = vmatpush1.msra.mxu0 %v1371
        %1718 = vmatprep.subr.mxu0 0.0
        %1719 = vmatpush1.msra.mxu0 %v1372
        %1720 = vmatprep.subr.mxu0 0.0
        %1721 = vmatpush1.msra.mxu0 %v1373
        %1722 = vmatprep.subr.mxu0 0.0
        %1723 = vmatpush1.msra.mxu0 %v1374
        %1724 = vmatprep.subr.mxu0 0.0
        %1725 = vmatpush1.msra.mxu0 %v1375
        %1726 = vmatprep.subr.mxu0 0.0
        %1727 = vmatpush1.msra.mxu0 %v1376
        %1728 = vmatprep.subr.mxu0 0.0
        %1729 = vmatpush1.msra.mxu0 %v1377
        %1730 = vmatprep.subr.mxu0 0.0
        %1731 = vmatpush1.msra.mxu0 %v1378
        %1732 = vmatprep.subr.mxu0 0.0
        %1733 = vmatpush1.msra.mxu0 %v1379
        %1734 = vmatprep.subr.mxu0 0.0
        %1735 = vmatpush1.msra.mxu0 %v1380
        %1736 = vmatprep.subr.mxu0 0.0
        %1737 = vmatpush1.msra.mxu0 %v1381
        %1738 = vmatprep.subr.mxu0 0.0
        %1739 = vmatpush1.msra.mxu0 %v1382
        %1740 = vmatprep.subr.mxu0 0.0
        %1741 = vmatpush1.msra.mxu0 %v1383
        %1742 = vmatprep.subr.mxu0 0.0
        %1743 = vmatpush1.msra.mxu0 %v1384
        %1744 = vmatprep.subr.mxu0 0.0
        %1745 = vmatpush1.msra.mxu0 %v1385
        %1746 = vmatprep.subr.mxu0 0.0
        %1747 = vmatpush1.msra.mxu0 %v1386
        %1748 = vmatprep.subr.mxu0 0.0
        %1749 = vmatpush1.msra.mxu0 %v1387
        %1750 = vmatprep.subr.mxu0 0.0
        %1751 = vmatpush1.msra.mxu0 %v1388
        %1752 = vmatprep.subr.mxu0 0.0
        %1753 = vmatpush1.msra.mxu0 %v1389
        %1754 = vmatprep.subr.mxu0 0.0
        %1755 = vmatpush1.msra.mxu0 %v1390
        %1756 = vmatprep.subr.mxu0 0.0
        %1757 = vmatpush1.msra.mxu0 %v1391
        %1758 = vmatprep.subr.mxu0 0.0
        %1759 = vmatpush1.msra.mxu0 %v1392
        %1760 = vmatprep.subr.mxu0 0.0
        %1761 = vmatpush1.msra.mxu0 %v1393
        %1762 = vmatprep.subr.mxu0 0.0
        %1763 = vmatpush1.msra.mxu0 %v1394
        %1764 = vmatprep.mubr.f32.mxu0 %v1046
        %1765 = vmatmul.mubr.f32.gmra.mrb[0].mxu0 %v1045
        %v1766 = vpop.f32.mrb[0].mxu0
        %v1767 = vadd.f32 %v1542, %v1766
        %v1768 = vpop.f32.mrb[0].mxu0
        %1769 = vmatprep.mubr.f32.mxu0 %v1055
        %1770 = vmatmul.mubr.f32.gmra.mrb[0].mxu0 %v1054
        %v1771 = vpop.f32.mrb[0].mxu0
        %v1772 = vadd.f32 %v1547, %v1771
        %v1773 = vpop.f32.mrb[0].mxu0
        %1774 = vmatprep.mubr.f32.mxu0 %v1064
        %1775 = vmatmul.mubr.f32.gmra.mrb[0].mxu0 %v1063
        %v1776 = vpop.f32.mrb[0].mxu0
        %v1777 = vadd.f32 %v1552, %v1776
        %v1778 = vpop.f32.mrb[0].mxu0
        %1779 = vmatprep.mubr.f32.mxu0 %v1073
        %1780 = vmatmul.mubr.f32.gmra.mrb[0].mxu0 %v1072
        %v1781 = vpop.f32.mrb[0].mxu0
        %v1782 = vadd.f32 %v1557, %v1781
        %v1783 = vpop.f32.mrb[0].mxu0
        %1784 = vmatprep.mubr.f32.mxu0 %v1082
        %1785 = vmatmul.mubr.f32.gmra.mrb[0].mxu0 %v1081
        %v1786 = vpop.f32.mrb[0].mxu0
        %v1787 = vadd.f32 %v1562, %v1786
        %v1788 = vpop.f32.mrb[0].mxu0
        %1789 = vmatprep.mubr.f32.mxu0 %v1091
        %1790 = vmatmul.mubr.f32.gmra.mrb[0].mxu0 %v1090
        %v1791 = vpop.f32.mrb[0].mxu0
        %v1792 = vadd.f32 %v1567, %v1791
        %v1793 = vpop.f32.mrb[0].mxu0
        %1794 = vmatprep.mubr.f32.mxu0 %v1100
        %1795 = vmatmul.mubr.f32.gmra.mrb[0].mxu0 %v1099
        %v1796 = vpop.f32.mrb[0].mxu0
        %v1797 = vadd.f32 %v1572, %v1796
        %v1798 = vpop.f32.mrb[0].mxu0
        %1799 = vmatprep.mubr.f32.mxu0 %v1109
        %1800 = vmatmul.mubr.f32.gmra.mrb[0].mxu0 %v1108
        %v1801 = vpop.f32.mrb[0].mxu0
        %v1802 = vadd.f32 %v1577, %v1801
        %v1803 = vpop.f32.mrb[0].mxu0
        %1804 = vmatprep.mubr.f32.mxu0 %v1118
        %1805 = vmatmul.mubr.f32.gmra.mrb[0].mxu0 %v1117
        %v1806 = vpop.f32.mrb[0].mxu0
        %v1807 = vadd.f32 %v1582, %v1806
        %v1808 = vpop.f32.mrb[0].mxu0
        %1809 = vmatprep.mubr.f32.mxu0 %v1127
        %1810 = vmatmul.mubr.f32.gmra.mrb[0].mxu0 %v1126
        %v1811 = vpop.f32.mrb[0].mxu0
        %v1812 = vadd.f32 %v1587, %v1811
        %v1813 = vpop.f32.mrb[0].mxu0
        %1814 = vmatprep.mubr.f32.mxu0 %v1136
        %1815 = vmatmul.mubr.f32.gmra.mrb[0].mxu0 %v1135
        %v1816 = vpop.f32.mrb[0].mxu0
        %v1817 = vadd.f32 %v1592, %v1816
        %v1818 = vpop.f32.mrb[0].mxu0
        %1819 = vmatprep.mubr.f32.mxu0 %v1145
        %1820 = vmatmul.mubr.f32.gmra.mrb[0].mxu0 %v1144
        %v1821 = vpop.f32.mrb[0].mxu0
        %v1822 = vadd.f32 %v1597, %v1821
        %v1823 = vpop.f32.mrb[0].mxu0
        %1824 = vmatprep.mubr.f32.mxu0 %v1154
        %1825 = vmatmul.mubr.f32.gmra.mrb[0].mxu0 %v1153
        %v1826 = vpop.f32.mrb[0].mxu0
        %v1827 = vadd.f32 %v1602, %v1826
        %v1828 = vpop.f32.mrb[0].mxu0
        %1829 = vmatprep.mubr.f32.mxu0 %v1163
        %1830 = vmatmul.mubr.f32.gmra.mrb[0].mxu0 %v1162
        %v1831 = vpop.f32.mrb[0].mxu0
        %v1832 = vadd.f32 %v1607, %v1831
        %v1833 = vpop.f32.mrb[0].mxu0
        %1834 = vmatprep.mubr.f32.mxu0 %v1172
        %1835 = vmatmul.mubr.f32.gmra.mrb[0].mxu0 %v1171
        %v1836 = vpop.f32.mrb[0].mxu0
        %v1837 = vadd.f32 %v1612, %v1836
        %v1838 = vpop.f32.mrb[0].mxu0
        %1839 = vmatprep.mubr.f32.mxu0 %v1181
        %1840 = vmatmul.mubr.f32.gmra.mrb[0].mxu0 %v1180
        %v1841 = vpop.f32.mrb[0].mxu0
        %v1842 = vadd.f32 %v1617, %v1841
        %v1843 = vpop.f32.mrb[0].mxu0
        %1844 = vmatprep.mubr.f32.mxu0 %v1190
        %1845 = vmatmul.mubr.f32.gmra.mrb[0].mxu0 %v1189
        %v1846 = vpop.f32.mrb[0].mxu0
        %v1847 = vadd.f32 %v1622, %v1846
        %v1848 = vpop.f32.mrb[0].mxu0
        %1849 = vmatprep.mubr.f32.mxu0 %v1199
        %1850 = vmatmul.mubr.f32.gmra.mrb[0].mxu0 %v1198
        %v1851 = vpop.f32.mrb[0].mxu0
        %v1852 = vadd.f32 %v1627, %v1851
        %v1853 = vpop.f32.mrb[0].mxu0
        %1854 = vmatprep.mubr.f32.mxu0 %v1208
        %1855 = vmatmul.mubr.f32.gmra.mrb[0].mxu0 %v1207
        %v1856 = vpop.f32.mrb[0].mxu0
        %v1857 = vadd.f32 %v1632, %v1856
        %v1858 = vpop.f32.mrb[0].mxu0
        %1859 = vmatprep.mubr.f32.mxu0 %v1217
        %1860 = vmatmul.mubr.f32.gmra.mrb[0].mxu0 %v1216
        %v1861 = vpop.f32.mrb[0].mxu0
        %v1862 = vadd.f32 %v1637, %v1861
        %v1863 = vpop.f32.mrb[0].mxu0
        %1864 = vmatprep.mubr.f32.mxu0 %v1226
        %1865 = vmatmul.mubr.f32.gmra.mrb[0].mxu0 %v1225
        %v1866 = vpop.f32.mrb[0].mxu0
        %v1867 = vadd.f32 %v1642, %v1866
        %v1868 = vpop.f32.mrb[0].mxu0
        %1869 = vmatprep.mubr.f32.mxu0 %v1235
        %1870 = vmatmul.mubr.f32.gmra.mrb[0].mxu0 %v1234
        %v1871 = vpop.f32.mrb[0].mxu0
        %v1872 = vadd.f32 %v1647, %v1871
        %v1873 = vpop.f32.mrb[0].mxu0
        %1874 = vmatprep.mubr.f32.mxu0 %v1244
        %1875 = vmatmul.mubr.f32.gmra.mrb[0].mxu0 %v1243
        %v1876 = vpop.f32.mrb[0].mxu0
        %v1877 = vadd.f32 %v1652, %v1876
        %v1878 = vpop.f32.mrb[0].mxu0
        %1879 = vmatprep.mubr.f32.mxu0 %v1253
        %1880 = vmatmul.mubr.f32.gmra.mrb[0].mxu0 %v1252
        %v1881 = vpop.f32.mrb[0].mxu0
        %v1882 = vadd.f32 %v1657, %v1881
        %v1883 = vpop.f32.mrb[0].mxu0
        %1884 = vmatprep.mubr.f32.mxu0 %v1262
        %1885 = vmatmul.mubr.f32.gmra.mrb[0].mxu0 %v1261
        %v1886 = vpop.f32.mrb[0].mxu0
        %v1887 = vadd.f32 %v1662, %v1886
        %v1888 = vpop.f32.mrb[0].mxu0
        %1889 = vmatprep.mubr.f32.mxu0 %v1271
        %1890 = vmatmul.mubr.f32.gmra.mrb[0].mxu0 %v1270
        %v1891 = vpop.f32.mrb[0].mxu0
        %v1892 = vadd.f32 %v1667, %v1891
        %v1893 = vpop.f32.mrb[0].mxu0
        %1894 = vmatprep.mubr.f32.mxu0 %v1280
        %1895 = vmatmul.mubr.f32.gmra.mrb[0].mxu0 %v1279
        %v1896 = vpop.f32.mrb[0].mxu0
        %v1897 = vadd.f32 %v1672, %v1896
        %v1898 = vpop.f32.mrb[0].mxu0
        %1899 = vmatprep.mubr.f32.mxu0 %v1289
        %1900 = vmatmul.mubr.f32.gmra.mrb[0].mxu0 %v1288
        %v1901 = vpop.f32.mrb[0].mxu0
        %v1902 = vadd.f32 %v1677, %v1901
        %v1903 = vpop.f32.mrb[0].mxu0
        %1904 = vmatprep.mubr.f32.mxu0 %v1298
        %1905 = vmatmul.mubr.f32.gmra.mrb[0].mxu0 %v1297
        %v1906 = vpop.f32.mrb[0].mxu0
        %v1907 = vadd.f32 %v1682, %v1906
        %v1908 = vpop.f32.mrb[0].mxu0
        %1909 = vmatprep.mubr.f32.mxu0 %v1307
        %1910 = vmatmul.mubr.f32.gmra.mrb[0].mxu0 %v1306
        %v1911 = vpop.f32.mrb[0].mxu0
        %v1912 = vadd.f32 %v1687, %v1911
        %v1913 = vpop.f32.mrb[0].mxu0
        %1914 = vmatprep.mubr.f32.mxu0 %v1316
        %1915 = vmatmul.mubr.f32.gmra.mrb[0].mxu0 %v1315
        %v1916 = vpop.f32.mrb[0].mxu0
        %v1917 = vadd.f32 %v1692, %v1916
        %v1918 = vpop.f32.mrb[0].mxu0
        %1919 = vmatprep.mubr.f32.mxu0 %v1325
        %1920 = vmatmul.mubr.f32.gmra.mrb[0].mxu0 %v1324
        %v1921 = vpop.f32.mrb[0].mxu0
        %v1922 = vadd.f32 %v1697, %v1921
        %v1923 = vpop.f32.mrb[0].mxu0
        %1924 = vdwg.mxu0
        %1925 = vmatprep.subr.mxu0 0.0
        %1926 = vmatpush1.msra.mxu0 %v1395
        %1927 = vmatprep.subr.mxu0 0.0
        %1928 = vmatpush1.msra.mxu0 %v1396
        %1929 = vmatprep.subr.mxu0 0.0
        %1930 = vmatpush1.msra.mxu0 %v1397
        %1931 = vmatprep.subr.mxu0 0.0
        %1932 = vmatpush1.msra.mxu0 %v1398
        %1933 = vmatprep.subr.mxu0 0.0
        %1934 = vmatpush1.msra.mxu0 %v1399
        %1935 = vmatprep.subr.mxu0 0.0
        %1936 = vmatpush1.msra.mxu0 %v1400
        %1937 = vmatprep.subr.mxu0 0.0
        %1938 = vmatpush1.msra.mxu0 %v1401
        %1939 = vmatprep.subr.mxu0 0.0
        %1940 = vmatpush1.msra.mxu0 %v1402
        %1941 = vmatprep.subr.mxu0 0.0
        %1942 = vmatpush1.msra.mxu0 %v1403
        %1943 = vmatprep.subr.mxu0 0.0
        %1944 = vmatpush1.msra.mxu0 %v1404
        %1945 = vmatprep.subr.mxu0 0.0
        %1946 = vmatpush1.msra.mxu0 %v1405
        %1947 = vmatprep.subr.mxu0 0.0
        %1948 = vmatpush1.msra.mxu0 %v1406
        %1949 = vmatprep.subr.mxu0 0.0
        %1950 = vmatpush1.msra.mxu0 %v1407
        %1951 = vmatprep.subr.mxu0 0.0
        %1952 = vmatpush1.msra.mxu0 %v1408
        %1953 = vmatprep.subr.mxu0 0.0
        %1954 = vmatpush1.msra.mxu0 %v1409
        %1955 = vmatprep.subr.mxu0 0.0
        %1956 = vmatpush1.msra.mxu0 %v1410
        %1957 = vmatprep.subr.mxu0 0.0
        %1958 = vmatpush1.msra.mxu0 %v1411
        %1959 = vmatprep.subr.mxu0 0.0
        %1960 = vmatpush1.msra.mxu0 %v1412
        %1961 = vmatprep.subr.mxu0 0.0
        %1962 = vmatpush1.msra.mxu0 %v1413
        %1963 = vmatprep.subr.mxu0 0.0
        %1964 = vmatpush1.msra.mxu0 %v1414
        %1965 = vmatprep.subr.mxu0 0.0
        %1966 = vmatpush1.msra.mxu0 %v1415
        %1967 = vmatprep.subr.mxu0 0.0
        %1968 = vmatpush1.msra.mxu0 %v1416
        %1969 = vmatprep.subr.mxu0 0.0
        %1970 = vmatpush1.msra.mxu0 %v1417
        %1971 = vmatprep.subr.mxu0 0.0
        %1972 = vmatpush1.msra.mxu0 %v1418
        %1973 = vmatprep.subr.mxu0 0.0
        %1974 = vmatpush1.msra.mxu0 %v1419
        %1975 = vmatprep.subr.mxu0 0.0
        %1976 = vmatpush1.msra.mxu0 %v1420
        %1977 = vmatprep.subr.mxu0 0.0
        %1978 = vmatpush1.msra.mxu0 %v1421
        %1979 = vmatprep.subr.mxu0 0.0
        %1980 = vmatpush1.msra.mxu0 %v1422
        %1981 = vmatprep.subr.mxu0 0.0
        %1982 = vmatpush1.msra.mxu0 %v1423
        %1983 = vmatprep.subr.mxu0 0.0
        %1984 = vmatpush1.msra.mxu0 %v1424
        %1985 = vmatprep.subr.mxu0 0.0
        %1986 = vmatpush1.msra.mxu0 %v1425
        %1987 = vmatprep.subr.mxu0 0.0
        %1988 = vmatpush1.msra.mxu0 %v1426
        %1989 = vmatprep.mubr.f32.mxu0 %v1048
        %1990 = vmatmul.mubr.f32.gmra.mrb[0].mxu0 %v1047
        %v1991 = vpop.f32.mrb[0].mxu0
        %v1992 = vadd.f32 %v1767, %v1991
        %v1993 = vpop.f32.mrb[0].mxu0
        %1994 = vmatprep.mubr.f32.mxu0 %v1057
        %1995 = vmatmul.mubr.f32.gmra.mrb[0].mxu0 %v1056
        %v1996 = vpop.f32.mrb[0].mxu0
        %v1997 = vadd.f32 %v1772, %v1996
        %v1998 = vpop.f32.mrb[0].mxu0
        %1999 = vmatprep.mubr.f32.mxu0 %v1066
        %2000 = vmatmul.mubr.f32.gmra.mrb[0].mxu0 %v1065
        %v2001 = vpop.f32.mrb[0].mxu0
        %v2002 = vadd.f32 %v1777, %v2001
        %v2003 = vpop.f32.mrb[0].mxu0
        %2004 = vmatprep.mubr.f32.mxu0 %v1075
        %2005 = vmatmul.mubr.f32.gmra.mrb[0].mxu0 %v1074
        %v2006 = vpop.f32.mrb[0].mxu0
        %v2007 = vadd.f32 %v1782, %v2006
        %v2008 = vpop.f32.mrb[0].mxu0
        %2009 = vmatprep.mubr.f32.mxu0 %v1084
        %2010 = vmatmul.mubr.f32.gmra.mrb[0].mxu0 %v1083
        %v2011 = vpop.f32.mrb[0].mxu0
        %v2012 = vadd.f32 %v1787, %v2011
        %v2013 = vpop.f32.mrb[0].mxu0
        %2014 = vmatprep.mubr.f32.mxu0 %v1093
        %2015 = vmatmul.mubr.f32.gmra.mrb[0].mxu0 %v1092
        %v2016 = vpop.f32.mrb[0].mxu0
        %v2017 = vadd.f32 %v1792, %v2016
        %v2018 = vpop.f32.mrb[0].mxu0
        %2019 = vmatprep.mubr.f32.mxu0 %v1102
        %2020 = vmatmul.mubr.f32.gmra.mrb[0].mxu0 %v1101
        %v2021 = vpop.f32.mrb[0].mxu0
        %v2022 = vadd.f32 %v1797, %v2021
        %v2023 = vpop.f32.mrb[0].mxu0
        %2024 = vmatprep.mubr.f32.mxu0 %v1111
        %2025 = vmatmul.mubr.f32.gmra.mrb[0].mxu0 %v1110
        %v2026 = vpop.f32.mrb[0].mxu0
        %v2027 = vadd.f32 %v1802, %v2026
        %v2028 = vpop.f32.mrb[0].mxu0
        %2029 = vmatprep.mubr.f32.mxu0 %v1120
        %2030 = vmatmul.mubr.f32.gmra.mrb[0].mxu0 %v1119
        %v2031 = vpop.f32.mrb[0].mxu0
        %v2032 = vadd.f32 %v1807, %v2031
        %v2033 = vpop.f32.mrb[0].mxu0
        %2034 = vmatprep.mubr.f32.mxu0 %v1129
        %2035 = vmatmul.mubr.f32.gmra.mrb[0].mxu0 %v1128
        %v2036 = vpop.f32.mrb[0].mxu0
        %v2037 = vadd.f32 %v1812, %v2036
        %v2038 = vpop.f32.mrb[0].mxu0
        %2039 = vmatprep.mubr.f32.mxu0 %v1138
        %2040 = vmatmul.mubr.f32.gmra.mrb[0].mxu0 %v1137
        %v2041 = vpop.f32.mrb[0].mxu0
        %v2042 = vadd.f32 %v1817, %v2041
        %v2043 = vpop.f32.mrb[0].mxu0
        %2044 = vmatprep.mubr.f32.mxu0 %v1147
        %2045 = vmatmul.mubr.f32.gmra.mrb[0].mxu0 %v1146
        %v2046 = vpop.f32.mrb[0].mxu0
        %v2047 = vadd.f32 %v1822, %v2046
        %v2048 = vpop.f32.mrb[0].mxu0
        %2049 = vmatprep.mubr.f32.mxu0 %v1156
        %2050 = vmatmul.mubr.f32.gmra.mrb[0].mxu0 %v1155
        %v2051 = vpop.f32.mrb[0].mxu0
        %v2052 = vadd.f32 %v1827, %v2051
        %v2053 = vpop.f32.mrb[0].mxu0
        %2054 = vmatprep.mubr.f32.mxu0 %v1165
        %2055 = vmatmul.mubr.f32.gmra.mrb[0].mxu0 %v1164
        %v2056 = vpop.f32.mrb[0].mxu0
        %v2057 = vadd.f32 %v1832, %v2056
        %v2058 = vpop.f32.mrb[0].mxu0
        %2059 = vmatprep.mubr.f32.mxu0 %v1174
        %2060 = vmatmul.mubr.f32.gmra.mrb[0].mxu0 %v1173
        %v2061 = vpop.f32.mrb[0].mxu0
        %v2062 = vadd.f32 %v1837, %v2061
        %v2063 = vpop.f32.mrb[0].mxu0
        %2064 = vmatprep.mubr.f32.mxu0 %v1183
        %2065 = vmatmul.mubr.f32.gmra.mrb[0].mxu0 %v1182
        %v2066 = vpop.f32.mrb[0].mxu0
        %v2067 = vadd.f32 %v1842, %v2066
        %v2068 = vpop.f32.mrb[0].mxu0
        %2069 = vmatprep.mubr.f32.mxu0 %v1192
        %2070 = vmatmul.mubr.f32.gmra.mrb[0].mxu0 %v1191
        %v2071 = vpop.f32.mrb[0].mxu0
        %v2072 = vadd.f32 %v1847, %v2071
        %v2073 = vpop.f32.mrb[0].mxu0
        %2074 = vmatprep.mubr.f32.mxu0 %v1201
        %2075 = vmatmul.mubr.f32.gmra.mrb[0].mxu0 %v1200
        %v2076 = vpop.f32.mrb[0].mxu0
        %v2077 = vadd.f32 %v1852, %v2076
        %v2078 = vpop.f32.mrb[0].mxu0
        %2079 = vmatprep.mubr.f32.mxu0 %v1210
        %2080 = vmatmul.mubr.f32.gmra.mrb[0].mxu0 %v1209
        %v2081 = vpop.f32.mrb[0].mxu0
        %v2082 = vadd.f32 %v1857, %v2081
        %v2083 = vpop.f32.mrb[0].mxu0
        %2084 = vmatprep.mubr.f32.mxu0 %v1219
        %2085 = vmatmul.mubr.f32.gmra.mrb[0].mxu0 %v1218
        %v2086 = vpop.f32.mrb[0].mxu0
        %v2087 = vadd.f32 %v1862, %v2086
        %v2088 = vpop.f32.mrb[0].mxu0
        %2089 = vmatprep.mubr.f32.mxu0 %v1228
        %2090 = vmatmul.mubr.f32.gmra.mrb[0].mxu0 %v1227
        %v2091 = vpop.f32.mrb[0].mxu0
        %v2092 = vadd.f32 %v1867, %v2091
        %v2093 = vpop.f32.mrb[0].mxu0
        %2094 = vmatprep.mubr.f32.mxu0 %v1237
        %2095 = vmatmul.mubr.f32.gmra.mrb[0].mxu0 %v1236
        %v2096 = vpop.f32.mrb[0].mxu0
        %v2097 = vadd.f32 %v1872, %v2096
        %v2098 = vpop.f32.mrb[0].mxu0
        %2099 = vmatprep.mubr.f32.mxu0 %v1246
        %2100 = vmatmul.mubr.f32.gmra.mrb[0].mxu0 %v1245
        %v2101 = vpop.f32.mrb[0].mxu0
        %v2102 = vadd.f32 %v1877, %v2101
        %v2103 = vpop.f32.mrb[0].mxu0
        %2104 = vmatprep.mubr.f32.mxu0 %v1255
        %2105 = vmatmul.mubr.f32.gmra.mrb[0].mxu0 %v1254
        %v2106 = vpop.f32.mrb[0].mxu0
        %v2107 = vadd.f32 %v1882, %v2106
        %v2108 = vpop.f32.mrb[0].mxu0
        %2109 = vmatprep.mubr.f32.mxu0 %v1264
        %2110 = vmatmul.mubr.f32.gmra.mrb[0].mxu0 %v1263
        %v2111 = vpop.f32.mrb[0].mxu0
        %v2112 = vadd.f32 %v1887, %v2111
        %v2113 = vpop.f32.mrb[0].mxu0
        %2114 = vmatprep.mubr.f32.mxu0 %v1273
        %2115 = vmatmul.mubr.f32.gmra.mrb[0].mxu0 %v1272
        %v2116 = vpop.f32.mrb[0].mxu0
        %v2117 = vadd.f32 %v1892, %v2116
        %v2118 = vpop.f32.mrb[0].mxu0
        %2119 = vmatprep.mubr.f32.mxu0 %v1282
        %2120 = vmatmul.mubr.f32.gmra.mrb[0].mxu0 %v1281
        %v2121 = vpop.f32.mrb[0].mxu0
        %v2122 = vadd.f32 %v1897, %v2121
        %v2123 = vpop.f32.mrb[0].mxu0
        %2124 = vmatprep.mubr.f32.mxu0 %v1291
        %2125 = vmatmul.mubr.f32.gmra.mrb[0].mxu0 %v1290
        %v2126 = vpop.f32.mrb[0].mxu0
        %v2127 = vadd.f32 %v1902, %v2126
        %v2128 = vpop.f32.mrb[0].mxu0
        %2129 = vmatprep.mubr.f32.mxu0 %v1300
        %2130 = vmatmul.mubr.f32.gmra.mrb[0].mxu0 %v1299
        %v2131 = vpop.f32.mrb[0].mxu0
        %v2132 = vadd.f32 %v1907, %v2131
        %v2133 = vpop.f32.mrb[0].mxu0
        %2134 = vmatprep.mubr.f32.mxu0 %v1309
        %2135 = vmatmul.mubr.f32.gmra.mrb[0].mxu0 %v1308
        %v2136 = vpop.f32.mrb[0].mxu0
        %v2137 = vadd.f32 %v1912, %v2136
        %v2138 = vpop.f32.mrb[0].mxu0
        %2139 = vmatprep.mubr.f32.mxu0 %v1318
        %2140 = vmatmul.mubr.f32.gmra.mrb[0].mxu0 %v1317
        %v2141 = vpop.f32.mrb[0].mxu0
        %v2142 = vadd.f32 %v1917, %v2141
        %v2143 = vpop.f32.mrb[0].mxu0
        %2144 = vmatprep.mubr.f32.mxu0 %v1327
        %2145 = vmatmul.mubr.f32.gmra.mrb[0].mxu0 %v1326
        %v2146 = vpop.f32.mrb[0].mxu0
        %v2147 = vadd.f32 %v1922, %v2146
        %v2148 = vpop.f32.mrb[0].mxu0
        %2149 = vdwg.mxu0
        %2150 = vmatprep.subr.mxu0 0.0
        %2151 = vmatpush1.msra.mxu0 %v1427
        %2152 = vmatprep.subr.mxu0 0.0
        %2153 = vmatpush1.msra.mxu0 %v1428
        %2154 = vmatprep.subr.mxu0 0.0
        %2155 = vmatpush1.msra.mxu0 %v1429
        %2156 = vmatprep.subr.mxu0 0.0
        %2157 = vmatpush1.msra.mxu0 %v1430
        %2158 = vmatprep.subr.mxu0 0.0
        %2159 = vmatpush1.msra.mxu0 %v1431
        %2160 = vmatprep.subr.mxu0 0.0
        %2161 = vmatpush1.msra.mxu0 %v1432
        %2162 = vmatprep.subr.mxu0 0.0
        %2163 = vmatpush1.msra.mxu0 %v1433
        %2164 = vmatprep.subr.mxu0 0.0
        %2165 = vmatpush1.msra.mxu0 %v1434
        %2166 = vmatprep.subr.mxu0 0.0
        %2167 = vmatpush1.msra.mxu0 %v1435
        %2168 = vmatprep.subr.mxu0 0.0
        %2169 = vmatpush1.msra.mxu0 %v1436
        %2170 = vmatprep.subr.mxu0 0.0
        %2171 = vmatpush1.msra.mxu0 %v1437
        %2172 = vmatprep.subr.mxu0 0.0
        %2173 = vmatpush1.msra.mxu0 %v1438
        %2174 = vmatprep.subr.mxu0 0.0
        %2175 = vmatpush1.msra.mxu0 %v1439
        %2176 = vmatprep.subr.mxu0 0.0
        %2177 = vmatpush1.msra.mxu0 %v1440
        %2178 = vmatprep.subr.mxu0 0.0
        %2179 = vmatpush1.msra.mxu0 %v1441
        %2180 = vmatprep.subr.mxu0 0.0
        %2181 = vmatpush1.msra.mxu0 %v1442
        %2182 = vmatprep.subr.mxu0 0.0
        %2183 = vmatpush1.msra.mxu0 %v1443
        %2184 = vmatprep.subr.mxu0 0.0
        %2185 = vmatpush1.msra.mxu0 %v1444
        %2186 = vmatprep.subr.mxu0 0.0
        %2187 = vmatpush1.msra.mxu0 %v1445
        %2188 = vmatprep.subr.mxu0 0.0
        %2189 = vmatpush1.msra.mxu0 %v1446
        %2190 = vmatprep.subr.mxu0 0.0
        %2191 = vmatpush1.msra.mxu0 %v1447
        %2192 = vmatprep.subr.mxu0 0.0
        %2193 = vmatpush1.msra.mxu0 %v1448
        %2194 = vmatprep.subr.mxu0 0.0
        %2195 = vmatpush1.msra.mxu0 %v1449
        %2196 = vmatprep.subr.mxu0 0.0
        %2197 = vmatpush1.msra.mxu0 %v1450
        %2198 = vmatprep.subr.mxu0 0.0
        %2199 = vmatpush1.msra.mxu0 %v1451
        %2200 = vmatprep.subr.mxu0 0.0
        %2201 = vmatpush1.msra.mxu0 %v1452
        %2202 = vmatprep.subr.mxu0 0.0
        %2203 = vmatpush1.msra.mxu0 %v1453
        %2204 = vmatprep.subr.mxu0 0.0
        %2205 = vmatpush1.msra.mxu0 %v1454
        %2206 = vmatprep.subr.mxu0 0.0
        %2207 = vmatpush1.msra.mxu0 %v1455
        %2208 = vmatprep.subr.mxu0 0.0
        %2209 = vmatpush1.msra.mxu0 %v1456
        %2210 = vmatprep.subr.mxu0 0.0
        %2211 = vmatpush1.msra.mxu0 %v1457
        %2212 = vmatprep.subr.mxu0 0.0
        %2213 = vmatpush1.msra.mxu0 %v1458
        %2214 = vmatprep.mubr.f32.mxu0 %v1050
        %2215 = vmatmul.mubr.f32.gmra.mrb[0].mxu0 %v1049
        %v2216 = vpop.f32.mrb[0].mxu0
        %v2217 = vadd.f32 %v1992, %v2216
        %v2218 = vpop.f32.mrb[0].mxu0
        %2219 = vmatprep.mubr.f32.mxu0 %v1059
        %2220 = vmatmul.mubr.f32.gmra.mrb[0].mxu0 %v1058
        %v2221 = vpop.f32.mrb[0].mxu0
        %v2222 = vadd.f32 %v1997, %v2221
        %v2223 = vpop.f32.mrb[0].mxu0
        %2224 = vmatprep.mubr.f32.mxu0 %v1068
        %2225 = vmatmul.mubr.f32.gmra.mrb[0].mxu0 %v1067
        %v2226 = vpop.f32.mrb[0].mxu0
        %v2227 = vadd.f32 %v2002, %v2226
        %v2228 = vpop.f32.mrb[0].mxu0
        %2229 = vmatprep.mubr.f32.mxu0 %v1077
        %2230 = vmatmul.mubr.f32.gmra.mrb[0].mxu0 %v1076
        %v2231 = vpop.f32.mrb[0].mxu0
        %v2232 = vadd.f32 %v2007, %v2231
        %v2233 = vpop.f32.mrb[0].mxu0
        %2234 = vmatprep.mubr.f32.mxu0 %v1086
        %2235 = vmatmul.mubr.f32.gmra.mrb[0].mxu0 %v1085
        %v2236 = vpop.f32.mrb[0].mxu0
        %v2237 = vadd.f32 %v2012, %v2236
        %v2238 = vpop.f32.mrb[0].mxu0
        %2239 = vmatprep.mubr.f32.mxu0 %v1095
        %2240 = vmatmul.mubr.f32.gmra.mrb[0].mxu0 %v1094
        %v2241 = vpop.f32.mrb[0].mxu0
        %v2242 = vadd.f32 %v2017, %v2241
        %v2243 = vpop.f32.mrb[0].mxu0
        %2244 = vmatprep.mubr.f32.mxu0 %v1104
        %2245 = vmatmul.mubr.f32.gmra.mrb[0].mxu0 %v1103
        %v2246 = vpop.f32.mrb[0].mxu0
        %v2247 = vadd.f32 %v2022, %v2246
        %v2248 = vpop.f32.mrb[0].mxu0
        %2249 = vmatprep.mubr.f32.mxu0 %v1113
        %2250 = vmatmul.mubr.f32.gmra.mrb[0].mxu0 %v1112
        %v2251 = vpop.f32.mrb[0].mxu0
        %v2252 = vadd.f32 %v2027, %v2251
        %v2253 = vpop.f32.mrb[0].mxu0
        %2254 = vmatprep.mubr.f32.mxu0 %v1122
        %2255 = vmatmul.mubr.f32.gmra.mrb[0].mxu0 %v1121
        %v2256 = vpop.f32.mrb[0].mxu0
        %v2257 = vadd.f32 %v2032, %v2256
        %v2258 = vpop.f32.mrb[0].mxu0
        %2259 = vmatprep.mubr.f32.mxu0 %v1131
        %2260 = vmatmul.mubr.f32.gmra.mrb[0].mxu0 %v1130
        %v2261 = vpop.f32.mrb[0].mxu0
        %v2262 = vadd.f32 %v2037, %v2261
        %v2263 = vpop.f32.mrb[0].mxu0
        %2264 = vmatprep.mubr.f32.mxu0 %v1140
        %2265 = vmatmul.mubr.f32.gmra.mrb[0].mxu0 %v1139
        %v2266 = vpop.f32.mrb[0].mxu0
        %v2267 = vadd.f32 %v2042, %v2266
        %v2268 = vpop.f32.mrb[0].mxu0
        %2269 = vmatprep.mubr.f32.mxu0 %v1149
        %2270 = vmatmul.mubr.f32.gmra.mrb[0].mxu0 %v1148
        %v2271 = vpop.f32.mrb[0].mxu0
        %v2272 = vadd.f32 %v2047, %v2271
        %v2273 = vpop.f32.mrb[0].mxu0
        %2274 = vmatprep.mubr.f32.mxu0 %v1158
        %2275 = vmatmul.mubr.f32.gmra.mrb[0].mxu0 %v1157
        %v2276 = vpop.f32.mrb[0].mxu0
        %v2277 = vadd.f32 %v2052, %v2276
        %v2278 = vpop.f32.mrb[0].mxu0
        %2279 = vmatprep.mubr.f32.mxu0 %v1167
        %2280 = vmatmul.mubr.f32.gmra.mrb[0].mxu0 %v1166
        %v2281 = vpop.f32.mrb[0].mxu0
        %v2282 = vadd.f32 %v2057, %v2281
        %v2283 = vpop.f32.mrb[0].mxu0
        %2284 = vmatprep.mubr.f32.mxu0 %v1176
        %2285 = vmatmul.mubr.f32.gmra.mrb[0].mxu0 %v1175
        %v2286 = vpop.f32.mrb[0].mxu0
        %v2287 = vadd.f32 %v2062, %v2286
        %v2288 = vpop.f32.mrb[0].mxu0
        %2289 = vmatprep.mubr.f32.mxu0 %v1185
        %2290 = vmatmul.mubr.f32.gmra.mrb[0].mxu0 %v1184
        %v2291 = vpop.f32.mrb[0].mxu0
        %v2292 = vadd.f32 %v2067, %v2291
        %v2293 = vpop.f32.mrb[0].mxu0
        %2294 = vmatprep.mubr.f32.mxu0 %v1194
        %2295 = vmatmul.mubr.f32.gmra.mrb[0].mxu0 %v1193
        %v2296 = vpop.f32.mrb[0].mxu0
        %v2297 = vadd.f32 %v2072, %v2296
        %v2298 = vpop.f32.mrb[0].mxu0
        %2299 = vmatprep.mubr.f32.mxu0 %v1203
        %2300 = vmatmul.mubr.f32.gmra.mrb[0].mxu0 %v1202
        %v2301 = vpop.f32.mrb[0].mxu0
        %v2302 = vadd.f32 %v2077, %v2301
        %v2303 = vpop.f32.mrb[0].mxu0
        %2304 = vmatprep.mubr.f32.mxu0 %v1212
        %2305 = vmatmul.mubr.f32.gmra.mrb[0].mxu0 %v1211
        %v2306 = vpop.f32.mrb[0].mxu0
        %v2307 = vadd.f32 %v2082, %v2306
        %v2308 = vpop.f32.mrb[0].mxu0
        %2309 = vmatprep.mubr.f32.mxu0 %v1221
        %2310 = vmatmul.mubr.f32.gmra.mrb[0].mxu0 %v1220
        %v2311 = vpop.f32.mrb[0].mxu0
        %v2312 = vadd.f32 %v2087, %v2311
        %v2313 = vpop.f32.mrb[0].mxu0
        %2314 = vmatprep.mubr.f32.mxu0 %v1230
        %2315 = vmatmul.mubr.f32.gmra.mrb[0].mxu0 %v1229
        %v2316 = vpop.f32.mrb[0].mxu0
        %v2317 = vadd.f32 %v2092, %v2316
        %v2318 = vpop.f32.mrb[0].mxu0
        %2319 = vmatprep.mubr.f32.mxu0 %v1239
        %2320 = vmatmul.mubr.f32.gmra.mrb[0].mxu0 %v1238
        %v2321 = vpop.f32.mrb[0].mxu0
        %v2322 = vadd.f32 %v2097, %v2321
        %v2323 = vpop.f32.mrb[0].mxu0
        %2324 = vmatprep.mubr.f32.mxu0 %v1248
        %2325 = vmatmul.mubr.f32.gmra.mrb[0].mxu0 %v1247
        %v2326 = vpop.f32.mrb[0].mxu0
        %v2327 = vadd.f32 %v2102, %v2326
        %v2328 = vpop.f32.mrb[0].mxu0
        %2329 = vmatprep.mubr.f32.mxu0 %v1257
        %2330 = vmatmul.mubr.f32.gmra.mrb[0].mxu0 %v1256
        %v2331 = vpop.f32.mrb[0].mxu0
        %v2332 = vadd.f32 %v2107, %v2331
        %v2333 = vpop.f32.mrb[0].mxu0
        %2334 = vmatprep.mubr.f32.mxu0 %v1266
        %2335 = vmatmul.mubr.f32.gmra.mrb[0].mxu0 %v1265
        %v2336 = vpop.f32.mrb[0].mxu0
        %v2337 = vadd.f32 %v2112, %v2336
        %v2338 = vpop.f32.mrb[0].mxu0
        %2339 = vmatprep.mubr.f32.mxu0 %v1275
        %2340 = vmatmul.mubr.f32.gmra.mrb[0].mxu0 %v1274
        %v2341 = vpop.f32.mrb[0].mxu0
        %v2342 = vadd.f32 %v2117, %v2341
        %v2343 = vpop.f32.mrb[0].mxu0
        %2344 = vmatprep.mubr.f32.mxu0 %v1284
        %2345 = vmatmul.mubr.f32.gmra.mrb[0].mxu0 %v1283
        %v2346 = vpop.f32.mrb[0].mxu0
        %v2347 = vadd.f32 %v2122, %v2346
        %v2348 = vpop.f32.mrb[0].mxu0
        %2349 = vmatprep.mubr.f32.mxu0 %v1293
        %2350 = vmatmul.mubr.f32.gmra.mrb[0].mxu0 %v1292
        %v2351 = vpop.f32.mrb[0].mxu0
        %v2352 = vadd.f32 %v2127, %v2351
        %v2353 = vpop.f32.mrb[0].mxu0
        %2354 = vmatprep.mubr.f32.mxu0 %v1302
        %2355 = vmatmul.mubr.f32.gmra.mrb[0].mxu0 %v1301
        %v2356 = vpop.f32.mrb[0].mxu0
        %v2357 = vadd.f32 %v2132, %v2356
        %v2358 = vpop.f32.mrb[0].mxu0
        %2359 = vmatprep.mubr.f32.mxu0 %v1311
        %2360 = vmatmul.mubr.f32.gmra.mrb[0].mxu0 %v1310
        %v2361 = vpop.f32.mrb[0].mxu0
        %v2362 = vadd.f32 %v2137, %v2361
        %v2363 = vpop.f32.mrb[0].mxu0
        %2364 = vmatprep.mubr.f32.mxu0 %v1320
        %2365 = vmatmul.mubr.f32.gmra.mrb[0].mxu0 %v1319
        %v2366 = vpop.f32.mrb[0].mxu0
        %v2367 = vadd.f32 %v2142, %v2366
        %v2368 = vpop.f32.mrb[0].mxu0
        %2369 = vmatprep.mubr.f32.mxu0 %v1329
        %2370 = vmatmul.mubr.f32.gmra.mrb[0].mxu0 %v1328
        %v2371 = vpop.f32.mrb[0].mxu0
        %v2372 = vadd.f32 %v2147, %v2371
        %v2373 = vpop.f32.mrb[0].mxu0
        %2374 = vdwg.mxu0
        %2375 = vmatprep.subr.mxu0 0.0
        %2376 = vmatpush1.msra.mxu0 %v1459
        %2377 = vmatprep.subr.mxu0 0.0
        %2378 = vmatpush1.msra.mxu0 %v1460
        %2379 = vmatprep.subr.mxu0 0.0
        %2380 = vmatpush1.msra.mxu0 %v1461
        %2381 = vmatprep.subr.mxu0 0.0
        %2382 = vmatpush1.msra.mxu0 %v1462
        %2383 = vmatprep.subr.mxu0 0.0
        %2384 = vmatpush1.msra.mxu0 %v1463
        %2385 = vmatprep.subr.mxu0 0.0
        %2386 = vmatpush1.msra.mxu0 %v1464
        %2387 = vmatprep.subr.mxu0 0.0
        %2388 = vmatpush1.msra.mxu0 %v1465
        %2389 = vmatprep.subr.mxu0 0.0
        %2390 = vmatpush1.msra.mxu0 %v1466
        %2391 = vmatprep.subr.mxu0 0.0
        %2392 = vmatpush1.msra.mxu0 %v1467
        %2393 = vmatprep.subr.mxu0 0.0
        %2394 = vmatpush1.msra.mxu0 %v1468
        %2395 = vmatprep.subr.mxu0 0.0
        %2396 = vmatpush1.msra.mxu0 %v1469
        %2397 = vmatprep.subr.mxu0 0.0
        %2398 = vmatpush1.msra.mxu0 %v1470
        %2399 = vmatprep.subr.mxu0 0.0
        %2400 = vmatpush1.msra.mxu0 %v1471
        %2401 = vmatprep.subr.mxu0 0.0
        %2402 = vmatpush1.msra.mxu0 %v1472
        %2403 = vmatprep.subr.mxu0 0.0
        %2404 = vmatpush1.msra.mxu0 %v1473
        %2405 = vmatprep.subr.mxu0 0.0
        %2406 = vmatpush1.msra.mxu0 %v1474
        %2407 = vmatprep.subr.mxu0 0.0
        %2408 = vmatpush1.msra.mxu0 0.0
        %2409 = vmatprep.subr.mxu0 0.0
        %2410 = vmatpush1.msra.mxu0 0.0
        %2411 = vmatprep.subr.mxu0 0.0
        %2412 = vmatpush1.msra.mxu0 0.0
        %2413 = vmatprep.subr.mxu0 0.0
        %2414 = vmatpush1.msra.mxu0 0.0
        %2415 = vmatprep.subr.mxu0 0.0
        %2416 = vmatpush1.msra.mxu0 0.0
        %2417 = vmatprep.subr.mxu0 0.0
        %2418 = vmatpush1.msra.mxu0 0.0
        %2419 = vmatprep.subr.mxu0 0.0
        %2420 = vmatpush1.msra.mxu0 0.0
        %2421 = vmatprep.subr.mxu0 0.0
        %2422 = vmatpush1.msra.mxu0 0.0
        %2423 = vmatprep.subr.mxu0 0.0
        %2424 = vmatpush1.msra.mxu0 0.0
        %2425 = vmatprep.subr.mxu0 0.0
        %2426 = vmatpush1.msra.mxu0 0.0
        %2427 = vmatprep.subr.mxu0 0.0
        %2428 = vmatpush1.msra.mxu0 0.0
        %2429 = vmatprep.subr.mxu0 0.0
        %2430 = vmatpush1.msra.mxu0 0.0
        %2431 = vmatprep.subr.mxu0 0.0
        %2432 = vmatpush1.msra.mxu0 0.0
        %2433 = vmatprep.subr.mxu0 0.0
        %2434 = vmatpush1.msra.mxu0 0.0
        %2435 = vmatprep.subr.mxu0 0.0
        %2436 = vmatpush1.msra.mxu0 0.0
        %2437 = vmatprep.subr.mxu0 0.0
        %2438 = vmatpush1.msra.mxu0 0.0
        %2439 = vmatprep.mubr.f32.mxu0 0.0
        %2440 = vmatmul.mubr.f32.gmra.mrb[0].mxu0 %v1051
        %v2441 = vpop.f32.mrb[0].mxu0
        %v2442 = vadd.f32 %v2217, %v2441
        %v2443 = vpop.f32.mrb[0].mxu0
        %2444 = vmatprep.mubr.f32.mxu0 0.0
        %2445 = vmatmul.mubr.f32.gmra.mrb[0].mxu0 %v1060
        %v2446 = vpop.f32.mrb[0].mxu0
        %v2447 = vadd.f32 %v2222, %v2446
        %v2448 = vpop.f32.mrb[0].mxu0
        %2449 = vmatprep.mubr.f32.mxu0 0.0
        %2450 = vmatmul.mubr.f32.gmra.mrb[0].mxu0 %v1069
        %v2451 = vpop.f32.mrb[0].mxu0
        %v2452 = vadd.f32 %v2227, %v2451
        %v2453 = vpop.f32.mrb[0].mxu0
        %2454 = vmatprep.mubr.f32.mxu0 0.0
        %2455 = vmatmul.mubr.f32.gmra.mrb[0].mxu0 %v1078
        %v2456 = vpop.f32.mrb[0].mxu0
        %v2457 = vadd.f32 %v2232, %v2456
        %v2458 = vpop.f32.mrb[0].mxu0
        %2459 = vmatprep.mubr.f32.mxu0 0.0
        %2460 = vmatmul.mubr.f32.gmra.mrb[0].mxu0 %v1087
        %v2461 = vpop.f32.mrb[0].mxu0
        %v2462 = vadd.f32 %v2237, %v2461
        %v2463 = vpop.f32.mrb[0].mxu0
        %2464 = vmatprep.mubr.f32.mxu0 0.0
        %2465 = vmatmul.mubr.f32.gmra.mrb[0].mxu0 %v1096
        %v2466 = vpop.f32.mrb[0].mxu0
        %v2467 = vadd.f32 %v2242, %v2466
        %v2468 = vpop.f32.mrb[0].mxu0
        %2469 = vmatprep.mubr.f32.mxu0 0.0
        %2470 = vmatmul.mubr.f32.gmra.mrb[0].mxu0 %v1105
        %v2471 = vpop.f32.mrb[0].mxu0
        %v2472 = vadd.f32 %v2247, %v2471
        %v2473 = vpop.f32.mrb[0].mxu0
        %2474 = vmatprep.mubr.f32.mxu0 0.0
        %2475 = vmatmul.mubr.f32.gmra.mrb[0].mxu0 %v1114
        %v2476 = vpop.f32.mrb[0].mxu0
        %v2477 = vadd.f32 %v2252, %v2476
        %v2478 = vpop.f32.mrb[0].mxu0
        %2479 = vmatprep.mubr.f32.mxu0 0.0
        %2480 = vmatmul.mubr.f32.gmra.mrb[0].mxu0 %v1123
        %v2481 = vpop.f32.mrb[0].mxu0
        %v2482 = vadd.f32 %v2257, %v2481
        %v2483 = vpop.f32.mrb[0].mxu0
        %2484 = vmatprep.mubr.f32.mxu0 0.0
        %2485 = vmatmul.mubr.f32.gmra.mrb[0].mxu0 %v1132
        %v2486 = vpop.f32.mrb[0].mxu0
        %v2487 = vadd.f32 %v2262, %v2486
        %v2488 = vpop.f32.mrb[0].mxu0
        %2489 = vmatprep.mubr.f32.mxu0 0.0
        %2490 = vmatmul.mubr.f32.gmra.mrb[0].mxu0 %v1141
        %v2491 = vpop.f32.mrb[0].mxu0
        %v2492 = vadd.f32 %v2267, %v2491
        %v2493 = vpop.f32.mrb[0].mxu0
        %2494 = vmatprep.mubr.f32.mxu0 0.0
        %2495 = vmatmul.mubr.f32.gmra.mrb[0].mxu0 %v1150
        %v2496 = vpop.f32.mrb[0].mxu0
        %v2497 = vadd.f32 %v2272, %v2496
        %v2498 = vpop.f32.mrb[0].mxu0
        %2499 = vmatprep.mubr.f32.mxu0 0.0
        %2500 = vmatmul.mubr.f32.gmra.mrb[0].mxu0 %v1159
        %v2501 = vpop.f32.mrb[0].mxu0
        %v2502 = vadd.f32 %v2277, %v2501
        %v2503 = vpop.f32.mrb[0].mxu0
        %2504 = vmatprep.mubr.f32.mxu0 0.0
        %2505 = vmatmul.mubr.f32.gmra.mrb[0].mxu0 %v1168
        %v2506 = vpop.f32.mrb[0].mxu0
        %v2507 = vadd.f32 %v2282, %v2506
        %v2508 = vpop.f32.mrb[0].mxu0
        %2509 = vmatprep.mubr.f32.mxu0 0.0
        %2510 = vmatmul.mubr.f32.gmra.mrb[0].mxu0 %v1177
        %v2511 = vpop.f32.mrb[0].mxu0
        %v2512 = vadd.f32 %v2287, %v2511
        %v2513 = vpop.f32.mrb[0].mxu0
        %2514 = vmatprep.mubr.f32.mxu0 0.0
        %2515 = vmatmul.mubr.f32.gmra.mrb[0].mxu0 %v1186
        %v2516 = vpop.f32.mrb[0].mxu0
        %v2517 = vadd.f32 %v2292, %v2516
        %v2518 = vpop.f32.mrb[0].mxu0
        %2519 = vmatprep.mubr.f32.mxu0 0.0
        %2520 = vmatmul.mubr.f32.gmra.mrb[0].mxu0 %v1195
        %v2521 = vpop.f32.mrb[0].mxu0
        %v2522 = vadd.f32 %v2297, %v2521
        %v2523 = vpop.f32.mrb[0].mxu0
        %2524 = vmatprep.mubr.f32.mxu0 0.0
        %2525 = vmatmul.mubr.f32.gmra.mrb[0].mxu0 %v1204
        %v2526 = vpop.f32.mrb[0].mxu0
        %v2527 = vadd.f32 %v2302, %v2526
        %v2528 = vpop.f32.mrb[0].mxu0
        %2529 = vmatprep.mubr.f32.mxu0 0.0
        %2530 = vmatmul.mubr.f32.gmra.mrb[0].mxu0 %v1213
        %v2531 = vpop.f32.mrb[0].mxu0
        %v2532 = vadd.f32 %v2307, %v2531
        %v2533 = vpop.f32.mrb[0].mxu0
        %2534 = vmatprep.mubr.f32.mxu0 0.0
        %2535 = vmatmul.mubr.f32.gmra.mrb[0].mxu0 %v1222
        %v2536 = vpop.f32.mrb[0].mxu0
        %v2537 = vadd.f32 %v2312, %v2536
        %v2538 = vpop.f32.mrb[0].mxu0
        %2539 = vmatprep.mubr.f32.mxu0 0.0
        %2540 = vmatmul.mubr.f32.gmra.mrb[0].mxu0 %v1231
        %v2541 = vpop.f32.mrb[0].mxu0
        %v2542 = vadd.f32 %v2317, %v2541
        %v2543 = vpop.f32.mrb[0].mxu0
        %2544 = vmatprep.mubr.f32.mxu0 0.0
        %2545 = vmatmul.mubr.f32.gmra.mrb[0].mxu0 %v1240
        %v2546 = vpop.f32.mrb[0].mxu0
        %v2547 = vadd.f32 %v2322, %v2546
        %v2548 = vpop.f32.mrb[0].mxu0
        %2549 = vmatprep.mubr.f32.mxu0 0.0
        %2550 = vmatmul.mubr.f32.gmra.mrb[0].mxu0 %v1249
        %v2551 = vpop.f32.mrb[0].mxu0
        %v2552 = vadd.f32 %v2327, %v2551
        %v2553 = vpop.f32.mrb[0].mxu0
        %2554 = vmatprep.mubr.f32.mxu0 0.0
        %2555 = vmatmul.mubr.f32.gmra.mrb[0].mxu0 %v1258
        %v2556 = vpop.f32.mrb[0].mxu0
        %v2557 = vadd.f32 %v2332, %v2556
        %v2558 = vpop.f32.mrb[0].mxu0
        %2559 = vmatprep.mubr.f32.mxu0 0.0
        %2560 = vmatmul.mubr.f32.gmra.mrb[0].mxu0 %v1267
        %v2561 = vpop.f32.mrb[0].mxu0
        %v2562 = vadd.f32 %v2337, %v2561
        %v2563 = vpop.f32.mrb[0].mxu0
        %2564 = vmatprep.mubr.f32.mxu0 0.0
        %2565 = vmatmul.mubr.f32.gmra.mrb[0].mxu0 %v1276
        %v2566 = vpop.f32.mrb[0].mxu0
        %v2567 = vadd.f32 %v2342, %v2566
        %v2568 = vpop.f32.mrb[0].mxu0
        %2569 = vmatprep.mubr.f32.mxu0 0.0
        %2570 = vmatmul.mubr.f32.gmra.mrb[0].mxu0 %v1285
        %v2571 = vpop.f32.mrb[0].mxu0
        %v2572 = vadd.f32 %v2347, %v2571
        %v2573 = vpop.f32.mrb[0].mxu0
        %2574 = vmatprep.mubr.f32.mxu0 0.0
        %2575 = vmatmul.mubr.f32.gmra.mrb[0].mxu0 %v1294
        %v2576 = vpop.f32.mrb[0].mxu0
        %v2577 = vadd.f32 %v2352, %v2576
        %v2578 = vpop.f32.mrb[0].mxu0
        %2579 = vmatprep.mubr.f32.mxu0 0.0
        %2580 = vmatmul.mubr.f32.gmra.mrb[0].mxu0 %v1303
        %v2581 = vpop.f32.mrb[0].mxu0
        %v2582 = vadd.f32 %v2357, %v2581
        %v2583 = vpop.f32.mrb[0].mxu0
        %2584 = vmatprep.mubr.f32.mxu0 0.0
        %2585 = vmatmul.mubr.f32.gmra.mrb[0].mxu0 %v1312
        %v2586 = vpop.f32.mrb[0].mxu0
        %v2587 = vadd.f32 %v2362, %v2586
        %v2588 = vpop.f32.mrb[0].mxu0
        %2589 = vmatprep.mubr.f32.mxu0 0.0
        %2590 = vmatmul.mubr.f32.gmra.mrb[0].mxu0 %v1321
        %v2591 = vpop.f32.mrb[0].mxu0
        %v2592 = vadd.f32 %v2367, %v2591
        %v2593 = vpop.f32.mrb[0].mxu0
        %2594 = vmatprep.mubr.f32.mxu0 0.0
        %2595 = vmatmul.mubr.f32.gmra.mrb[0].mxu0 %v1330
        %v2596 = vpop.f32.mrb[0].mxu0
        %v2597 = vadd.f32 %v2372, %v2596
        %v2598 = vpop.f32.mrb[0].mxu0
        %2599 = vdwg.mxu0
        %v2600 = vld [vmem:[%s2] sm:$0x1]
        %v2602 = vlaneseq
        %v2603 = vshrl.u32 %v2602, 7
        %v2604 = vsub.s32 0, %v2603
        %v2605 = vrot.slane %v2600, %v2604
        %v2607 = vmul.f32 %v2442, %v2605
        %v2608 = vmul.f32 %v2447, %v2605
        %v2609 = vmul.f32 %v2452, %v2605
        %v2610 = vmul.f32 %v2457, %v2605
        %v2611 = vmul.f32 %v2462, %v2605
        %v2612 = vmul.f32 %v2467, %v2605
        %v2613 = vmul.f32 %v2472, %v2605
        %v2614 = vmul.f32 %v2477, %v2605
        %v2615 = vmul.f32 %v2482, %v2605
        %v2616 = vmul.f32 %v2487, %v2605
        %v2617 = vmul.f32 %v2492, %v2605
        %v2618 = vmul.f32 %v2497, %v2605
        %v2619 = vmul.f32 %v2502, %v2605
        %v2620 = vmul.f32 %v2507, %v2605
        %v2621 = vmul.f32 %v2512, %v2605
        %v2622 = vmul.f32 %v2517, %v2605
        %v2623 = vmul.f32 %v2522, %v2605
        %v2624 = vmul.f32 %v2527, %v2605
        %v2625 = vmul.f32 %v2532, %v2605
        %v2626 = vmul.f32 %v2537, %v2605
        %v2627 = vmul.f32 %v2542, %v2605
        %v2628 = vmul.f32 %v2547, %v2605
        %v2629 = vmul.f32 %v2552, %v2605
        %v2630 = vmul.f32 %v2557, %v2605
        %v2631 = vmul.f32 %v2562, %v2605
        %v2632 = vmul.f32 %v2567, %v2605
        %v2633 = vmul.f32 %v2572, %v2605
        %v2634 = vmul.f32 %v2577, %v2605
        %v2635 = vmul.f32 %v2582, %v2605
        %v2636 = vmul.f32 %v2587, %v2605
        %v2637 = vmul.f32 %v2592, %v2605
        %v2638 = vmul.f32 %v2597, %v2605
        %v2639 = vld [vmem:[%s3] sm:$0x1]
        %v2641 = vlaneseq
        %v2642 = vshrl.u32 %v2641, 7
        %v2643 = vsub.s32 0, %v2642
        %v2644 = vrot.slane %v2639, %v2643
        %v2646 = vadd.f32 %v2607, %v2644
        %v2647 = vadd.f32 %v2608, %v2644
        %v2648 = vadd.f32 %v2609, %v2644
        %v2649 = vadd.f32 %v2610, %v2644
        %v2650 = vadd.f32 %v2611, %v2644
        %v2651 = vadd.f32 %v2612, %v2644
        %v2652 = vadd.f32 %v2613, %v2644
        %v2653 = vadd.f32 %v2614, %v2644
        %v2654 = vadd.f32 %v2615, %v2644
        %v2655 = vadd.f32 %v2616, %v2644
        %v2656 = vadd.f32 %v2617, %v2644
        %v2657 = vadd.f32 %v2618, %v2644
        %v2658 = vadd.f32 %v2619, %v2644
        %v2659 = vadd.f32 %v2620, %v2644
        %v2660 = vadd.f32 %v2621, %v2644
        %v2661 = vadd.f32 %v2622, %v2644
        %v2662 = vadd.f32 %v2623, %v2644
        %v2663 = vadd.f32 %v2624, %v2644
        %v2664 = vadd.f32 %v2625, %v2644
        %v2665 = vadd.f32 %v2626, %v2644
        %v2666 = vadd.f32 %v2627, %v2644
        %v2667 = vadd.f32 %v2628, %v2644
        %v2668 = vadd.f32 %v2629, %v2644
        %v2669 = vadd.f32 %v2630, %v2644
        %v2670 = vadd.f32 %v2631, %v2644
        %v2671 = vadd.f32 %v2632, %v2644
        %v2672 = vadd.f32 %v2633, %v2644
        %v2673 = vadd.f32 %v2634, %v2644
        %v2674 = vadd.f32 %v2635, %v2644
        %v2675 = vadd.f32 %v2636, %v2644
        %v2676 = vadd.f32 %v2637, %v2644
        %v2677 = vadd.f32 %v2638, %v2644
        %v2678 = vmax.f32 %v2646, 0.0
        %v2679 = vmax.f32 %v2647, 0.0
        %v2680 = vmax.f32 %v2648, 0.0
        %v2681 = vmax.f32 %v2649, 0.0
        %v2682 = vmax.f32 %v2650, 0.0
        %v2683 = vmax.f32 %v2651, 0.0
        %v2684 = vmax.f32 %v2652, 0.0
        %v2685 = vmax.f32 %v2653, 0.0
        %v2686 = vmax.f32 %v2654, 0.0
        %v2687 = vmax.f32 %v2655, 0.0
        %v2688 = vmax.f32 %v2656, 0.0
        %v2689 = vmax.f32 %v2657, 0.0
        %v2690 = vmax.f32 %v2658, 0.0
        %v2691 = vmax.f32 %v2659, 0.0
        %v2692 = vmax.f32 %v2660, 0.0
        %v2693 = vmax.f32 %v2661, 0.0
        %v2694 = vmax.f32 %v2662, 0.0
        %v2695 = vmax.f32 %v2663, 0.0
        %v2696 = vmax.f32 %v2664, 0.0
        %v2697 = vmax.f32 %v2665, 0.0
        %v2698 = vmax.f32 %v2666, 0.0
        %v2699 = vmax.f32 %v2667, 0.0
        %v2700 = vmax.f32 %v2668, 0.0
        %v2701 = vmax.f32 %v2669, 0.0
        %v2702 = vmax.f32 %v2670, 0.0
        %v2703 = vmax.f32 %v2671, 0.0
        %v2704 = vmax.f32 %v2672, 0.0
        %v2705 = vmax.f32 %v2673, 0.0
        %v2706 = vmax.f32 %v2674, 0.0
        %v2707 = vmax.f32 %v2675, 0.0
        %v2708 = vmax.f32 %v2676, 0.0
        %v2709 = vmax.f32 %v2677, 0.0
        %v2710 = vld [vmem:[#allocation9] sm:$0xff]
        %v2711 = vld [vmem:[#allocation9 + $0x8] sm:$0xff]
        %v2712 = vld [vmem:[#allocation9 + $0x10] sm:$0xff]
        %v2713 = vld [vmem:[#allocation9 + $0x18] sm:$0xff]
        %v2714 = vld [vmem:[#allocation9 + $0x20] sm:$0xff]
        %v2715 = vld [vmem:[#allocation9 + $0x28] sm:$0xff]
        %v2716 = vld [vmem:[#allocation9 + $0x30] sm:$0xff]
        %v2717 = vld [vmem:[#allocation9 + $0x38] sm:$0xff]
        %v2718 = vld [vmem:[#allocation9 + $0x40] sm:$0xff]
        %v2719 = vld [vmem:[#allocation9 + $0x48] sm:$0xff]
        %v2720 = vld [vmem:[#allocation9 + $0x50] sm:$0xff]
        %v2721 = vld [vmem:[#allocation9 + $0x58] sm:$0xff]
        %v2722 = vld [vmem:[#allocation9 + $0x60] sm:$0xff]
        %v2723 = vld [vmem:[#allocation9 + $0x68] sm:$0xff]
        %v2724 = vld [vmem:[#allocation9 + $0x70] sm:$0xff]
        %v2725 = vld [vmem:[#allocation9 + $0x78] sm:$0xff]
        %2726 = vmatprep.subr.mxu0 0.0
        %2727 = vmatpush1.msra.mxu0 %v2710
        %2728 = vmatprep.subr.mxu0 0.0
        %2729 = vmatpush1.msra.mxu0 %v2711
        %2730 = vmatprep.subr.mxu0 0.0
        %2731 = vmatpush1.msra.mxu0 %v2712
        %2732 = vmatprep.subr.mxu0 0.0
        %2733 = vmatpush1.msra.mxu0 %v2713
        %2734 = vmatprep.subr.mxu0 0.0
        %2735 = vmatpush1.msra.mxu0 %v2714
        %2736 = vmatprep.subr.mxu0 0.0
        %2737 = vmatpush1.msra.mxu0 %v2715
        %2738 = vmatprep.subr.mxu0 0.0
        %2739 = vmatpush1.msra.mxu0 %v2716
        %2740 = vmatprep.subr.mxu0 0.0
        %2741 = vmatpush1.msra.mxu0 %v2717
        %2742 = vmatprep.subr.mxu0 0.0
        %2743 = vmatpush1.msra.mxu0 %v2718
        %2744 = vmatprep.subr.mxu0 0.0
        %2745 = vmatpush1.msra.mxu0 %v2719
        %2746 = vmatprep.subr.mxu0 0.0
        %2747 = vmatpush1.msra.mxu0 %v2720
        %2748 = vmatprep.subr.mxu0 0.0
        %2749 = vmatpush1.msra.mxu0 %v2721
        %2750 = vmatprep.subr.mxu0 0.0
        %2751 = vmatpush1.msra.mxu0 %v2722
        %2752 = vmatprep.subr.mxu0 0.0
        %2753 = vmatpush1.msra.mxu0 %v2723
        %2754 = vmatprep.subr.mxu0 0.0
        %2755 = vmatpush1.msra.mxu0 %v2724
        %2756 = vmatprep.subr.mxu0 0.0
        %2757 = vmatpush1.msra.mxu0 %v2725
        %2758 = vmatprep.subr.mxu0 0.0
        %2759 = vmatpush1.msra.mxu0 0.0
        %2760 = vmatprep.subr.mxu0 0.0
        %2761 = vmatpush1.msra.mxu0 0.0
        %2762 = vmatprep.subr.mxu0 0.0
        %2763 = vmatpush1.msra.mxu0 0.0
        %2764 = vmatprep.subr.mxu0 0.0
        %2765 = vmatpush1.msra.mxu0 0.0
        %2766 = vmatprep.subr.mxu0 0.0
        %2767 = vmatpush1.msra.mxu0 0.0
        %2768 = vmatprep.subr.mxu0 0.0
        %2769 = vmatpush1.msra.mxu0 0.0
        %2770 = vmatprep.subr.mxu0 0.0
        %2771 = vmatpush1.msra.mxu0 0.0
        %2772 = vmatprep.subr.mxu0 0.0
        %2773 = vmatpush1.msra.mxu0 0.0
        %2774 = vmatprep.subr.mxu0 0.0
        %2775 = vmatpush1.msra.mxu0 0.0
        %2776 = vmatprep.subr.mxu0 0.0
        %2777 = vmatpush1.msra.mxu0 0.0
        %2778 = vmatprep.subr.mxu0 0.0
        %2779 = vmatpush1.msra.mxu0 0.0
        %2780 = vmatprep.subr.mxu0 0.0
        %2781 = vmatpush1.msra.mxu0 0.0
        %2782 = vmatprep.subr.mxu0 0.0
        %2783 = vmatpush1.msra.mxu0 0.0
        %2784 = vmatprep.subr.mxu0 0.0
        %2785 = vmatpush1.msra.mxu0 0.0
        %2786 = vmatprep.subr.mxu0 0.0
        %2787 = vmatpush1.msra.mxu0 0.0
        %2788 = vmatprep.subr.mxu0 0.0
        %2789 = vmatpush1.msra.mxu0 0.0
        %2790 = vmatprep.mubr.f32.mxu0 0.0
        %2791 = vmatmul.mubr.f32.gmra.mrb[0].mxu0 %v2678
        %v2792 = vpop.f32.mrb[0].mxu0
        %v2793 = vadd.f32 0.0, %v2792
        %v2794 = vpop.f32.mrb[0].mxu0
        %2795 = vmatprep.mubr.f32.mxu0 0.0
        %2796 = vmatmul.mubr.f32.gmra.mrb[0].mxu0 %v2679
        %v2797 = vpop.f32.mrb[0].mxu0
        %v2798 = vadd.f32 0.0, %v2797
        %v2799 = vpop.f32.mrb[0].mxu0
        %2800 = vmatprep.mubr.f32.mxu0 0.0
        %2801 = vmatmul.mubr.f32.gmra.mrb[0].mxu0 %v2680
        %v2802 = vpop.f32.mrb[0].mxu0
        %v2803 = vadd.f32 0.0, %v2802
        %v2804 = vpop.f32.mrb[0].mxu0
        %2805 = vmatprep.mubr.f32.mxu0 0.0
        %2806 = vmatmul.mubr.f32.gmra.mrb[0].mxu0 %v2681
        %v2807 = vpop.f32.mrb[0].mxu0
        %v2808 = vadd.f32 0.0, %v2807
        %v2809 = vpop.f32.mrb[0].mxu0
        %2810 = vmatprep.mubr.f32.mxu0 0.0
        %2811 = vmatmul.mubr.f32.gmra.mrb[0].mxu0 %v2682
        %v2812 = vpop.f32.mrb[0].mxu0
        %v2813 = vadd.f32 0.0, %v2812
        %v2814 = vpop.f32.mrb[0].mxu0
        %2815 = vmatprep.mubr.f32.mxu0 0.0
        %2816 = vmatmul.mubr.f32.gmra.mrb[0].mxu0 %v2683
        %v2817 = vpop.f32.mrb[0].mxu0
        %v2818 = vadd.f32 0.0, %v2817
        %v2819 = vpop.f32.mrb[0].mxu0
        %2820 = vmatprep.mubr.f32.mxu0 0.0
        %2821 = vmatmul.mubr.f32.gmra.mrb[0].mxu0 %v2684
        %v2822 = vpop.f32.mrb[0].mxu0
        %v2823 = vadd.f32 0.0, %v2822
        %v2824 = vpop.f32.mrb[0].mxu0
        %2825 = vmatprep.mubr.f32.mxu0 0.0
        %2826 = vmatmul.mubr.f32.gmra.mrb[0].mxu0 %v2685
        %v2827 = vpop.f32.mrb[0].mxu0
        %v2828 = vadd.f32 0.0, %v2827
        %v2829 = vpop.f32.mrb[0].mxu0
        %2830 = vmatprep.mubr.f32.mxu0 0.0
        %2831 = vmatmul.mubr.f32.gmra.mrb[0].mxu0 %v2686
        %v2832 = vpop.f32.mrb[0].mxu0
        %v2833 = vadd.f32 0.0, %v2832
        %v2834 = vpop.f32.mrb[0].mxu0
        %2835 = vmatprep.mubr.f32.mxu0 0.0
        %2836 = vmatmul.mubr.f32.gmra.mrb[0].mxu0 %v2687
        %v2837 = vpop.f32.mrb[0].mxu0
        %v2838 = vadd.f32 0.0, %v2837
        %v2839 = vpop.f32.mrb[0].mxu0
        %2840 = vmatprep.mubr.f32.mxu0 0.0
        %2841 = vmatmul.mubr.f32.gmra.mrb[0].mxu0 %v2688
        %v2842 = vpop.f32.mrb[0].mxu0
        %v2843 = vadd.f32 0.0, %v2842
        %v2844 = vpop.f32.mrb[0].mxu0
        %2845 = vmatprep.mubr.f32.mxu0 0.0
        %2846 = vmatmul.mubr.f32.gmra.mrb[0].mxu0 %v2689
        %v2847 = vpop.f32.mrb[0].mxu0
        %v2848 = vadd.f32 0.0, %v2847
        %v2849 = vpop.f32.mrb[0].mxu0
        %2850 = vmatprep.mubr.f32.mxu0 0.0
        %2851 = vmatmul.mubr.f32.gmra.mrb[0].mxu0 %v2690
        %v2852 = vpop.f32.mrb[0].mxu0
        %v2853 = vadd.f32 0.0, %v2852
        %v2854 = vpop.f32.mrb[0].mxu0
        %2855 = vmatprep.mubr.f32.mxu0 0.0
        %2856 = vmatmul.mubr.f32.gmra.mrb[0].mxu0 %v2691
        %v2857 = vpop.f32.mrb[0].mxu0
        %v2858 = vadd.f32 0.0, %v2857
        %v2859 = vpop.f32.mrb[0].mxu0
        %2860 = vmatprep.mubr.f32.mxu0 0.0
        %2861 = vmatmul.mubr.f32.gmra.mrb[0].mxu0 %v2692
        %v2862 = vpop.f32.mrb[0].mxu0
        %v2863 = vadd.f32 0.0, %v2862
        %v2864 = vpop.f32.mrb[0].mxu0
        %2865 = vmatprep.mubr.f32.mxu0 0.0
        %2866 = vmatmul.mubr.f32.gmra.mrb[0].mxu0 %v2693
        %v2867 = vpop.f32.mrb[0].mxu0
        %v2868 = vadd.f32 0.0, %v2867
        %v2869 = vpop.f32.mrb[0].mxu0
        %2870 = vmatprep.mubr.f32.mxu0 0.0
        %2871 = vmatmul.mubr.f32.gmra.mrb[0].mxu0 %v2694
        %v2872 = vpop.f32.mrb[0].mxu0
        %v2873 = vadd.f32 0.0, %v2872
        %v2874 = vpop.f32.mrb[0].mxu0
        %2875 = vmatprep.mubr.f32.mxu0 0.0
        %2876 = vmatmul.mubr.f32.gmra.mrb[0].mxu0 %v2695
        %v2877 = vpop.f32.mrb[0].mxu0
        %v2878 = vadd.f32 0.0, %v2877
        %v2879 = vpop.f32.mrb[0].mxu0
        %2880 = vmatprep.mubr.f32.mxu0 0.0
        %2881 = vmatmul.mubr.f32.gmra.mrb[0].mxu0 %v2696
        %v2882 = vpop.f32.mrb[0].mxu0
        %v2883 = vadd.f32 0.0, %v2882
        %v2884 = vpop.f32.mrb[0].mxu0
        %2885 = vmatprep.mubr.f32.mxu0 0.0
        %2886 = vmatmul.mubr.f32.gmra.mrb[0].mxu0 %v2697
        %v2887 = vpop.f32.mrb[0].mxu0
        %v2888 = vadd.f32 0.0, %v2887
        %v2889 = vpop.f32.mrb[0].mxu0
        %2890 = vmatprep.mubr.f32.mxu0 0.0
        %2891 = vmatmul.mubr.f32.gmra.mrb[0].mxu0 %v2698
        %v2892 = vpop.f32.mrb[0].mxu0
        %v2893 = vadd.f32 0.0, %v2892
        %v2894 = vpop.f32.mrb[0].mxu0
        %2895 = vmatprep.mubr.f32.mxu0 0.0
        %2896 = vmatmul.mubr.f32.gmra.mrb[0].mxu0 %v2699
        %v2897 = vpop.f32.mrb[0].mxu0
        %v2898 = vadd.f32 0.0, %v2897
        %v2899 = vpop.f32.mrb[0].mxu0
        %2900 = vmatprep.mubr.f32.mxu0 0.0
        %2901 = vmatmul.mubr.f32.gmra.mrb[0].mxu0 %v2700
        %v2902 = vpop.f32.mrb[0].mxu0
        %v2903 = vadd.f32 0.0, %v2902
        %v2904 = vpop.f32.mrb[0].mxu0
        %2905 = vmatprep.mubr.f32.mxu0 0.0
        %2906 = vmatmul.mubr.f32.gmra.mrb[0].mxu0 %v2701
        %v2907 = vpop.f32.mrb[0].mxu0
        %v2908 = vadd.f32 0.0, %v2907
        %v2909 = vpop.f32.mrb[0].mxu0
        %2910 = vmatprep.mubr.f32.mxu0 0.0
        %2911 = vmatmul.mubr.f32.gmra.mrb[0].mxu0 %v2702
        %v2912 = vpop.f32.mrb[0].mxu0
        %v2913 = vadd.f32 0.0, %v2912
        %v2914 = vpop.f32.mrb[0].mxu0
        %2915 = vmatprep.mubr.f32.mxu0 0.0
        %2916 = vmatmul.mubr.f32.gmra.mrb[0].mxu0 %v2703
        %v2917 = vpop.f32.mrb[0].mxu0
        %v2918 = vadd.f32 0.0, %v2917
        %v2919 = vpop.f32.mrb[0].mxu0
        %2920 = vmatprep.mubr.f32.mxu0 0.0
        %2921 = vmatmul.mubr.f32.gmra.mrb[0].mxu0 %v2704
        %v2922 = vpop.f32.mrb[0].mxu0
        %v2923 = vadd.f32 0.0, %v2922
        %v2924 = vpop.f32.mrb[0].mxu0
        %2925 = vmatprep.mubr.f32.mxu0 0.0
        %2926 = vmatmul.mubr.f32.gmra.mrb[0].mxu0 %v2705
        %v2927 = vpop.f32.mrb[0].mxu0
        %v2928 = vadd.f32 0.0, %v2927
        %v2929 = vpop.f32.mrb[0].mxu0
        %2930 = vmatprep.mubr.f32.mxu0 0.0
        %2931 = vmatmul.mubr.f32.gmra.mrb[0].mxu0 %v2706
        %v2932 = vpop.f32.mrb[0].mxu0
        %v2933 = vadd.f32 0.0, %v2932
        %v2934 = vpop.f32.mrb[0].mxu0
        %2935 = vmatprep.mubr.f32.mxu0 0.0
        %2936 = vmatmul.mubr.f32.gmra.mrb[0].mxu0 %v2707
        %v2937 = vpop.f32.mrb[0].mxu0
        %v2938 = vadd.f32 0.0, %v2937
        %v2939 = vpop.f32.mrb[0].mxu0
        %2940 = vmatprep.mubr.f32.mxu0 0.0
        %2941 = vmatmul.mubr.f32.gmra.mrb[0].mxu0 %v2708
        %v2942 = vpop.f32.mrb[0].mxu0
        %v2943 = vadd.f32 0.0, %v2942
        %v2944 = vpop.f32.mrb[0].mxu0
        %2945 = vmatprep.mubr.f32.mxu0 0.0
        %2946 = vmatmul.mubr.f32.gmra.mrb[0].mxu0 %v2709
        %v2947 = vpop.f32.mrb[0].mxu0
        %v2948 = vadd.f32 0.0, %v2947
        %v2949 = vpop.f32.mrb[0].mxu0
        %2950 = vdwg.mxu0
        %v2951 = vld [vmem:[%s5] sm:$0x1]
        %v2953 = vlaneseq
        %v2954 = vshrl.u32 %v2953, 7
        %v2955 = vsub.s32 0, %v2954
        %v2956 = vrot.slane %v2951, %v2955
        %v2958 = vmul.f32 %v2793, %v2956
        %v2959 = vmul.f32 %v2798, %v2956
        %v2960 = vmul.f32 %v2803, %v2956
        %v2961 = vmul.f32 %v2808, %v2956
        %v2962 = vmul.f32 %v2813, %v2956
        %v2963 = vmul.f32 %v2818, %v2956
        %v2964 = vmul.f32 %v2823, %v2956
        %v2965 = vmul.f32 %v2828, %v2956
        %v2966 = vmul.f32 %v2833, %v2956
        %v2967 = vmul.f32 %v2838, %v2956
        %v2968 = vmul.f32 %v2843, %v2956
        %v2969 = vmul.f32 %v2848, %v2956
        %v2970 = vmul.f32 %v2853, %v2956
        %v2971 = vmul.f32 %v2858, %v2956
        %v2972 = vmul.f32 %v2863, %v2956
        %v2973 = vmul.f32 %v2868, %v2956
        %v2974 = vmul.f32 %v2873, %v2956
        %v2975 = vmul.f32 %v2878, %v2956
        %v2976 = vmul.f32 %v2883, %v2956
        %v2977 = vmul.f32 %v2888, %v2956
        %v2978 = vmul.f32 %v2893, %v2956
        %v2979 = vmul.f32 %v2898, %v2956
        %v2980 = vmul.f32 %v2903, %v2956
        %v2981 = vmul.f32 %v2908, %v2956
        %v2982 = vmul.f32 %v2913, %v2956
        %v2983 = vmul.f32 %v2918, %v2956
        %v2984 = vmul.f32 %v2923, %v2956
        %v2985 = vmul.f32 %v2928, %v2956
        %v2986 = vmul.f32 %v2933, %v2956
        %v2987 = vmul.f32 %v2938, %v2956
        %v2988 = vmul.f32 %v2943, %v2956
        %v2989 = vmul.f32 %v2948, %v2956
        %v2990 = vld [vmem:[%s6] sm:$0x1]
        %v2992 = vlaneseq
        %v2993 = vshrl.u32 %v2992, 7
        %v2994 = vsub.s32 0, %v2993
        %v2995 = vrot.slane %v2990, %v2994
        %v2997 = vadd.f32 %v2958, %v2995
        %v2998 = vadd.f32 %v2959, %v2995
        %v2999 = vadd.f32 %v2960, %v2995
        %v3000 = vadd.f32 %v2961, %v2995
        %v3001 = vadd.f32 %v2962, %v2995
        %v3002 = vadd.f32 %v2963, %v2995
        %v3003 = vadd.f32 %v2964, %v2995
        %v3004 = vadd.f32 %v2965, %v2995
        %v3005 = vadd.f32 %v2966, %v2995
        %v3006 = vadd.f32 %v2967, %v2995
        %v3007 = vadd.f32 %v2968, %v2995
        %v3008 = vadd.f32 %v2969, %v2995
        %v3009 = vadd.f32 %v2970, %v2995
        %v3010 = vadd.f32 %v2971, %v2995
        %v3011 = vadd.f32 %v2972, %v2995
        %v3012 = vadd.f32 %v2973, %v2995
        %v3013 = vadd.f32 %v2974, %v2995
        %v3014 = vadd.f32 %v2975, %v2995
        %v3015 = vadd.f32 %v2976, %v2995
        %v3016 = vadd.f32 %v2977, %v2995
        %v3017 = vadd.f32 %v2978, %v2995
        %v3018 = vadd.f32 %v2979, %v2995
        %v3019 = vadd.f32 %v2980, %v2995
        %v3020 = vadd.f32 %v2981, %v2995
        %v3021 = vadd.f32 %v2982, %v2995
        %v3022 = vadd.f32 %v2983, %v2995
        %v3023 = vadd.f32 %v2984, %v2995
        %v3024 = vadd.f32 %v2985, %v2995
        %v3025 = vadd.f32 %v2986, %v2995
        %v3026 = vadd.f32 %v2987, %v2995
        %v3027 = vadd.f32 %v2988, %v2995
        %v3028 = vadd.f32 %v2989, %v2995
        %v3029 = vld [vmem:[%s287] sm:$0xff]
        %v3030 = vld [vmem:[%s287 + $0x8] sm:$0xff]
        %v3031 = vld [vmem:[%s287 + $0x10] sm:$0xff]
        %v3032 = vld [vmem:[%s287 + $0x18] sm:$0xff]
        %v3033 = vld [vmem:[%s287 + $0x20] sm:$0xff]
        %v3034 = vld [vmem:[%s287 + $0x28] sm:$0xff]
        %v3035 = vld [vmem:[%s287 + $0x30] sm:$0xff]
        %v3036 = vld [vmem:[%s287 + $0x38] sm:$0xff]
        %v3037 = vld [vmem:[%s287 + $0x40] sm:$0xff]
        %v3038 = vld [vmem:[%s287 + $0x48] sm:$0xff]
        %v3039 = vld [vmem:[%s287 + $0x50] sm:$0xff]
        %v3040 = vld [vmem:[%s287 + $0x58] sm:$0xff]
        %v3041 = vld [vmem:[%s287 + $0x60] sm:$0xff]
        %v3042 = vld [vmem:[%s287 + $0x68] sm:$0xff]
        %v3043 = vld [vmem:[%s287 + $0x70] sm:$0xff]
        %v3044 = vld [vmem:[%s287 + $0x78] sm:$0xff]
        %v3045 = vld [vmem:[%s287 + $0x80] sm:$0xff]
        %v3046 = vld [vmem:[%s287 + $0x88] sm:$0xff]
        %v3047 = vld [vmem:[%s287 + $0x90] sm:$0xff]
        %v3048 = vld [vmem:[%s287 + $0x98] sm:$0xff]
        %v3049 = vld [vmem:[%s287 + $0xa0] sm:$0xff]
        %v3050 = vld [vmem:[%s287 + $0xa8] sm:$0xff]
        %v3051 = vld [vmem:[%s287 + $0xb0] sm:$0xff]
        %v3052 = vld [vmem:[%s287 + $0xb8] sm:$0xff]
        %v3053 = vld [vmem:[%s287 + $0xc0] sm:$0xff]
        %v3054 = vld [vmem:[%s287 + $0xc8] sm:$0xff]
        %v3055 = vld [vmem:[%s287 + $0xd0] sm:$0xff]
        %v3056 = vld [vmem:[%s287 + $0xd8] sm:$0xff]
        %v3057 = vld [vmem:[%s287 + $0xe0] sm:$0xff]
        %v3058 = vld [vmem:[%s287 + $0xe8] sm:$0xff]
        %v3059 = vld [vmem:[%s287 + $0xf0] sm:$0xff]
        %v3060 = vld [vmem:[%s287 + $0xf8] sm:$0xff]
        %v3061 = vadd.f32 %v3029, %v2997
        %v3062 = vadd.f32 %v3030, %v2998
        %v3063 = vadd.f32 %v3031, %v2999
        %v3064 = vadd.f32 %v3032, %v3000
        %v3065 = vadd.f32 %v3033, %v3001
        %v3066 = vadd.f32 %v3034, %v3002
        %v3067 = vadd.f32 %v3035, %v3003
        %v3068 = vadd.f32 %v3036, %v3004
        %v3069 = vadd.f32 %v3037, %v3005
        %v3070 = vadd.f32 %v3038, %v3006
        %v3071 = vadd.f32 %v3039, %v3007
        %v3072 = vadd.f32 %v3040, %v3008
        %v3073 = vadd.f32 %v3041, %v3009
        %v3074 = vadd.f32 %v3042, %v3010
        %v3075 = vadd.f32 %v3043, %v3011
        %v3076 = vadd.f32 %v3044, %v3012
        %v3077 = vadd.f32 %v3045, %v3013
        %v3078 = vadd.f32 %v3046, %v3014
        %v3079 = vadd.f32 %v3047, %v3015
        %v3080 = vadd.f32 %v3048, %v3016
        %v3081 = vadd.f32 %v3049, %v3017
        %v3082 = vadd.f32 %v3050, %v3018
        %v3083 = vadd.f32 %v3051, %v3019
        %v3084 = vadd.f32 %v3052, %v3020
        %v3085 = vadd.f32 %v3053, %v3021
        %v3086 = vadd.f32 %v3054, %v3022
        %v3087 = vadd.f32 %v3055, %v3023
        %v3088 = vadd.f32 %v3056, %v3024
        %v3089 = vadd.f32 %v3057, %v3025
        %v3090 = vadd.f32 %v3058, %v3026
        %v3091 = vadd.f32 %v3059, %v3027
        %v3092 = vadd.f32 %v3060, %v3028
        %3093 = vst [vmem:[%s325] sm:$0xff] %v3061
        %3094 = vst [vmem:[%s325 + $0x8] sm:$0xff] %v3062
        %3095 = vst [vmem:[%s325 + $0x10] sm:$0xff] %v3063
        %3096 = vst [vmem:[%s325 + $0x18] sm:$0xff] %v3064
        %3097 = vst [vmem:[%s325 + $0x20] sm:$0xff] %v3065
        %3098 = vst [vmem:[%s325 + $0x28] sm:$0xff] %v3066
        %3099 = vst [vmem:[%s325 + $0x30] sm:$0xff] %v3067
        %3100 = vst [vmem:[%s325 + $0x38] sm:$0xff] %v3068
        %3101 = vst [vmem:[%s325 + $0x40] sm:$0xff] %v3069
        %3102 = vst [vmem:[%s325 + $0x48] sm:$0xff] %v3070
        %3103 = vst [vmem:[%s325 + $0x50] sm:$0xff] %v3071
        %3104 = vst [vmem:[%s325 + $0x58] sm:$0xff] %v3072
        %3105 = vst [vmem:[%s325 + $0x60] sm:$0xff] %v3073
        %3106 = vst [vmem:[%s325 + $0x68] sm:$0xff] %v3074
        %3107 = vst [vmem:[%s325 + $0x70] sm:$0xff] %v3075
        %3108 = vst [vmem:[%s325 + $0x78] sm:$0xff] %v3076
        %3109 = vst [vmem:[%s325 + $0x80] sm:$0xff] %v3077
        %3110 = vst [vmem:[%s325 + $0x88] sm:$0xff] %v3078
        %3111 = vst [vmem:[%s325 + $0x90] sm:$0xff] %v3079
        %3112 = vst [vmem:[%s325 + $0x98] sm:$0xff] %v3080
        %3113 = vst [vmem:[%s325 + $0xa0] sm:$0xff] %v3081
        %3114 = vst [vmem:[%s325 + $0xa8] sm:$0xff] %v3082
        %3115 = vst [vmem:[%s325 + $0xb0] sm:$0xff] %v3083
        %3116 = vst [vmem:[%s325 + $0xb8] sm:$0xff] %v3084
        %3117 = vst [vmem:[%s325 + $0xc0] sm:$0xff] %v3085
        %3118 = vst [vmem:[%s325 + $0xc8] sm:$0xff] %v3086
        %3119 = vst [vmem:[%s325 + $0xd0] sm:$0xff] %v3087
        %3120 = vst [vmem:[%s325 + $0xd8] sm:$0xff] %v3088
        %3121 = vst [vmem:[%s325 + $0xe0] sm:$0xff] %v3089
        %3122 = vst [vmem:[%s325 + $0xe8] sm:$0xff] %v3090
        %3123 = vst [vmem:[%s325 + $0xf0] sm:$0xff] %v3091
        %3124 = vst [vmem:[%s325 + $0xf8] sm:$0xff] %v3092
        %s3125 = sand.u32 %s185, 1
        %s3126 = scalar_lea.sflag [#allocation6], %s3125
        %s3127 = sand.u32 %s185, 1
        %s3128 = smul.addr %s3127, 256
        %s3129 = scalar_lea.vmem [#allocation10], %s3128
        // Predicated region
        $region61: #{tpu_custom_call.1} parent=47 // pred_check
          %p3130 = pneg %p195
        $region62: #{tpu_custom_call.1} parent=47 // pred_check_branch
          %3132 = sbr.rel (%p3130) target = $region64
        $region63: #{tpu_custom_call.1} parent=47 // pred_region
          %s3134 = ssub.s32 4096, 4096
          %3135 = vsyncadd %s3126, %s3134
          %s3136 = smul.addr %s25, 32
          %s3137 = smul.addr %s3136, 128
          %s3138 = scalar_lea.hbm %s7, %s3137
          %s3139 = sshll.u32 %s3129, 4
          %s3140 = int_to_ptr.vmem [resolvable:$true] %s3139
          %3145 = dma.vmem_to_hbm [thread:$0]  %s3140, 4096, %s3138, %s3126, 128, 128, 8
        $region64: #{tpu_custom_call.1} parent=47 // pred_fallthru
          _
      $region48: #{tpu_custom_call.1} parent=5 // pred_fallthru
        _
      %p3146 = scmp.le.s32.totalorder 2, %s20
      // Predicated region
      $region65: #{tpu_custom_call.1} parent=5 // pred_check
        %p3147 = pneg %p3146
      $region66: #{tpu_custom_call.1} parent=5 // pred_check_branch
        %3149 = sbr.rel (%p3147) target = $region68
      $region67: #{tpu_custom_call.1} parent=5 // pred_region
        %s3150 = ssub.s32 %s20, 2
        // Predicated region
        $region69: #{tpu_custom_call.1} parent=67 // pred_check
          %p3151 = pneg %p201
        $region70: #{tpu_custom_call.1} parent=67 // pred_check_branch
          %3153 = sbr.rel (%p3151) target = $region72
        $region71: #{tpu_custom_call.1} parent=67 // pred_region
          %s3154 = sand.u32 %s186, 1
          %s3155 = scalar_lea.sflag [#allocation6], %s3154
          %s3156 = sand.u32 %s186, 1
          %s3157 = smul.addr %s3156, 256
          %s3158 = scalar_lea.vmem [#allocation10], %s3157
          %3159 = dma.done %s3155, 4096
        $region72: #{tpu_custom_call.1} parent=67 // pred_fallthru
          _
      $region68: #{tpu_custom_call.1} parent=5 // pred_fallthru
        _
    $region6: #{tpu_custom_call.1} parent=1 // loop_footer
      %s24 = sadd.s32 1, %s20
    $region7: #{tpu_custom_call.1} parent=1 // loop_footer_branch
      %19 = sbr.rel target = $region3
    $region8: #{tpu_custom_call.1} parent=1 // loop_exit
      _
    %3160 = vsyncpa [#allocation5], 1
    %s3161 = scalar_lea.sflag [#allocation5], 1
    %3162 = vsyncpa %s3161, 1
    %3163 = vsyncpa [#allocation8], 1
    %3164 = vsyncpa [#allocation6], 1
    %s3165 = scalar_lea.sflag [#allocation6], 1
    %3166 = vsyncpa %s3165, 1

</llo_original>
